<compile_context>
chip_gen: v7x
topology: tpu7x:2x2x1
jax: 0.10.0
libtpu: 0.0.40
codegen_flags: <defaults>
</compile_context>

<pallas_src>
import math

import jax
import jax.numpy as jnp
from jax import lax
from jax.experimental import pallas as pl
from jax.experimental.pallas import tpu as pltpu


# ----------------------------------------------------------------------------
# Tiling / VMEM helpers
# ----------------------------------------------------------------------------
_VMEM_LIMIT_CACHE = None


def _vmem_limit_bytes():
    """Scoped-VMEM budget per generation: 64 MiB on 128 MiB parts (v5e/v6e),
    32 MiB otherwise (v7x has only 64 MiB physical VMEM)."""
    global _VMEM_LIMIT_CACHE
    if _VMEM_LIMIT_CACHE is None:
        cap = None
        try:
            cap = int(pltpu.get_tpu_info().vmem_capacity_bytes)
        except Exception:
            cap = None
        if cap is not None and cap >= 128 * 1024 * 1024:
            _VMEM_LIMIT_CACHE = 64 * 1024 * 1024
        else:
            _VMEM_LIMIT_CACHE = 32 * 1024 * 1024
    return _VMEM_LIMIT_CACHE


def _pick_tile(dim, target, granule=128):
    """Largest tile <= target that divides `dim` and is a multiple of
    `granule`; falls back to the full dimension if none exists."""
    if dim <= target:
        return dim
    t = (min(target, dim) // granule) * granule
    while t >= granule:
        if dim % t == 0:
            return t
        t -= granule
    return dim


def _dense_tiles(M, K, N, itemsize, n_streams, vmem_limit):
    """(tm, tn, tk) for the dense kernels such that double-buffered blocks plus
    the f32 accumulators fit the scoped-VMEM budget.  Large tm cuts weight
    re-streaming (W is re-read M/tm times); tiling K bounds VMEM for any
    d_model."""
    budget = int(vmem_limit * 0.75)
    tm_t, tn_t, tk_t = 1024, 512, 1024
    while True:
        tm = _pick_tile(M, tm_t, 8)
        tn = _pick_tile(N, tn_t, 128)
        tk = _pick_tile(K, tk_t, 128)
        need = (2 * itemsize * (tm * tk + n_streams * (tk * tn + tn + tm * tn))
                + 4 * n_streams * tm * tn)
        if need <= budget:
            return tm, tn, tk
        if tk_t > 256:
            tk_t //= 2
        elif tm_t > 256:
            tm_t //= 2
        elif tn_t > 128:
            tn_t //= 2
        elif tk_t > 128:
            tk_t //= 2
        else:
            return tm, tn, tk          # best effort (shapes too awkward)


def _attn_tiles(B, Sq, Sk, d_model, h, itemsize, has_mask, vmem_limit,
                tq_target, tk_target):
    """(tq, tk) for flash attention, shrunk until per-step VMEM fits and with a
    megacore sanity check (>= 2 independent (batch, q-tile) units)."""
    budget = int(vmem_limit * 0.75)
    d_k = d_model // h
    tq_t, tk_t = tq_target, tk_target
    while True:
        tq = _pick_tile(Sq, tq_t, 8)
        tk = _pick_tile(Sk, tk_t, 128)
        need = (2 * itemsize * (tq * d_model + 2 * tk * d_model + tq * d_model)
                + (2 * tq * tk if has_mask else 0)
                + itemsize * h * tq * d_k          # pre-scaled Q scratch
                + 4 * h * tq * d_k                 # f32 accumulator
                + 8 * h * tq * 128)                # m/l scratch (lane-padded)
        if need <= budget or (tq_t <= 128 and tk_t <= 128):
            break
        if tq_t >= tk_t and tq_t > 128:
            tq_t //= 2
        else:
            tk_t //= 2
    # Megacore (v7x has 2 TensorCores): keep >= 2 independent (b, q-tile) units.
    while B * (Sq // tq) < 2:
        nt = tq // 2
        if nt >= 8 and nt % 8 == 0 and Sq % nt == 0:
            tq = nt
        else:
            break
    return tq, tk


# ----------------------------------------------------------------------------
# Kernel 1: tiled dense layer  y = x @ W + b   (K-axis tiled, f32 accumulator)
# ----------------------------------------------------------------------------
def _linear_kernel(x_ref, w_ref, b_ref, o_ref, acc_ref):
    kk = pl.program_id(2)

    @pl.when(kk == 0)
    def _():
        acc_ref[...] = jnp.zeros_like(acc_ref)

    acc_ref[...] += jnp.dot(x_ref[...], w_ref[...],
                            preferred_element_type=jnp.float32)

    @pl.when(kk == pl.num_programs(2) - 1)
    def _():
        o_ref[...] = (acc_ref[...] + b_ref[...]).astype(o_ref.dtype)


def linear(x, w, b):
    """x: (M, d_in), w: (d_in, d_out) (== PyTorch weight.T), b: (d_out,)."""
    M, d_in = x.shape
    d_out = w.shape[1]
    vlim = _vmem_limit_bytes()
    tm, tn, tkc = _dense_tiles(M, d_in, d_out, x.dtype.itemsize, 1, vlim)
    return pl.pallas_call(
        _linear_kernel,
        out_shape=jax.ShapeDtypeStruct((M, d_out), x.dtype),
        grid=(M // tm, d_out // tn, d_in // tkc),
        in_specs=[
            pl.BlockSpec((tm, tkc), lambda i, j, k: (i, k)),
            pl.BlockSpec((tkc, tn), lambda i, j, k: (k, j)),
            pl.BlockSpec((1, tn), lambda i, j, k: (0, j)),
        ],
        out_specs=pl.BlockSpec((tm, tn), lambda i, j, k: (i, j)),
        scratch_shapes=[pltpu.VMEM((tm, tn), jnp.float32)],
        compiler_params=pltpu.CompilerParams(
            dimension_semantics=("parallel", "parallel", "arbitrary"),
            vmem_limit_bytes=vlim),
    )(x, w, b.reshape(1, d_out))


# ----------------------------------------------------------------------------
# Kernel 2: fused Q/K/V projection (self-attention: one input, three outputs)
# ----------------------------------------------------------------------------
def _qkv_kernel(x_ref, wq_ref, wk_ref, wv_ref, bq_ref, bk_ref, bv_ref,
                q_ref, k_ref, v_ref, qacc, kacc, vacc):
    kk = pl.program_id(2)

    @pl.when(kk == 0)
    def _():
        qacc[...] = jnp.zeros_like(qacc)
        kacc[...] = jnp.zeros_like(kacc)
        vacc[...] = jnp.zeros_like(vacc)

    x = x_ref[...]
    qacc[...] += jnp.dot(x, wq_ref[...], preferred_element_type=jnp.float32)
    kacc[...] += jnp.dot(x, wk_ref[...], preferred_element_type=jnp.float32)
    vacc[...] += jnp.dot(x, wv_ref[...], preferred_element_type=jnp.float32)

    @pl.when(kk == pl.num_programs(2) - 1)
    def _():
        q_ref[...] = (qacc[...] + bq_ref[...]).astype(q_ref.dtype)
        k_ref[...] = (kacc[...] + bk_ref[...]).astype(k_ref.dtype)
        v_ref[...] = (vacc[...] + bv_ref[...]).astype(v_ref.dtype)


def fused_qkv_projection(x, wq, bq, wk, bk, wv, bv):
    """Self-attention fast path: the input stream is DMA'd once for all three
    projections."""
    M, d_in = x.shape
    d_out = wq.shape[1]
    vlim = _vmem_limit_bytes()
    tm, tn, tkc = _dense_tiles(M, d_in, d_out, x.dtype.itemsize, 3, vlim)
    x_spec = pl.BlockSpec((tm, tkc), lambda i, j, k: (i, k))
    w_spec = pl.BlockSpec((tkc, tn), lambda i, j, k: (k, j))
    b_spec = pl.BlockSpec((1, tn), lambda i, j, k: (0, j))
    o_spec = pl.BlockSpec((tm, tn), lambda i, j, k: (i, j))
    out_sds = jax.ShapeDtypeStruct((M, d_out), x.dtype)
    return pl.pallas_call(
        _qkv_kernel,
        out_shape=(out_sds, out_sds, out_sds),
        grid=(M // tm, d_out // tn, d_in // tkc),
        in_specs=[x_spec, w_spec, w_spec, w_spec, b_spec, b_spec, b_spec],
        out_specs=(o_spec, o_spec, o_spec),
        scratch_shapes=[pltpu.VMEM((tm, tn), jnp.float32)] * 3,
        compiler_params=pltpu.CompilerParams(
            dimension_semantics=("parallel", "parallel", "arbitrary"),
            vmem_limit_bytes=vlim),
    )(x, wq, wk, wv, bq.reshape(1, -1), bk.reshape(1, -1), bv.reshape(1, -1))


# ----------------------------------------------------------------------------
# Kernel 3: flash (online-softmax) attention on lane-dense (B, S, d_model) I/O
# ----------------------------------------------------------------------------
def _make_attn_kernel(sm_scale, has_mask, h, d_k, causal, tq, tk):
    def kernel(*refs):
        if has_mask:
            q_ref, k_ref, v_ref, mask_ref, o_ref, q_sc, m_sc, l_sc, acc_sc = refs
        else:
            q_ref, k_ref, v_ref, o_ref, q_sc, m_sc, l_sc, acc_sc = refs

        qi = pl.program_id(1)
        ki = pl.program_id(2)

        @pl.when(ki == 0)
        def _init():
            m_sc[...] = jnp.full_like(m_sc, -jnp.inf)
            l_sc[...] = jnp.zeros_like(l_sc)
            acc_sc[...] = jnp.zeros_like(acc_sc)
            # Per-head slices of the lane-dense q tile, with 1/sqrt(d_k) folded
            # in ONCE per q-tile (not once per KV step).
            q_full = q_ref[0]                               # (tq, h*d_k)
            for i in range(h):
                q_sc[i] = q_full[:, i * d_k:(i + 1) * d_k] * sm_scale

        def body():
            k_full = k_ref[0]                               # (tk, h*d_k)
            v_full = v_ref[0]                               # (tk, h*d_k)
            if has_mask:
                dead = mask_ref[0] == 0                     # (tq, tk), int8->bool
            for i in range(h):
                k_i = k_full[:, i * d_k:(i + 1) * d_k]      # (tk, d_k)
                v_i = v_full[:, i * d_k:(i + 1) * d_k]      # (tk, d_k)
                # QK^T on the MXU (contract d_k), f32 accumulation.
                s = lax.dot_general(
                    q_sc[i], k_i, (((1,), (1,)), ((), ())),
                    preferred_element_type=jnp.float32)     # (tq, tk)
                if has_mask:
                    s = jnp.where(dead, jnp.float32(-1e9), s)
                m_prev = m_sc[i]                            # (tq, 1)
                m_new = jnp.maximum(m_prev, jnp.max(s, axis=-1, keepdims=True))
                alpha = jnp.exp(m_prev - m_new)
                p = jnp.exp(s - m_new)
                l_sc[i] = alpha * l_sc[i] + jnp.sum(p, axis=-1, keepdims=True)
                acc_sc[i] = alpha * acc_sc[i] + jnp.dot(
                    p.astype(v_i.dtype), v_i,
                    preferred_element_type=jnp.float32)
                m_sc[i] = m_new

        if causal:
            # Skip KV tiles that are entirely above the diagonal (fully masked)
            # -> ~2x less MXU/VPU work for causal masks.  Exact: a fully masked
            #    tile contributes nothing to the online softmax.
            pl.when(ki * tk < (qi + 1) * tq)(body)
        else:
            body()

        @pl.when(ki == pl.num_programs(2) - 1)
        def _finalize():
            # Each head is written straight into its lane range of the
            # lane-dense output block -> no per-head concatenate, no wrapper
            # transpose before the output projection.
            for i in range(h):
                o_ref[0, :, i * d_k:(i + 1) * d_k] = (
                    acc_sc[i] * pl.reciprocal(l_sc[i], approx=False)
                ).astype(o_ref.dtype)

    return kernel


def flash_attention(q, k, v, h, mask=None, *, causal=False,
                    tq_target=512, tk_target=256):
    """q/k/v: (B, S, d_model) with heads packed along the last (lane) dim.
    mask: optional (B, Sq, Sk) with 0 == masked.  causal=True additionally
    skips fully-masked KV tiles (use only for self-attention causal masks).
    Returns the context in (B, Sq, d_model) layout."""
    B, Sq, d_model = q.shape
    Sk = k.shape[1]
    assert d_model % h == 0
    d_k = d_model // h
    has_mask = mask is not None
    vlim = _vmem_limit_bytes()
    tq, tk = _attn_tiles(B, Sq, Sk, d_model, h, q.dtype.itemsize, has_mask,
                         vlim, tq_target, tk_target)
    sm_scale = 1.0 / math.sqrt(d_k)

    in_specs = [
        pl.BlockSpec((1, tq, d_model), lambda b, qi, ki: (b, qi, 0)),
        pl.BlockSpec((1, tk, d_model), lambda b, qi, ki: (b, ki, 0)),
        pl.BlockSpec((1, tk, d_model), lambda b, qi, ki: (b, ki, 0)),
    ]
    args = [q, k, v]
    if has_mask:
        in_specs.append(pl.BlockSpec((1, tq, tk), lambda b, qi, ki: (b, qi, ki)))
        args.append(mask.astype(jnp.int8))     # int8 mask: 4x less HBM traffic

    return pl.pallas_call(
        _make_attn_kernel(sm_scale, has_mask, h, d_k, causal, tq, tk),
        out_shape=jax.ShapeDtypeStruct((B, Sq, d_model), q.dtype),
        grid=(B, Sq // tq, Sk // tk),
        in_specs=in_specs,
        out_specs=pl.BlockSpec((1, tq, d_model), lambda b, qi, ki: (b, qi, 0)),
        scratch_shapes=[
            pltpu.VMEM((h, tq, d_k), q.dtype),      # pre-scaled per-head Q
            pltpu.VMEM((h, tq, 1), jnp.float32),    # running max
            pltpu.VMEM((h, tq, 1), jnp.float32),    # running denom
            pltpu.VMEM((h, tq, d_k), jnp.float32),  # accumulator
        ],
        compiler_params=pltpu.CompilerParams(
            dimension_semantics=("parallel", "parallel", "arbitrary"),
            vmem_limit_bytes=vlim),
    )(*args)


# ----------------------------------------------------------------------------
# Module wrapper (glue in plain JAX: only free reshapes, no transposes)
# ----------------------------------------------------------------------------
def init_mha_params(key, d_model, dtype=jnp.float32):
    """nn.Linear(d_model, d_model) x 4, PyTorch default uniform(-1/sqrt(in), .).
    Weights are stored already transposed to (d_in, d_out)."""
    bound = 1.0 / math.sqrt(d_model)
    params = []
    for _ in range(4):
        kw, kb, key = jax.random.split(key, 3)
        w = jax.random.uniform(kw, (d_model, d_model), dtype, -bound, bound)
        b = jax.random.uniform(kb, (d_model,), dtype, -bound, bound)
        params.append((w, b))
    return params


def multi_headed_attention(query, key, value, params, h, mask=None, *,
                           causal=False, tq_target=512, tk_target=256):
    """query/key/value: (B, S, d_model). mask (optional): (B, Sq, Sk), 0=masked.
    Pass causal=True (with a causal mask) to enable fully-masked-tile skipping.
    Note: the self-attention fast path uses object identity (q is k is v);
    equal-but-distinct arrays take the (correct but slower) 3-projection path."""
    B, Sq, d_model = query.shape
    Sk = key.shape[1]
    (wq, bq), (wk, bk), (wv, bv), (wo, bo) = params

    if (query is key) and (query is value):
        q2, k2, v2 = fused_qkv_projection(
            query.reshape(B * Sq, d_model), wq, bq, wk, bk, wv, bv)
    else:
        q2 = linear(query.reshape(B * Sq, d_model), wq, bq)
        k2 = linear(key.reshape(B * Sk, d_model), wk, bk)
        v2 = linear(value.reshape(B * Sk, d_model), wv, bv)

    # No head-split transpose: flash_attention consumes the lane-dense
    # (B, S, d_model) layout directly and slices heads per-tile inside VMEM.
    ctx = flash_attention(q2.reshape(B, Sq, d_model),
                          k2.reshape(B, Sk, d_model),
                          v2.reshape(B, Sk, d_model),
                          h, mask, causal=causal,
                          tq_target=tq_target, tk_target=tk_target)
    out = linear(ctx.reshape(B * Sq, d_model), wo, bo)
    return out.reshape(B, Sq, d_model)


# ----------------------------------------------------------------------------
# Pure-JAX reference (for correctness check only)
# ----------------------------------------------------------------------------
def _ref_mha(query, key, value, params, h, mask=None):
    B, Sq, d_model = query.shape
    Sk = key.shape[1]
    d_k = d_model // h
    (wq, bq), (wk, bk), (wv, bv), (wo, bo) = params

    def proj(x, w, b, S):
        return (x @ w + b).reshape(B, S, h, d_k).transpose(0, 2, 1, 3)

    q = proj(query, wq, bq, Sq)
    k = proj(key, wk, bk, Sk)
    v = proj(value, wv, bv, Sk)
    scores = jnp.einsum("bhqd,bhkd->bhqk", q, k) / math.sqrt(d_k)
    if mask is not None:
        scores = jnp.where(mask[:, None] == 0, -1e9, scores)
    p = jax.nn.softmax(scores, axis=-1)
    x = jnp.einsum("bhqk,bhkd->bhqd", p, v)
    x = x.transpose(0, 2, 1, 3).reshape(B, Sq, d_model)
    return x @ wo + bo


if __name__ == "__main__":
    root = jax.random.PRNGKey(0)

    # Case 1: self-attention with a causal mask on a multi-tile flash grid
    # (fused QKV path, KV accumulation across tiles, causal tile skipping).
    B1, S1, H1, D1 = 2, 256, 4, 64
    k_x, k_p1, root = jax.random.split(root, 3)
    params1 = init_mha_params(k_p1, D1)
    x = jax.random.normal(k_x, (B1, S1, D1), jnp.float32)
    causal_mask = jnp.broadcast_to(
        jnp.tril(jnp.ones((S1, S1), jnp.int32)), (B1, S1, S1))
    out1 = jax.block_until_ready(
        multi_headed_attention(x, x, x, params1, H1, mask=causal_mask,
                               causal=True, tq_target=128, tk_target=128))
    ref1 = _ref_mha(x, x, x, params1, H1, mask=causal_mask)
    assert out1.shape == (B1, S1, D1)
    assert jnp.allclose(out1, ref1, atol=2e-3, rtol=2e-3), "self-attn mismatch"

    # Case 2: cross-attention with distinct q/k/v and no mask (general path).
    B2, S2, H2, D2 = 2, 8, 4, 32
    k_q, k_k, k_v, k_p2, root = jax.random.split(root, 5)
    params2 = init_mha_params(k_p2, D2)
    q_in = jax.random.normal(k_q, (B2, S2, D2), jnp.float32)
    k_in = jax.random.normal(k_k, (B2, S2, D2), jnp.float32)
    v_in = jax.random.normal(k_v, (B2, S2, D2), jnp.float32)
    out2 = jax.block_until_ready(
        multi_headed_attention(q_in, k_in, v_in, params2, H2, mask=None))
    ref2 = _ref_mha(q_in, k_in, v_in, params2, H2, mask=None)
    assert jnp.allclose(out2, ref2, atol=2e-3, rtol=2e-3), "cross-attn mismatch"

    print("KERNEL_OK")
</pallas_src>

<mosaic_0001>
module attributes {stable_mosaic.version = 11 : i64} {
  func.func @_qkv_kernel(%arg0: i32, %arg1: i32, %arg2: i32, %arg3: memref<512x64xf32, #tpu.memory_space<vmem>>, %arg4: memref<64x64xf32, #tpu.memory_space<vmem>>, %arg5: memref<64x64xf32, #tpu.memory_space<vmem>>, %arg6: memref<64x64xf32, #tpu.memory_space<vmem>>, %arg7: memref<1x64xf32, #tpu.memory_space<vmem>>, %arg8: memref<1x64xf32, #tpu.memory_space<vmem>>, %arg9: memref<1x64xf32, #tpu.memory_space<vmem>>, %arg10: memref<512x64xf32, #tpu.memory_space<vmem>>, %arg11: memref<512x64xf32, #tpu.memory_space<vmem>>, %arg12: memref<512x64xf32, #tpu.memory_space<vmem>>, %arg13: memref<512x64xf32, #tpu.memory_space<vmem>>, %arg14: memref<512x64xf32, #tpu.memory_space<vmem>>, %arg15: memref<512x64xf32, #tpu.memory_space<vmem>>) attributes {dimension_semantics = [#tpu.dimension_semantics<parallel>, #tpu.dimension_semantics<parallel>, #tpu.dimension_semantics<arbitrary>], iteration_bounds = array<i64: 1, 1, 1>, scalar_prefetch = 0 : i64, scratch_operands = 3 : i64, tpu.core_type = #tpu.core_type<tc>, window_params = [{transform_indices = @transform_0, window_bounds = array<i64: 512, 64>}, {transform_indices = @transform_1, window_bounds = array<i64: 64, 64>}, {transform_indices = @transform_2, window_bounds = array<i64: 64, 64>}, {transform_indices = @transform_3, window_bounds = array<i64: 64, 64>}, {transform_indices = @transform_4, window_bounds = array<i64: 1, 64>}, {transform_indices = @transform_5, window_bounds = array<i64: 1, 64>}, {transform_indices = @transform_6, window_bounds = array<i64: 1, 64>}, {transform_indices = @transform_7, window_bounds = array<i64: 512, 64>}, {transform_indices = @transform_8, window_bounds = array<i64: 512, 64>}, {transform_indices = @transform_9, window_bounds = array<i64: 512, 64>}]} {
    %c0_i32 = arith.constant 0 : i32
    %0 = arith.cmpi eq, %arg2, %c0_i32 : i32
    %1 = arith.extui %0 : i1 to i32
    %c0_i32_0 = arith.constant 0 : i32
    %2 = arith.cmpi ne, %1, %c0_i32_0 : i32
    scf.if %2 {
      %cst_24 = arith.constant 0.000000e+00 : f32
      %22 = vector.broadcast %cst_24 : f32 to vector<512x64xf32>
      %c0_25 = arith.constant 0 : index
      %c0_26 = arith.constant 0 : index
      %23 = vector.load %arg13[%c0_25, %c0_26] : memref<512x64xf32, #tpu.memory_space<vmem>>, vector<512x64xf32>
      tpu.vector_store %arg13[%c0_25, %c0_26], %22 {strides = array<i32>} : memref<512x64xf32, #tpu.memory_space<vmem>>, vector<512x64xf32>,
      %cst_27 = arith.constant 0.000000e+00 : f32
      %24 = vector.broadcast %cst_27 : f32 to vector<512x64xf32>
      %c0_28 = arith.constant 0 : index
      %c0_29 = arith.constant 0 : index
      %25 = vector.load %arg14[%c0_28, %c0_29] : memref<512x64xf32, #tpu.memory_space<vmem>>, vector<512x64xf32>
      tpu.vector_store %arg14[%c0_28, %c0_29], %24 {strides = array<i32>} : memref<512x64xf32, #tpu.memory_space<vmem>>, vector<512x64xf32>,
      %cst_30 = arith.constant 0.000000e+00 : f32
      %26 = vector.broadcast %cst_30 : f32 to vector<512x64xf32>
      %c0_31 = arith.constant 0 : index
      %c0_32 = arith.constant 0 : index
      %27 = vector.load %arg15[%c0_31, %c0_32] : memref<512x64xf32, #tpu.memory_space<vmem>>, vector<512x64xf32>
      tpu.vector_store %arg15[%c0_31, %c0_32], %26 {strides = array<i32>} : memref<512x64xf32, #tpu.memory_space<vmem>>, vector<512x64xf32>,
    } else {
    }
    %c0 = arith.constant 0 : index
    %c0_1 = arith.constant 0 : index
    %3 = vector.load %arg3[%c0, %c0_1] : memref<512x64xf32, #tpu.memory_space<vmem>>, vector<512x64xf32>
    %c0_2 = arith.constant 0 : index
    %c0_3 = arith.constant 0 : index
    %4 = vector.load %arg13[%c0_2, %c0_3] : memref<512x64xf32, #tpu.memory_space<vmem>>, vector<512x64xf32>
    %c0_4 = arith.constant 0 : index
    %c0_5 = arith.constant 0 : index
    %5 = vector.load %arg4[%c0_4, %c0_5] : memref<64x64xf32, #tpu.memory_space<vmem>>, vector<64x64xf32>
    %cst = arith.constant dense<0.000000e+00> : vector<512x64xf32>
    %6 = tpu.matmul %3, %5, %cst {dimension_numbers = #tpu.dot_dimension_numbers<[1], [0], [0], [1], [0, 0, 1, 1], [], []>} : vector<512x64xf32>, vector<64x64xf32>, vector<512x64xf32> -> vector<512x64xf32>
    %7 = arith.addf %4, %6 : vector<512x64xf32>
    %c0_6 = arith.constant 0 : index
    %c0_7 = arith.constant 0 : index
    %8 = vector.load %arg13[%c0_6, %c0_7] : memref<512x64xf32, #tpu.memory_space<vmem>>, vector<512x64xf32>
    tpu.vector_store %arg13[%c0_6, %c0_7], %7 {strides = array<i32>} : memref<512x64xf32, #tpu.memory_space<vmem>>, vector<512x64xf32>,
    %c0_8 = arith.constant 0 : index
    %c0_9 = arith.constant 0 : index
    %9 = vector.load %arg14[%c0_8, %c0_9] : memref<512x64xf32, #tpu.memory_space<vmem>>, vector<512x64xf32>
    %c0_10 = arith.constant 0 : index
    %c0_11 = arith.constant 0 : index
    %10 = vector.load %arg5[%c0_10, %c0_11] : memref<64x64xf32, #tpu.memory_space<vmem>>, vector<64x64xf32>
    %cst_12 = arith.constant dense<0.000000e+00> : vector<512x64xf32>
    %11 = tpu.matmul %3, %10, %cst_12 {dimension_numbers = #tpu.dot_dimension_numbers<[1], [0], [0], [1], [0, 0, 1, 1], [], []>} : vector<512x64xf32>, vector<64x64xf32>, vector<512x64xf32> -> vector<512x64xf32>
    %12 = arith.addf %9, %11 : vector<512x64xf32>
    %c0_13 = arith.constant 0 : index
    %c0_14 = arith.constant 0 : index
    %13 = vector.load %arg14[%c0_13, %c0_14] : memref<512x64xf32, #tpu.memory_space<vmem>>, vector<512x64xf32>
    tpu.vector_store %arg14[%c0_13, %c0_14], %12 {strides = array<i32>} : memref<512x64xf32, #tpu.memory_space<vmem>>, vector<512x64xf32>,
    %c0_15 = arith.constant 0 : index
    %c0_16 = arith.constant 0 : index
    %14 = vector.load %arg15[%c0_15, %c0_16] : memref<512x64xf32, #tpu.memory_space<vmem>>, vector<512x64xf32>
    %c0_17 = arith.constant 0 : index
    %c0_18 = arith.constant 0 : index
    %15 = vector.load %arg6[%c0_17, %c0_18] : memref<64x64xf32, #tpu.memory_space<vmem>>, vector<64x64xf32>
    %cst_19 = arith.constant dense<0.000000e+00> : vector<512x64xf32>
    %16 = tpu.matmul %3, %15, %cst_19 {dimension_numbers = #tpu.dot_dimension_numbers<[1], [0], [0], [1], [0, 0, 1, 1], [], []>} : vector<512x64xf32>, vector<64x64xf32>, vector<512x64xf32> -> vector<512x64xf32>
    %17 = arith.addf %14, %16 : vector<512x64xf32>
    %c0_20 = arith.constant 0 : index
    %c0_21 = arith.constant 0 : index
    %18 = vector.load %arg15[%c0_20, %c0_21] : memref<512x64xf32, #tpu.memory_space<vmem>>, vector<512x64xf32>
    tpu.vector_store %arg15[%c0_20, %c0_21], %17 {strides = array<i32>} : memref<512x64xf32, #tpu.memory_space<vmem>>, vector<512x64xf32>,
    %c0_i32_22 = arith.constant 0 : i32
    %19 = arith.cmpi eq, %arg2, %c0_i32_22 : i32
    %20 = arith.extui %19 : i1 to i32
    %c0_i32_23 = arith.constant 0 : i32
    %21 = arith.cmpi ne, %20, %c0_i32_23 : i32
    scf.if %21 {
      %c0_24 = arith.constant 0 : index
      %c0_25 = arith.constant 0 : index
      %22 = vector.load %arg13[%c0_24, %c0_25] : memref<512x64xf32, #tpu.memory_space<vmem>>, vector<512x64xf32>
      %c0_26 = arith.constant 0 : index
      %c0_27 = arith.constant 0 : index
      %23 = vector.load %arg7[%c0_26, %c0_27] : memref<1x64xf32, #tpu.memory_space<vmem>>, vector<1x64xf32>
      %24 = vector.broadcast %23 : vector<1x64xf32> to vector<512x64xf32>
      %25 = arith.addf %22, %24 : vector<512x64xf32>
      %c0_28 = arith.constant 0 : index
      %c0_29 = arith.constant 0 : index
      %26 = vector.load %arg10[%c0_28, %c0_29] : memref<512x64xf32, #tpu.memory_space<vmem>>, vector<512x64xf32>
      tpu.vector_store %arg10[%c0_28, %c0_29], %25 {strides = array<i32>} : memref<512x64xf32, #tpu.memory_space<vmem>>, vector<512x64xf32>,
      %c0_30 = arith.constant 0 : index
      %c0_31 = arith.constant 0 : index
      %27 = vector.load %arg14[%c0_30, %c0_31] : memref<512x64xf32, #tpu.memory_space<vmem>>, vector<512x64xf32>
      %c0_32 = arith.constant 0 : index
      %c0_33 = arith.constant 0 : index
      %28 = vector.load %arg8[%c0_32, %c0_33] : memref<1x64xf32, #tpu.memory_space<vmem>>, vector<1x64xf32>
      %29 = vector.broadcast %28 : vector<1x64xf32> to vector<512x64xf32>
      %30 = arith.addf %27, %29 : vector<512x64xf32>
      %c0_34 = arith.constant 0 : index
      %c0_35 = arith.constant 0 : index
      %31 = vector.load %arg11[%c0_34, %c0_35] : memref<512x64xf32, #tpu.memory_space<vmem>>, vector<512x64xf32>
      tpu.vector_store %arg11[%c0_34, %c0_35], %30 {strides = array<i32>} : memref<512x64xf32, #tpu.memory_space<vmem>>, vector<512x64xf32>,
      %c0_36 = arith.constant 0 : index
      %c0_37 = arith.constant 0 : index
      %32 = vector.load %arg15[%c0_36, %c0_37] : memref<512x64xf32, #tpu.memory_space<vmem>>, vector<512x64xf32>
      %c0_38 = arith.constant 0 : index
      %c0_39 = arith.constant 0 : index
      %33 = vector.load %arg9[%c0_38, %c0_39] : memref<1x64xf32, #tpu.memory_space<vmem>>, vector<1x64xf32>
      %34 = vector.broadcast %33 : vector<1x64xf32> to vector<512x64xf32>
      %35 = arith.addf %32, %34 : vector<512x64xf32>
      %c0_40 = arith.constant 0 : index
      %c0_41 = arith.constant 0 : index
      %36 = vector.load %arg12[%c0_40, %c0_41] : memref<512x64xf32, #tpu.memory_space<vmem>>, vector<512x64xf32>
      tpu.vector_store %arg12[%c0_40, %c0_41], %35 {strides = array<i32>} : memref<512x64xf32, #tpu.memory_space<vmem>>, vector<512x64xf32>,
    } else {
    }
    return
  }
  func.func @transform_0(%arg0: i32, %arg1: i32, %arg2: i32) -> (i32, i32) {
    %c0_i32 = arith.constant 0 : i32
    return %arg0, %arg2 : i32, i32
  }
  func.func @transform_1(%arg0: i32, %arg1: i32, %arg2: i32) -> (i32, i32) {
    %c0_i32 = arith.constant 0 : i32
    return %arg2, %arg1 : i32, i32
  }
  func.func @transform_2(%arg0: i32, %arg1: i32, %arg2: i32) -> (i32, i32) {
    %c0_i32 = arith.constant 0 : i32
    return %arg2, %arg1 : i32, i32
  }
  func.func @transform_3(%arg0: i32, %arg1: i32, %arg2: i32) -> (i32, i32) {
    %c0_i32 = arith.constant 0 : i32
    return %arg2, %arg1 : i32, i32
  }
  func.func @transform_4(%arg0: i32, %arg1: i32, %arg2: i32) -> (i32, i32) {
    %c0_i32 = arith.constant 0 : i32
    %c0_i32_0 = arith.constant 0 : i32
    return %c0_i32, %arg1 : i32, i32
  }
  func.func @transform_5(%arg0: i32, %arg1: i32, %arg2: i32) -> (i32, i32) {
    %c0_i32 = arith.constant 0 : i32
    %c0_i32_0 = arith.constant 0 : i32
    return %c0_i32, %arg1 : i32, i32
  }
  func.func @transform_6(%arg0: i32, %arg1: i32, %arg2: i32) -> (i32, i32) {
    %c0_i32 = arith.constant 0 : i32
    %c0_i32_0 = arith.constant 0 : i32
    return %c0_i32, %arg1 : i32, i32
  }
  func.func @transform_7(%arg0: i32, %arg1: i32, %arg2: i32) -> (i32, i32) {
    %c0_i32 = arith.constant 0 : i32
    return %arg0, %arg1 : i32, i32
  }
  func.func @transform_8(%arg0: i32, %arg1: i32, %arg2: i32) -> (i32, i32) {
    %c0_i32 = arith.constant 0 : i32
    return %arg0, %arg1 : i32, i32
  }
  func.func @transform_9(%arg0: i32, %arg1: i32, %arg2: i32) -> (i32, i32) {
    %c0_i32 = arith.constant 0 : i32
    return %arg0, %arg1 : i32, i32
  }
}

</mosaic_0001>

<llo_original>
// kernel: tpu_custom_call.1
$region0: #{tpu_custom_call.1}
  #allocation0 [shape = 'u32[]', space=smem, size = 0x4, offset = 0x4, fixed_abs, tag = 'smem constant byte address 0x4 - core index']
  #allocation1 [shape = 'u32[144,128]{1,0:T(1,128)}', space=vmem, size = 0x12000, scoped, tag = 'internal scratch']
  #allocation2 [shape = 'f32[512,64]{1,0:T(8,128)}', space=vmem, size = 0x40000, scoped, tag = 'scratch operand']
  #allocation3 [shape = 'f32[512,64]{1,0:T(8,128)}', space=vmem, size = 0x40000, scoped, tag = 'scratch operand']
  #allocation4 [shape = 'f32[512,64]{1,0:T(8,128)}', space=vmem, size = 0x40000, scoped, tag = 'scratch operand']
  %s0 = inlined_call_operand.vmem [shape: f32[512,64], index: 0, kind: input, shape index: {}]
  %s1 = inlined_call_operand.vmem [shape: f32[64,64], index: 1, kind: input, shape index: {}]
  %s2 = inlined_call_operand.vmem [shape: f32[64,64], index: 2, kind: input, shape index: {}]
  %s3 = inlined_call_operand.vmem [shape: f32[64,64], index: 3, kind: input, shape index: {}]
  %s4 = inlined_call_operand.vmem [shape: f32[1,64], index: 4, kind: input, shape index: {}]
  %s5 = inlined_call_operand.vmem [shape: f32[1,64], index: 5, kind: input, shape index: {}]
  %s6 = inlined_call_operand.vmem [shape: f32[1,64], index: 6, kind: input, shape index: {}]
  %s7 = inlined_call_operand.vmem [shape: f32[512,64], index: 7, kind: output, shape index: {0}]
  %s8 = inlined_call_operand.vmem [shape: f32[512,64], index: 8, kind: output, shape index: {1}]
  %s9 = inlined_call_operand.vmem [shape: f32[512,64], index: 9, kind: output, shape index: {2}]
  %10 = xla_tuple %s7, %s8, %s9
  %s11 = sld [smem:[#allocation0]]
  $region62: #{tpu_custom_call.1} parent=0
    _
  %s13 = ssub.s32 1, %s11
  %s14 = scalar_select 0, %s13, %s11
  // Predicated region
  $region2: #{tpu_custom_call.1} parent=0 // pred_check
    _
  $region3: #{tpu_custom_call.1} parent=0 // pred_check_branch
    %16 = sbr.rel (0) target = $region5
  $region4: #{tpu_custom_call.1} parent=0 // pred_region
    _
  $region5: #{tpu_custom_call.1} parent=0 // pred_fallthru
    _
  // Predicated region
  $region6: #{tpu_custom_call.1} parent=0 // pred_check
    _
  $region7: #{tpu_custom_call.1} parent=0 // pred_check_branch
    %18 = sbr.rel (0) target = $region9
  $region8: #{tpu_custom_call.1} parent=0 // pred_region
    _
  $region9: #{tpu_custom_call.1} parent=0 // pred_fallthru
    _
  // Predicated region
  $region10: #{tpu_custom_call.1} parent=0 // pred_check
    _
  $region11: #{tpu_custom_call.1} parent=0 // pred_check_branch
    %20 = sbr.rel (0) target = $region13
  $region12: #{tpu_custom_call.1} parent=0 // pred_region
    _
  $region13: #{tpu_custom_call.1} parent=0 // pred_fallthru
    _
  // Predicated region
  $region14: #{tpu_custom_call.1} parent=0 // pred_check
    _
  $region15: #{tpu_custom_call.1} parent=0 // pred_check_branch
    %22 = sbr.rel (0) target = $region17
  $region16: #{tpu_custom_call.1} parent=0 // pred_region
    _
  $region17: #{tpu_custom_call.1} parent=0 // pred_fallthru
    _
  // Predicated region
  $region18: #{tpu_custom_call.1} parent=0 // pred_check
    _
  $region19: #{tpu_custom_call.1} parent=0 // pred_check_branch
    %24 = sbr.rel (0) target = $region21
  $region20: #{tpu_custom_call.1} parent=0 // pred_region
    _
  $region21: #{tpu_custom_call.1} parent=0 // pred_fallthru
    _
  // Predicated region
  $region22: #{tpu_custom_call.1} parent=0 // pred_check
    _
  $region23: #{tpu_custom_call.1} parent=0 // pred_check_branch
    %26 = sbr.rel (0) target = $region25
  $region24: #{tpu_custom_call.1} parent=0 // pred_region
    _
  $region25: #{tpu_custom_call.1} parent=0 // pred_fallthru
    _
  // Predicated region
  $region26: #{tpu_custom_call.1} parent=0 // pred_check
    _
  $region27: #{tpu_custom_call.1} parent=0 // pred_check_branch
    %28 = sbr.rel (0) target = $region29
  $region28: #{tpu_custom_call.1} parent=0 // pred_region
    _
  $region29: #{tpu_custom_call.1} parent=0 // pred_fallthru
    _
  %p29 = scmp.eq.s32.totalorder 0, 0
  // Predicated region
  $region30: #{tpu_custom_call.1} parent=0 // pred_check
    %p30 = pneg %p29
  $region31: #{tpu_custom_call.1} parent=0 // pred_check_branch
    %32 = sbr.rel (%p30) target = $region33
  $region32: #{tpu_custom_call.1} parent=0 // pred_region
    %vm33 = vcmask 523264
    %34 = vst.msk [vmem:[#allocation2] sm:$0xff] %vm33, 0.0
    %35 = vst.msk [vmem:[#allocation2 + $0x8] sm:$0xff] %vm33, 0.0
    %36 = vst.msk [vmem:[#allocation2 + $0x10] sm:$0xff] %vm33, 0.0
    %37 = vst.msk [vmem:[#allocation2 + $0x18] sm:$0xff] %vm33, 0.0
    %38 = vst.msk [vmem:[#allocation2 + $0x20] sm:$0xff] %vm33, 0.0
    %39 = vst.msk [vmem:[#allocation2 + $0x28] sm:$0xff] %vm33, 0.0
    %40 = vst.msk [vmem:[#allocation2 + $0x30] sm:$0xff] %vm33, 0.0
    %41 = vst.msk [vmem:[#allocation2 + $0x38] sm:$0xff] %vm33, 0.0
    %42 = vst.msk [vmem:[#allocation2 + $0x40] sm:$0xff] %vm33, 0.0
    %43 = vst.msk [vmem:[#allocation2 + $0x48] sm:$0xff] %vm33, 0.0
    %44 = vst.msk [vmem:[#allocation2 + $0x50] sm:$0xff] %vm33, 0.0
    %45 = vst.msk [vmem:[#allocation2 + $0x58] sm:$0xff] %vm33, 0.0
    %46 = vst.msk [vmem:[#allocation2 + $0x60] sm:$0xff] %vm33, 0.0
    %47 = vst.msk [vmem:[#allocation2 + $0x68] sm:$0xff] %vm33, 0.0
    %48 = vst.msk [vmem:[#allocation2 + $0x70] sm:$0xff] %vm33, 0.0
    %49 = vst.msk [vmem:[#allocation2 + $0x78] sm:$0xff] %vm33, 0.0
    %50 = vst.msk [vmem:[#allocation2 + $0x80] sm:$0xff] %vm33, 0.0
    %51 = vst.msk [vmem:[#allocation2 + $0x88] sm:$0xff] %vm33, 0.0
    %52 = vst.msk [vmem:[#allocation2 + $0x90] sm:$0xff] %vm33, 0.0
    %53 = vst.msk [vmem:[#allocation2 + $0x98] sm:$0xff] %vm33, 0.0
    %54 = vst.msk [vmem:[#allocation2 + $0xa0] sm:$0xff] %vm33, 0.0
    %55 = vst.msk [vmem:[#allocation2 + $0xa8] sm:$0xff] %vm33, 0.0
    %56 = vst.msk [vmem:[#allocation2 + $0xb0] sm:$0xff] %vm33, 0.0
    %57 = vst.msk [vmem:[#allocation2 + $0xb8] sm:$0xff] %vm33, 0.0
    %58 = vst.msk [vmem:[#allocation2 + $0xc0] sm:$0xff] %vm33, 0.0
    %59 = vst.msk [vmem:[#allocation2 + $0xc8] sm:$0xff] %vm33, 0.0
    %60 = vst.msk [vmem:[#allocation2 + $0xd0] sm:$0xff] %vm33, 0.0
    %61 = vst.msk [vmem:[#allocation2 + $0xd8] sm:$0xff] %vm33, 0.0
    %62 = vst.msk [vmem:[#allocation2 + $0xe0] sm:$0xff] %vm33, 0.0
    %63 = vst.msk [vmem:[#allocation2 + $0xe8] sm:$0xff] %vm33, 0.0
    %64 = vst.msk [vmem:[#allocation2 + $0xf0] sm:$0xff] %vm33, 0.0
    %65 = vst.msk [vmem:[#allocation2 + $0xf8] sm:$0xff] %vm33, 0.0
    %66 = vst.msk [vmem:[#allocation2 + $0x100] sm:$0xff] %vm33, 0.0
    %67 = vst.msk [vmem:[#allocation2 + $0x108] sm:$0xff] %vm33, 0.0
    %68 = vst.msk [vmem:[#allocation2 + $0x110] sm:$0xff] %vm33, 0.0
    %69 = vst.msk [vmem:[#allocation2 + $0x118] sm:$0xff] %vm33, 0.0
    %70 = vst.msk [vmem:[#allocation2 + $0x120] sm:$0xff] %vm33, 0.0
    %71 = vst.msk [vmem:[#allocation2 + $0x128] sm:$0xff] %vm33, 0.0
    %72 = vst.msk [vmem:[#allocation2 + $0x130] sm:$0xff] %vm33, 0.0
    %73 = vst.msk [vmem:[#allocation2 + $0x138] sm:$0xff] %vm33, 0.0
    %74 = vst.msk [vmem:[#allocation2 + $0x140] sm:$0xff] %vm33, 0.0
    %75 = vst.msk [vmem:[#allocation2 + $0x148] sm:$0xff] %vm33, 0.0
    %76 = vst.msk [vmem:[#allocation2 + $0x150] sm:$0xff] %vm33, 0.0
    %77 = vst.msk [vmem:[#allocation2 + $0x158] sm:$0xff] %vm33, 0.0
    %78 = vst.msk [vmem:[#allocation2 + $0x160] sm:$0xff] %vm33, 0.0
    %79 = vst.msk [vmem:[#allocation2 + $0x168] sm:$0xff] %vm33, 0.0
    %80 = vst.msk [vmem:[#allocation2 + $0x170] sm:$0xff] %vm33, 0.0
    %81 = vst.msk [vmem:[#allocation2 + $0x178] sm:$0xff] %vm33, 0.0
    %82 = vst.msk [vmem:[#allocation2 + $0x180] sm:$0xff] %vm33, 0.0
    %83 = vst.msk [vmem:[#allocation2 + $0x188] sm:$0xff] %vm33, 0.0
    %84 = vst.msk [vmem:[#allocation2 + $0x190] sm:$0xff] %vm33, 0.0
    %85 = vst.msk [vmem:[#allocation2 + $0x198] sm:$0xff] %vm33, 0.0
    %86 = vst.msk [vmem:[#allocation2 + $0x1a0] sm:$0xff] %vm33, 0.0
    %87 = vst.msk [vmem:[#allocation2 + $0x1a8] sm:$0xff] %vm33, 0.0
    %88 = vst.msk [vmem:[#allocation2 + $0x1b0] sm:$0xff] %vm33, 0.0
    %89 = vst.msk [vmem:[#allocation2 + $0x1b8] sm:$0xff] %vm33, 0.0
    %90 = vst.msk [vmem:[#allocation2 + $0x1c0] sm:$0xff] %vm33, 0.0
    %91 = vst.msk [vmem:[#allocation2 + $0x1c8] sm:$0xff] %vm33, 0.0
    %92 = vst.msk [vmem:[#allocation2 + $0x1d0] sm:$0xff] %vm33, 0.0
    %93 = vst.msk [vmem:[#allocation2 + $0x1d8] sm:$0xff] %vm33, 0.0
    %94 = vst.msk [vmem:[#allocation2 + $0x1e0] sm:$0xff] %vm33, 0.0
    %95 = vst.msk [vmem:[#allocation2 + $0x1e8] sm:$0xff] %vm33, 0.0
    %96 = vst.msk [vmem:[#allocation2 + $0x1f0] sm:$0xff] %vm33, 0.0
    %97 = vst.msk [vmem:[#allocation2 + $0x1f8] sm:$0xff] %vm33, 0.0
    %98 = vst.msk [vmem:[#allocation3] sm:$0xff] %vm33, 0.0
    %99 = vst.msk [vmem:[#allocation3 + $0x8] sm:$0xff] %vm33, 0.0
    %100 = vst.msk [vmem:[#allocation3 + $0x10] sm:$0xff] %vm33, 0.0
    %101 = vst.msk [vmem:[#allocation3 + $0x18] sm:$0xff] %vm33, 0.0
    %102 = vst.msk [vmem:[#allocation3 + $0x20] sm:$0xff] %vm33, 0.0
    %103 = vst.msk [vmem:[#allocation3 + $0x28] sm:$0xff] %vm33, 0.0
    %104 = vst.msk [vmem:[#allocation3 + $0x30] sm:$0xff] %vm33, 0.0
    %105 = vst.msk [vmem:[#allocation3 + $0x38] sm:$0xff] %vm33, 0.0
    %106 = vst.msk [vmem:[#allocation3 + $0x40] sm:$0xff] %vm33, 0.0
    %107 = vst.msk [vmem:[#allocation3 + $0x48] sm:$0xff] %vm33, 0.0
    %108 = vst.msk [vmem:[#allocation3 + $0x50] sm:$0xff] %vm33, 0.0
    %109 = vst.msk [vmem:[#allocation3 + $0x58] sm:$0xff] %vm33, 0.0
    %110 = vst.msk [vmem:[#allocation3 + $0x60] sm:$0xff] %vm33, 0.0
    %111 = vst.msk [vmem:[#allocation3 + $0x68] sm:$0xff] %vm33, 0.0
    %112 = vst.msk [vmem:[#allocation3 + $0x70] sm:$0xff] %vm33, 0.0
    %113 = vst.msk [vmem:[#allocation3 + $0x78] sm:$0xff] %vm33, 0.0
    %114 = vst.msk [vmem:[#allocation3 + $0x80] sm:$0xff] %vm33, 0.0
    %115 = vst.msk [vmem:[#allocation3 + $0x88] sm:$0xff] %vm33, 0.0
    %116 = vst.msk [vmem:[#allocation3 + $0x90] sm:$0xff] %vm33, 0.0
    %117 = vst.msk [vmem:[#allocation3 + $0x98] sm:$0xff] %vm33, 0.0
    %118 = vst.msk [vmem:[#allocation3 + $0xa0] sm:$0xff] %vm33, 0.0
    %119 = vst.msk [vmem:[#allocation3 + $0xa8] sm:$0xff] %vm33, 0.0
    %120 = vst.msk [vmem:[#allocation3 + $0xb0] sm:$0xff] %vm33, 0.0
    %121 = vst.msk [vmem:[#allocation3 + $0xb8] sm:$0xff] %vm33, 0.0
    %122 = vst.msk [vmem:[#allocation3 + $0xc0] sm:$0xff] %vm33, 0.0
    %123 = vst.msk [vmem:[#allocation3 + $0xc8] sm:$0xff] %vm33, 0.0
    %124 = vst.msk [vmem:[#allocation3 + $0xd0] sm:$0xff] %vm33, 0.0
    %125 = vst.msk [vmem:[#allocation3 + $0xd8] sm:$0xff] %vm33, 0.0
    %126 = vst.msk [vmem:[#allocation3 + $0xe0] sm:$0xff] %vm33, 0.0
    %127 = vst.msk [vmem:[#allocation3 + $0xe8] sm:$0xff] %vm33, 0.0
    %128 = vst.msk [vmem:[#allocation3 + $0xf0] sm:$0xff] %vm33, 0.0
    %129 = vst.msk [vmem:[#allocation3 + $0xf8] sm:$0xff] %vm33, 0.0
    %130 = vst.msk [vmem:[#allocation3 + $0x100] sm:$0xff] %vm33, 0.0
    %131 = vst.msk [vmem:[#allocation3 + $0x108] sm:$0xff] %vm33, 0.0
    %132 = vst.msk [vmem:[#allocation3 + $0x110] sm:$0xff] %vm33, 0.0
    %133 = vst.msk [vmem:[#allocation3 + $0x118] sm:$0xff] %vm33, 0.0
    %134 = vst.msk [vmem:[#allocation3 + $0x120] sm:$0xff] %vm33, 0.0
    %135 = vst.msk [vmem:[#allocation3 + $0x128] sm:$0xff] %vm33, 0.0
    %136 = vst.msk [vmem:[#allocation3 + $0x130] sm:$0xff] %vm33, 0.0
    %137 = vst.msk [vmem:[#allocation3 + $0x138] sm:$0xff] %vm33, 0.0
    %138 = vst.msk [vmem:[#allocation3 + $0x140] sm:$0xff] %vm33, 0.0
    %139 = vst.msk [vmem:[#allocation3 + $0x148] sm:$0xff] %vm33, 0.0
    %140 = vst.msk [vmem:[#allocation3 + $0x150] sm:$0xff] %vm33, 0.0
    %141 = vst.msk [vmem:[#allocation3 + $0x158] sm:$0xff] %vm33, 0.0
    %142 = vst.msk [vmem:[#allocation3 + $0x160] sm:$0xff] %vm33, 0.0
    %143 = vst.msk [vmem:[#allocation3 + $0x168] sm:$0xff] %vm33, 0.0
    %144 = vst.msk [vmem:[#allocation3 + $0x170] sm:$0xff] %vm33, 0.0
    %145 = vst.msk [vmem:[#allocation3 + $0x178] sm:$0xff] %vm33, 0.0
    %146 = vst.msk [vmem:[#allocation3 + $0x180] sm:$0xff] %vm33, 0.0
    %147 = vst.msk [vmem:[#allocation3 + $0x188] sm:$0xff] %vm33, 0.0
    %148 = vst.msk [vmem:[#allocation3 + $0x190] sm:$0xff] %vm33, 0.0
    %149 = vst.msk [vmem:[#allocation3 + $0x198] sm:$0xff] %vm33, 0.0
    %150 = vst.msk [vmem:[#allocation3 + $0x1a0] sm:$0xff] %vm33, 0.0
    %151 = vst.msk [vmem:[#allocation3 + $0x1a8] sm:$0xff] %vm33, 0.0
    %152 = vst.msk [vmem:[#allocation3 + $0x1b0] sm:$0xff] %vm33, 0.0
    %153 = vst.msk [vmem:[#allocation3 + $0x1b8] sm:$0xff] %vm33, 0.0
    %154 = vst.msk [vmem:[#allocation3 + $0x1c0] sm:$0xff] %vm33, 0.0
    %155 = vst.msk [vmem:[#allocation3 + $0x1c8] sm:$0xff] %vm33, 0.0
    %156 = vst.msk [vmem:[#allocation3 + $0x1d0] sm:$0xff] %vm33, 0.0
    %157 = vst.msk [vmem:[#allocation3 + $0x1d8] sm:$0xff] %vm33, 0.0
    %158 = vst.msk [vmem:[#allocation3 + $0x1e0] sm:$0xff] %vm33, 0.0
    %159 = vst.msk [vmem:[#allocation3 + $0x1e8] sm:$0xff] %vm33, 0.0
    %160 = vst.msk [vmem:[#allocation3 + $0x1f0] sm:$0xff] %vm33, 0.0
    %161 = vst.msk [vmem:[#allocation3 + $0x1f8] sm:$0xff] %vm33, 0.0
    %162 = vst.msk [vmem:[#allocation4] sm:$0xff] %vm33, 0.0
    %163 = vst.msk [vmem:[#allocation4 + $0x8] sm:$0xff] %vm33, 0.0
    %164 = vst.msk [vmem:[#allocation4 + $0x10] sm:$0xff] %vm33, 0.0
    %165 = vst.msk [vmem:[#allocation4 + $0x18] sm:$0xff] %vm33, 0.0
    %166 = vst.msk [vmem:[#allocation4 + $0x20] sm:$0xff] %vm33, 0.0
    %167 = vst.msk [vmem:[#allocation4 + $0x28] sm:$0xff] %vm33, 0.0
    %168 = vst.msk [vmem:[#allocation4 + $0x30] sm:$0xff] %vm33, 0.0
    %169 = vst.msk [vmem:[#allocation4 + $0x38] sm:$0xff] %vm33, 0.0
    %170 = vst.msk [vmem:[#allocation4 + $0x40] sm:$0xff] %vm33, 0.0
    %171 = vst.msk [vmem:[#allocation4 + $0x48] sm:$0xff] %vm33, 0.0
    %172 = vst.msk [vmem:[#allocation4 + $0x50] sm:$0xff] %vm33, 0.0
    %173 = vst.msk [vmem:[#allocation4 + $0x58] sm:$0xff] %vm33, 0.0
    %174 = vst.msk [vmem:[#allocation4 + $0x60] sm:$0xff] %vm33, 0.0
    %175 = vst.msk [vmem:[#allocation4 + $0x68] sm:$0xff] %vm33, 0.0
    %176 = vst.msk [vmem:[#allocation4 + $0x70] sm:$0xff] %vm33, 0.0
    %177 = vst.msk [vmem:[#allocation4 + $0x78] sm:$0xff] %vm33, 0.0
    %178 = vst.msk [vmem:[#allocation4 + $0x80] sm:$0xff] %vm33, 0.0
    %179 = vst.msk [vmem:[#allocation4 + $0x88] sm:$0xff] %vm33, 0.0
    %180 = vst.msk [vmem:[#allocation4 + $0x90] sm:$0xff] %vm33, 0.0
    %181 = vst.msk [vmem:[#allocation4 + $0x98] sm:$0xff] %vm33, 0.0
    %182 = vst.msk [vmem:[#allocation4 + $0xa0] sm:$0xff] %vm33, 0.0
    %183 = vst.msk [vmem:[#allocation4 + $0xa8] sm:$0xff] %vm33, 0.0
    %184 = vst.msk [vmem:[#allocation4 + $0xb0] sm:$0xff] %vm33, 0.0
    %185 = vst.msk [vmem:[#allocation4 + $0xb8] sm:$0xff] %vm33, 0.0
    %186 = vst.msk [vmem:[#allocation4 + $0xc0] sm:$0xff] %vm33, 0.0
    %187 = vst.msk [vmem:[#allocation4 + $0xc8] sm:$0xff] %vm33, 0.0
    %188 = vst.msk [vmem:[#allocation4 + $0xd0] sm:$0xff] %vm33, 0.0
    %189 = vst.msk [vmem:[#allocation4 + $0xd8] sm:$0xff] %vm33, 0.0
    %190 = vst.msk [vmem:[#allocation4 + $0xe0] sm:$0xff] %vm33, 0.0
    %191 = vst.msk [vmem:[#allocation4 + $0xe8] sm:$0xff] %vm33, 0.0
    %192 = vst.msk [vmem:[#allocation4 + $0xf0] sm:$0xff] %vm33, 0.0
    %193 = vst.msk [vmem:[#allocation4 + $0xf8] sm:$0xff] %vm33, 0.0
    %194 = vst.msk [vmem:[#allocation4 + $0x100] sm:$0xff] %vm33, 0.0
    %195 = vst.msk [vmem:[#allocation4 + $0x108] sm:$0xff] %vm33, 0.0
    %196 = vst.msk [vmem:[#allocation4 + $0x110] sm:$0xff] %vm33, 0.0
    %197 = vst.msk [vmem:[#allocation4 + $0x118] sm:$0xff] %vm33, 0.0
    %198 = vst.msk [vmem:[#allocation4 + $0x120] sm:$0xff] %vm33, 0.0
    %199 = vst.msk [vmem:[#allocation4 + $0x128] sm:$0xff] %vm33, 0.0
    %200 = vst.msk [vmem:[#allocation4 + $0x130] sm:$0xff] %vm33, 0.0
    %201 = vst.msk [vmem:[#allocation4 + $0x138] sm:$0xff] %vm33, 0.0
    %202 = vst.msk [vmem:[#allocation4 + $0x140] sm:$0xff] %vm33, 0.0
    %203 = vst.msk [vmem:[#allocation4 + $0x148] sm:$0xff] %vm33, 0.0
    %204 = vst.msk [vmem:[#allocation4 + $0x150] sm:$0xff] %vm33, 0.0
    %205 = vst.msk [vmem:[#allocation4 + $0x158] sm:$0xff] %vm33, 0.0
    %206 = vst.msk [vmem:[#allocation4 + $0x160] sm:$0xff] %vm33, 0.0
    %207 = vst.msk [vmem:[#allocation4 + $0x168] sm:$0xff] %vm33, 0.0
    %208 = vst.msk [vmem:[#allocation4 + $0x170] sm:$0xff] %vm33, 0.0
    %209 = vst.msk [vmem:[#allocation4 + $0x178] sm:$0xff] %vm33, 0.0
    %210 = vst.msk [vmem:[#allocation4 + $0x180] sm:$0xff] %vm33, 0.0
    %211 = vst.msk [vmem:[#allocation4 + $0x188] sm:$0xff] %vm33, 0.0
    %212 = vst.msk [vmem:[#allocation4 + $0x190] sm:$0xff] %vm33, 0.0
    %213 = vst.msk [vmem:[#allocation4 + $0x198] sm:$0xff] %vm33, 0.0
    %214 = vst.msk [vmem:[#allocation4 + $0x1a0] sm:$0xff] %vm33, 0.0
    %215 = vst.msk [vmem:[#allocation4 + $0x1a8] sm:$0xff] %vm33, 0.0
    %216 = vst.msk [vmem:[#allocation4 + $0x1b0] sm:$0xff] %vm33, 0.0
    %217 = vst.msk [vmem:[#allocation4 + $0x1b8] sm:$0xff] %vm33, 0.0
    %218 = vst.msk [vmem:[#allocation4 + $0x1c0] sm:$0xff] %vm33, 0.0
    %219 = vst.msk [vmem:[#allocation4 + $0x1c8] sm:$0xff] %vm33, 0.0
    %220 = vst.msk [vmem:[#allocation4 + $0x1d0] sm:$0xff] %vm33, 0.0
    %221 = vst.msk [vmem:[#allocation4 + $0x1d8] sm:$0xff] %vm33, 0.0
    %222 = vst.msk [vmem:[#allocation4 + $0x1e0] sm:$0xff] %vm33, 0.0
    %223 = vst.msk [vmem:[#allocation4 + $0x1e8] sm:$0xff] %vm33, 0.0
    %224 = vst.msk [vmem:[#allocation4 + $0x1f0] sm:$0xff] %vm33, 0.0
    %225 = vst.msk [vmem:[#allocation4 + $0x1f8] sm:$0xff] %vm33, 0.0
  $region33: #{tpu_custom_call.1} parent=0 // pred_fallthru
    _
  %v226 = vld [vmem:[%s0] sm:$0xff]
  %v227 = vld [vmem:[%s0 + $0x8] sm:$0xff]
  %v228 = vld [vmem:[%s0 + $0x10] sm:$0xff]
  %v229 = vld [vmem:[%s0 + $0x18] sm:$0xff]
  %v230 = vld [vmem:[%s0 + $0x20] sm:$0xff]
  %v231 = vld [vmem:[%s0 + $0x28] sm:$0xff]
  %v232 = vld [vmem:[%s0 + $0x30] sm:$0xff]
  %v233 = vld [vmem:[%s0 + $0x38] sm:$0xff]
  %v234 = vld [vmem:[%s0 + $0x40] sm:$0xff]
  %v235 = vld [vmem:[%s0 + $0x48] sm:$0xff]
  %v236 = vld [vmem:[%s0 + $0x50] sm:$0xff]
  %v237 = vld [vmem:[%s0 + $0x58] sm:$0xff]
  %v238 = vld [vmem:[%s0 + $0x60] sm:$0xff]
  %v239 = vld [vmem:[%s0 + $0x68] sm:$0xff]
  %v240 = vld [vmem:[%s0 + $0x70] sm:$0xff]
  %v241 = vld [vmem:[%s0 + $0x78] sm:$0xff]
  %v242 = vld [vmem:[%s0 + $0x80] sm:$0xff]
  %v243 = vld [vmem:[%s0 + $0x88] sm:$0xff]
  %v244 = vld [vmem:[%s0 + $0x90] sm:$0xff]
  %v245 = vld [vmem:[%s0 + $0x98] sm:$0xff]
  %v246 = vld [vmem:[%s0 + $0xa0] sm:$0xff]
  %v247 = vld [vmem:[%s0 + $0xa8] sm:$0xff]
  %v248 = vld [vmem:[%s0 + $0xb0] sm:$0xff]
  %v249 = vld [vmem:[%s0 + $0xb8] sm:$0xff]
  %v250 = vld [vmem:[%s0 + $0xc0] sm:$0xff]
  %v251 = vld [vmem:[%s0 + $0xc8] sm:$0xff]
  %v252 = vld [vmem:[%s0 + $0xd0] sm:$0xff]
  %v253 = vld [vmem:[%s0 + $0xd8] sm:$0xff]
  %v254 = vld [vmem:[%s0 + $0xe0] sm:$0xff]
  %v255 = vld [vmem:[%s0 + $0xe8] sm:$0xff]
  %v256 = vld [vmem:[%s0 + $0xf0] sm:$0xff]
  %v257 = vld [vmem:[%s0 + $0xf8] sm:$0xff]
  %v258 = vld [vmem:[%s0 + $0x100] sm:$0xff]
  %v259 = vld [vmem:[%s0 + $0x108] sm:$0xff]
  %v260 = vld [vmem:[%s0 + $0x110] sm:$0xff]
  %v261 = vld [vmem:[%s0 + $0x118] sm:$0xff]
  %v262 = vld [vmem:[%s0 + $0x120] sm:$0xff]
  %v263 = vld [vmem:[%s0 + $0x128] sm:$0xff]
  %v264 = vld [vmem:[%s0 + $0x130] sm:$0xff]
  %v265 = vld [vmem:[%s0 + $0x138] sm:$0xff]
  %v266 = vld [vmem:[%s0 + $0x140] sm:$0xff]
  %v267 = vld [vmem:[%s0 + $0x148] sm:$0xff]
  %v268 = vld [vmem:[%s0 + $0x150] sm:$0xff]
  %v269 = vld [vmem:[%s0 + $0x158] sm:$0xff]
  %v270 = vld [vmem:[%s0 + $0x160] sm:$0xff]
  %v271 = vld [vmem:[%s0 + $0x168] sm:$0xff]
  %v272 = vld [vmem:[%s0 + $0x170] sm:$0xff]
  %v273 = vld [vmem:[%s0 + $0x178] sm:$0xff]
  %v274 = vld [vmem:[%s0 + $0x180] sm:$0xff]
  %v275 = vld [vmem:[%s0 + $0x188] sm:$0xff]
  %v276 = vld [vmem:[%s0 + $0x190] sm:$0xff]
  %v277 = vld [vmem:[%s0 + $0x198] sm:$0xff]
  %v278 = vld [vmem:[%s0 + $0x1a0] sm:$0xff]
  %v279 = vld [vmem:[%s0 + $0x1a8] sm:$0xff]
  %v280 = vld [vmem:[%s0 + $0x1b0] sm:$0xff]
  %v281 = vld [vmem:[%s0 + $0x1b8] sm:$0xff]
  %v282 = vld [vmem:[%s0 + $0x1c0] sm:$0xff]
  %v283 = vld [vmem:[%s0 + $0x1c8] sm:$0xff]
  %v284 = vld [vmem:[%s0 + $0x1d0] sm:$0xff]
  %v285 = vld [vmem:[%s0 + $0x1d8] sm:$0xff]
  %v286 = vld [vmem:[%s0 + $0x1e0] sm:$0xff]
  %v287 = vld [vmem:[%s0 + $0x1e8] sm:$0xff]
  %v288 = vld [vmem:[%s0 + $0x1f0] sm:$0xff]
  %v289 = vld [vmem:[%s0 + $0x1f8] sm:$0xff]
  %v290 = vld [vmem:[#allocation2] sm:$0xff]
  %v291 = vld [vmem:[#allocation2 + $0x8] sm:$0xff]
  %v292 = vld [vmem:[#allocation2 + $0x10] sm:$0xff]
  %v293 = vld [vmem:[#allocation2 + $0x18] sm:$0xff]
  %v294 = vld [vmem:[#allocation2 + $0x20] sm:$0xff]
  %v295 = vld [vmem:[#allocation2 + $0x28] sm:$0xff]
  %v296 = vld [vmem:[#allocation2 + $0x30] sm:$0xff]
  %v297 = vld [vmem:[#allocation2 + $0x38] sm:$0xff]
  %v298 = vld [vmem:[#allocation2 + $0x40] sm:$0xff]
  %v299 = vld [vmem:[#allocation2 + $0x48] sm:$0xff]
  %v300 = vld [vmem:[#allocation2 + $0x50] sm:$0xff]
  %v301 = vld [vmem:[#allocation2 + $0x58] sm:$0xff]
  %v302 = vld [vmem:[#allocation2 + $0x60] sm:$0xff]
  %v303 = vld [vmem:[#allocation2 + $0x68] sm:$0xff]
  %v304 = vld [vmem:[#allocation2 + $0x70] sm:$0xff]
  %v305 = vld [vmem:[#allocation2 + $0x78] sm:$0xff]
  %v306 = vld [vmem:[#allocation2 + $0x80] sm:$0xff]
  %v307 = vld [vmem:[#allocation2 + $0x88] sm:$0xff]
  %v308 = vld [vmem:[#allocation2 + $0x90] sm:$0xff]
  %v309 = vld [vmem:[#allocation2 + $0x98] sm:$0xff]
  %v310 = vld [vmem:[#allocation2 + $0xa0] sm:$0xff]
  %v311 = vld [vmem:[#allocation2 + $0xa8] sm:$0xff]
  %v312 = vld [vmem:[#allocation2 + $0xb0] sm:$0xff]
  %v313 = vld [vmem:[#allocation2 + $0xb8] sm:$0xff]
  %v314 = vld [vmem:[#allocation2 + $0xc0] sm:$0xff]
  %v315 = vld [vmem:[#allocation2 + $0xc8] sm:$0xff]
  %v316 = vld [vmem:[#allocation2 + $0xd0] sm:$0xff]
  %v317 = vld [vmem:[#allocation2 + $0xd8] sm:$0xff]
  %v318 = vld [vmem:[#allocation2 + $0xe0] sm:$0xff]
  %v319 = vld [vmem:[#allocation2 + $0xe8] sm:$0xff]
  %v320 = vld [vmem:[#allocation2 + $0xf0] sm:$0xff]
  %v321 = vld [vmem:[#allocation2 + $0xf8] sm:$0xff]
  %v322 = vld [vmem:[#allocation2 + $0x100] sm:$0xff]
  %v323 = vld [vmem:[#allocation2 + $0x108] sm:$0xff]
  %v324 = vld [vmem:[#allocation2 + $0x110] sm:$0xff]
  %v325 = vld [vmem:[#allocation2 + $0x118] sm:$0xff]
  %v326 = vld [vmem:[#allocation2 + $0x120] sm:$0xff]
  %v327 = vld [vmem:[#allocation2 + $0x128] sm:$0xff]
  %v328 = vld [vmem:[#allocation2 + $0x130] sm:$0xff]
  %v329 = vld [vmem:[#allocation2 + $0x138] sm:$0xff]
  %v330 = vld [vmem:[#allocation2 + $0x140] sm:$0xff]
  %v331 = vld [vmem:[#allocation2 + $0x148] sm:$0xff]
  %v332 = vld [vmem:[#allocation2 + $0x150] sm:$0xff]
  %v333 = vld [vmem:[#allocation2 + $0x158] sm:$0xff]
  %v334 = vld [vmem:[#allocation2 + $0x160] sm:$0xff]
  %v335 = vld [vmem:[#allocation2 + $0x168] sm:$0xff]
  %v336 = vld [vmem:[#allocation2 + $0x170] sm:$0xff]
  %v337 = vld [vmem:[#allocation2 + $0x178] sm:$0xff]
  %v338 = vld [vmem:[#allocation2 + $0x180] sm:$0xff]
  %v339 = vld [vmem:[#allocation2 + $0x188] sm:$0xff]
  %v340 = vld [vmem:[#allocation2 + $0x190] sm:$0xff]
  %v341 = vld [vmem:[#allocation2 + $0x198] sm:$0xff]
  %v342 = vld [vmem:[#allocation2 + $0x1a0] sm:$0xff]
  %v343 = vld [vmem:[#allocation2 + $0x1a8] sm:$0xff]
  %v344 = vld [vmem:[#allocation2 + $0x1b0] sm:$0xff]
  %v345 = vld [vmem:[#allocation2 + $0x1b8] sm:$0xff]
  %v346 = vld [vmem:[#allocation2 + $0x1c0] sm:$0xff]
  %v347 = vld [vmem:[#allocation2 + $0x1c8] sm:$0xff]
  %v348 = vld [vmem:[#allocation2 + $0x1d0] sm:$0xff]
  %v349 = vld [vmem:[#allocation2 + $0x1d8] sm:$0xff]
  %v350 = vld [vmem:[#allocation2 + $0x1e0] sm:$0xff]
  %v351 = vld [vmem:[#allocation2 + $0x1e8] sm:$0xff]
  %v352 = vld [vmem:[#allocation2 + $0x1f0] sm:$0xff]
  %v353 = vld [vmem:[#allocation2 + $0x1f8] sm:$0xff]
  %v354 = vld [vmem:[%s1] sm:$0xff]
  %v355 = vld [vmem:[%s1 + $0x8] sm:$0xff]
  %v356 = vld [vmem:[%s1 + $0x10] sm:$0xff]
  %v357 = vld [vmem:[%s1 + $0x18] sm:$0xff]
  %v358 = vld [vmem:[%s1 + $0x20] sm:$0xff]
  %v359 = vld [vmem:[%s1 + $0x28] sm:$0xff]
  %v360 = vld [vmem:[%s1 + $0x30] sm:$0xff]
  %v361 = vld [vmem:[%s1 + $0x38] sm:$0xff]
  %vm362 = vcmask 523264
  %v364 = vsel %vm362, %v226, 0
  %v367 = vsel %vm362, %v227, 0
  %v370 = vsel %vm362, %v228, 0
  %v373 = vsel %vm362, %v229, 0
  %v376 = vsel %vm362, %v230, 0
  %v379 = vsel %vm362, %v231, 0
  %v382 = vsel %vm362, %v232, 0
  %v385 = vsel %vm362, %v233, 0
  %v388 = vsel %vm362, %v234, 0
  %v391 = vsel %vm362, %v235, 0
  %v394 = vsel %vm362, %v236, 0
  %v397 = vsel %vm362, %v237, 0
  %v400 = vsel %vm362, %v238, 0
  %v403 = vsel %vm362, %v239, 0
  %v406 = vsel %vm362, %v240, 0
  %v409 = vsel %vm362, %v241, 0
  %v412 = vsel %vm362, %v242, 0
  %v415 = vsel %vm362, %v243, 0
  %v418 = vsel %vm362, %v244, 0
  %v421 = vsel %vm362, %v245, 0
  %v424 = vsel %vm362, %v246, 0
  %v427 = vsel %vm362, %v247, 0
  %v430 = vsel %vm362, %v248, 0
  %v433 = vsel %vm362, %v249, 0
  %v436 = vsel %vm362, %v250, 0
  %v439 = vsel %vm362, %v251, 0
  %v442 = vsel %vm362, %v252, 0
  %v445 = vsel %vm362, %v253, 0
  %v448 = vsel %vm362, %v254, 0
  %v451 = vsel %vm362, %v255, 0
  %v454 = vsel %vm362, %v256, 0
  %v457 = vsel %vm362, %v257, 0
  %v460 = vsel %vm362, %v258, 0
  %v463 = vsel %vm362, %v259, 0
  %v466 = vsel %vm362, %v260, 0
  %v469 = vsel %vm362, %v261, 0
  %v472 = vsel %vm362, %v262, 0
  %v475 = vsel %vm362, %v263, 0
  %v478 = vsel %vm362, %v264, 0
  %v481 = vsel %vm362, %v265, 0
  %v484 = vsel %vm362, %v266, 0
  %v487 = vsel %vm362, %v267, 0
  %v490 = vsel %vm362, %v268, 0
  %v493 = vsel %vm362, %v269, 0
  %v496 = vsel %vm362, %v270, 0
  %v499 = vsel %vm362, %v271, 0
  %v502 = vsel %vm362, %v272, 0
  %v505 = vsel %vm362, %v273, 0
  %v508 = vsel %vm362, %v274, 0
  %v511 = vsel %vm362, %v275, 0
  %v514 = vsel %vm362, %v276, 0
  %v517 = vsel %vm362, %v277, 0
  %v520 = vsel %vm362, %v278, 0
  %v523 = vsel %vm362, %v279, 0
  %v526 = vsel %vm362, %v280, 0
  %v529 = vsel %vm362, %v281, 0
  %v532 = vsel %vm362, %v282, 0
  %v535 = vsel %vm362, %v283, 0
  %v538 = vsel %vm362, %v284, 0
  %v541 = vsel %vm362, %v285, 0
  %v544 = vsel %vm362, %v286, 0
  %v547 = vsel %vm362, %v287, 0
  %v550 = vsel %vm362, %v288, 0
  %v553 = vsel %vm362, %v289, 0
  %555 = vmatprep.subr.mxu0 0.0
  %556 = vmatpush1.msra.mxu0 %v354
  %557 = vmatprep.subr.mxu0 0.0
  %558 = vmatpush1.msra.mxu0 %v355
  %559 = vmatprep.subr.mxu0 0.0
  %560 = vmatpush1.msra.mxu0 %v356
  %561 = vmatprep.subr.mxu0 0.0
  %562 = vmatpush1.msra.mxu0 %v357
  %563 = vmatprep.subr.mxu0 0.0
  %564 = vmatpush1.msra.mxu0 %v358
  %565 = vmatprep.subr.mxu0 0.0
  %566 = vmatpush1.msra.mxu0 %v359
  %567 = vmatprep.subr.mxu0 0.0
  %568 = vmatpush1.msra.mxu0 %v360
  %569 = vmatprep.subr.mxu0 0.0
  %570 = vmatpush1.msra.mxu0 %v361
  %571 = vmatprep.subr.mxu0 0.0
  %572 = vmatpush1.msra.mxu0 0.0
  %573 = vmatprep.subr.mxu0 0.0
  %574 = vmatpush1.msra.mxu0 0.0
  %575 = vmatprep.subr.mxu0 0.0
  %576 = vmatpush1.msra.mxu0 0.0
  %577 = vmatprep.subr.mxu0 0.0
  %578 = vmatpush1.msra.mxu0 0.0
  %579 = vmatprep.subr.mxu0 0.0
  %580 = vmatpush1.msra.mxu0 0.0
  %581 = vmatprep.subr.mxu0 0.0
  %582 = vmatpush1.msra.mxu0 0.0
  %583 = vmatprep.subr.mxu0 0.0
  %584 = vmatpush1.msra.mxu0 0.0
  %585 = vmatprep.subr.mxu0 0.0
  %586 = vmatpush1.msra.mxu0 0.0
  %587 = vmatprep.subr.mxu0 0.0
  %588 = vmatpush1.msra.mxu0 0.0
  %589 = vmatprep.subr.mxu0 0.0
  %590 = vmatpush1.msra.mxu0 0.0
  %591 = vmatprep.subr.mxu0 0.0
  %592 = vmatpush1.msra.mxu0 0.0
  %593 = vmatprep.subr.mxu0 0.0
  %594 = vmatpush1.msra.mxu0 0.0
  %595 = vmatprep.subr.mxu0 0.0
  %596 = vmatpush1.msra.mxu0 0.0
  %597 = vmatprep.subr.mxu0 0.0
  %598 = vmatpush1.msra.mxu0 0.0
  %599 = vmatprep.subr.mxu0 0.0
  %600 = vmatpush1.msra.mxu0 0.0
  %601 = vmatprep.subr.mxu0 0.0
  %602 = vmatpush1.msra.mxu0 0.0
  %603 = vmatprep.subr.mxu0 0.0
  %604 = vmatpush1.msra.mxu0 0.0
  %605 = vmatprep.subr.mxu0 0.0
  %606 = vmatpush1.msra.mxu0 0.0
  %607 = vmatprep.subr.mxu0 0.0
  %608 = vmatpush1.msra.mxu0 0.0
  %609 = vmatprep.subr.mxu0 0.0
  %610 = vmatpush1.msra.mxu0 0.0
  %611 = vmatprep.subr.mxu0 0.0
  %612 = vmatpush1.msra.mxu0 0.0
  %613 = vmatprep.subr.mxu0 0.0
  %614 = vmatpush1.msra.mxu0 0.0
  %615 = vmatprep.subr.mxu0 0.0
  %616 = vmatpush1.msra.mxu0 0.0
  %617 = vmatprep.subr.mxu0 0.0
  %618 = vmatpush1.msra.mxu0 0.0
  %619 = vmatprep.mubr.f32.mxu0 0.0
  %620 = vmatmul.mubr.f32.gmra.mrb[0].mxu0 %v364
  %v621 = vpop.f32.mrb[0].mxu0
  %v622 = vadd.f32 0.0, %v621
  %v623 = vpop.f32.mrb[0].mxu0
  %624 = vmatprep.mubr.f32.mxu0 0.0
  %625 = vmatmul.mubr.f32.gmra.mrb[0].mxu0 %v367
  %v626 = vpop.f32.mrb[0].mxu0
  %v627 = vadd.f32 0.0, %v626
  %v628 = vpop.f32.mrb[0].mxu0
  %629 = vmatprep.mubr.f32.mxu0 0.0
  %630 = vmatmul.mubr.f32.gmra.mrb[0].mxu0 %v370
  %v631 = vpop.f32.mrb[0].mxu0
  %v632 = vadd.f32 0.0, %v631
  %v633 = vpop.f32.mrb[0].mxu0
  %634 = vmatprep.mubr.f32.mxu0 0.0
  %635 = vmatmul.mubr.f32.gmra.mrb[0].mxu0 %v373
  %v636 = vpop.f32.mrb[0].mxu0
  %v637 = vadd.f32 0.0, %v636
  %v638 = vpop.f32.mrb[0].mxu0
  %639 = vmatprep.mubr.f32.mxu0 0.0
  %640 = vmatmul.mubr.f32.gmra.mrb[0].mxu0 %v376
  %v641 = vpop.f32.mrb[0].mxu0
  %v642 = vadd.f32 0.0, %v641
  %v643 = vpop.f32.mrb[0].mxu0
  %644 = vmatprep.mubr.f32.mxu0 0.0
  %645 = vmatmul.mubr.f32.gmra.mrb[0].mxu0 %v379
  %v646 = vpop.f32.mrb[0].mxu0
  %v647 = vadd.f32 0.0, %v646
  %v648 = vpop.f32.mrb[0].mxu0
  %649 = vmatprep.mubr.f32.mxu0 0.0
  %650 = vmatmul.mubr.f32.gmra.mrb[0].mxu0 %v382
  %v651 = vpop.f32.mrb[0].mxu0
  %v652 = vadd.f32 0.0, %v651
  %v653 = vpop.f32.mrb[0].mxu0
  %654 = vmatprep.mubr.f32.mxu0 0.0
  %655 = vmatmul.mubr.f32.gmra.mrb[0].mxu0 %v385
  %v656 = vpop.f32.mrb[0].mxu0
  %v657 = vadd.f32 0.0, %v656
  %v658 = vpop.f32.mrb[0].mxu0
  %659 = vmatprep.mubr.f32.mxu0 0.0
  %660 = vmatmul.mubr.f32.gmra.mrb[0].mxu0 %v388
  %v661 = vpop.f32.mrb[0].mxu0
  %v662 = vadd.f32 0.0, %v661
  %v663 = vpop.f32.mrb[0].mxu0
  %664 = vmatprep.mubr.f32.mxu0 0.0
  %665 = vmatmul.mubr.f32.gmra.mrb[0].mxu0 %v391
  %v666 = vpop.f32.mrb[0].mxu0
  %v667 = vadd.f32 0.0, %v666
  %v668 = vpop.f32.mrb[0].mxu0
  %669 = vmatprep.mubr.f32.mxu0 0.0
  %670 = vmatmul.mubr.f32.gmra.mrb[0].mxu0 %v394
  %v671 = vpop.f32.mrb[0].mxu0
  %v672 = vadd.f32 0.0, %v671
  %v673 = vpop.f32.mrb[0].mxu0
  %674 = vmatprep.mubr.f32.mxu0 0.0
  %675 = vmatmul.mubr.f32.gmra.mrb[0].mxu0 %v397
  %v676 = vpop.f32.mrb[0].mxu0
  %v677 = vadd.f32 0.0, %v676
  %v678 = vpop.f32.mrb[0].mxu0
  %679 = vmatprep.mubr.f32.mxu0 0.0
  %680 = vmatmul.mubr.f32.gmra.mrb[0].mxu0 %v400
  %v681 = vpop.f32.mrb[0].mxu0
  %v682 = vadd.f32 0.0, %v681
  %v683 = vpop.f32.mrb[0].mxu0
  %684 = vmatprep.mubr.f32.mxu0 0.0
  %685 = vmatmul.mubr.f32.gmra.mrb[0].mxu0 %v403
  %v686 = vpop.f32.mrb[0].mxu0
  %v687 = vadd.f32 0.0, %v686
  %v688 = vpop.f32.mrb[0].mxu0
  %689 = vmatprep.mubr.f32.mxu0 0.0
  %690 = vmatmul.mubr.f32.gmra.mrb[0].mxu0 %v406
  %v691 = vpop.f32.mrb[0].mxu0
  %v692 = vadd.f32 0.0, %v691
  %v693 = vpop.f32.mrb[0].mxu0
  %694 = vmatprep.mubr.f32.mxu0 0.0
  %695 = vmatmul.mubr.f32.gmra.mrb[0].mxu0 %v409
  %v696 = vpop.f32.mrb[0].mxu0
  %v697 = vadd.f32 0.0, %v696
  %v698 = vpop.f32.mrb[0].mxu0
  %699 = vmatprep.mubr.f32.mxu0 0.0
  %700 = vmatmul.mubr.f32.gmra.mrb[0].mxu0 %v412
  %v701 = vpop.f32.mrb[0].mxu0
  %v702 = vadd.f32 0.0, %v701
  %v703 = vpop.f32.mrb[0].mxu0
  %704 = vmatprep.mubr.f32.mxu0 0.0
  %705 = vmatmul.mubr.f32.gmra.mrb[0].mxu0 %v415
  %v706 = vpop.f32.mrb[0].mxu0
  %v707 = vadd.f32 0.0, %v706
  %v708 = vpop.f32.mrb[0].mxu0
  %709 = vmatprep.mubr.f32.mxu0 0.0
  %710 = vmatmul.mubr.f32.gmra.mrb[0].mxu0 %v418
  %v711 = vpop.f32.mrb[0].mxu0
  %v712 = vadd.f32 0.0, %v711
  %v713 = vpop.f32.mrb[0].mxu0
  %714 = vmatprep.mubr.f32.mxu0 0.0
  %715 = vmatmul.mubr.f32.gmra.mrb[0].mxu0 %v421
  %v716 = vpop.f32.mrb[0].mxu0
  %v717 = vadd.f32 0.0, %v716
  %v718 = vpop.f32.mrb[0].mxu0
  %719 = vmatprep.mubr.f32.mxu0 0.0
  %720 = vmatmul.mubr.f32.gmra.mrb[0].mxu0 %v424
  %v721 = vpop.f32.mrb[0].mxu0
  %v722 = vadd.f32 0.0, %v721
  %v723 = vpop.f32.mrb[0].mxu0
  %724 = vmatprep.mubr.f32.mxu0 0.0
  %725 = vmatmul.mubr.f32.gmra.mrb[0].mxu0 %v427
  %v726 = vpop.f32.mrb[0].mxu0
  %v727 = vadd.f32 0.0, %v726
  %v728 = vpop.f32.mrb[0].mxu0
  %729 = vmatprep.mubr.f32.mxu0 0.0
  %730 = vmatmul.mubr.f32.gmra.mrb[0].mxu0 %v430
  %v731 = vpop.f32.mrb[0].mxu0
  %v732 = vadd.f32 0.0, %v731
  %v733 = vpop.f32.mrb[0].mxu0
  %734 = vmatprep.mubr.f32.mxu0 0.0
  %735 = vmatmul.mubr.f32.gmra.mrb[0].mxu0 %v433
  %v736 = vpop.f32.mrb[0].mxu0
  %v737 = vadd.f32 0.0, %v736
  %v738 = vpop.f32.mrb[0].mxu0
  %739 = vmatprep.mubr.f32.mxu0 0.0
  %740 = vmatmul.mubr.f32.gmra.mrb[0].mxu0 %v436
  %v741 = vpop.f32.mrb[0].mxu0
  %v742 = vadd.f32 0.0, %v741
  %v743 = vpop.f32.mrb[0].mxu0
  %744 = vmatprep.mubr.f32.mxu0 0.0
  %745 = vmatmul.mubr.f32.gmra.mrb[0].mxu0 %v439
  %v746 = vpop.f32.mrb[0].mxu0
  %v747 = vadd.f32 0.0, %v746
  %v748 = vpop.f32.mrb[0].mxu0
  %749 = vmatprep.mubr.f32.mxu0 0.0
  %750 = vmatmul.mubr.f32.gmra.mrb[0].mxu0 %v442
  %v751 = vpop.f32.mrb[0].mxu0
  %v752 = vadd.f32 0.0, %v751
  %v753 = vpop.f32.mrb[0].mxu0
  %754 = vmatprep.mubr.f32.mxu0 0.0
  %755 = vmatmul.mubr.f32.gmra.mrb[0].mxu0 %v445
  %v756 = vpop.f32.mrb[0].mxu0
  %v757 = vadd.f32 0.0, %v756
  %v758 = vpop.f32.mrb[0].mxu0
  %759 = vmatprep.mubr.f32.mxu0 0.0
  %760 = vmatmul.mubr.f32.gmra.mrb[0].mxu0 %v448
  %v761 = vpop.f32.mrb[0].mxu0
  %v762 = vadd.f32 0.0, %v761
  %v763 = vpop.f32.mrb[0].mxu0
  %764 = vmatprep.mubr.f32.mxu0 0.0
  %765 = vmatmul.mubr.f32.gmra.mrb[0].mxu0 %v451
  %v766 = vpop.f32.mrb[0].mxu0
  %v767 = vadd.f32 0.0, %v766
  %v768 = vpop.f32.mrb[0].mxu0
  %769 = vmatprep.mubr.f32.mxu0 0.0
  %770 = vmatmul.mubr.f32.gmra.mrb[0].mxu0 %v454
  %v771 = vpop.f32.mrb[0].mxu0
  %v772 = vadd.f32 0.0, %v771
  %v773 = vpop.f32.mrb[0].mxu0
  %774 = vmatprep.mubr.f32.mxu0 0.0
  %775 = vmatmul.mubr.f32.gmra.mrb[0].mxu0 %v457
  %v776 = vpop.f32.mrb[0].mxu0
  %v777 = vadd.f32 0.0, %v776
  %v778 = vpop.f32.mrb[0].mxu0
  %779 = vmatprep.mubr.f32.mxu0 0.0
  %780 = vmatmul.mubr.f32.gmra.mrb[0].mxu0 %v460
  %v781 = vpop.f32.mrb[0].mxu0
  %v782 = vadd.f32 0.0, %v781
  %v783 = vpop.f32.mrb[0].mxu0
  %784 = vmatprep.mubr.f32.mxu0 0.0
  %785 = vmatmul.mubr.f32.gmra.mrb[0].mxu0 %v463
  %v786 = vpop.f32.mrb[0].mxu0
  %v787 = vadd.f32 0.0, %v786
  %v788 = vpop.f32.mrb[0].mxu0
  %789 = vmatprep.mubr.f32.mxu0 0.0
  %790 = vmatmul.mubr.f32.gmra.mrb[0].mxu0 %v466
  %v791 = vpop.f32.mrb[0].mxu0
  %v792 = vadd.f32 0.0, %v791
  %v793 = vpop.f32.mrb[0].mxu0
  %794 = vmatprep.mubr.f32.mxu0 0.0
  %795 = vmatmul.mubr.f32.gmra.mrb[0].mxu0 %v469
  %v796 = vpop.f32.mrb[0].mxu0
  %v797 = vadd.f32 0.0, %v796
  %v798 = vpop.f32.mrb[0].mxu0
  %799 = vmatprep.mubr.f32.mxu0 0.0
  %800 = vmatmul.mubr.f32.gmra.mrb[0].mxu0 %v472
  %v801 = vpop.f32.mrb[0].mxu0
  %v802 = vadd.f32 0.0, %v801
  %v803 = vpop.f32.mrb[0].mxu0
  %804 = vmatprep.mubr.f32.mxu0 0.0
  %805 = vmatmul.mubr.f32.gmra.mrb[0].mxu0 %v475
  %v806 = vpop.f32.mrb[0].mxu0
  %v807 = vadd.f32 0.0, %v806
  %v808 = vpop.f32.mrb[0].mxu0
  %809 = vmatprep.mubr.f32.mxu0 0.0
  %810 = vmatmul.mubr.f32.gmra.mrb[0].mxu0 %v478
  %v811 = vpop.f32.mrb[0].mxu0
  %v812 = vadd.f32 0.0, %v811
  %v813 = vpop.f32.mrb[0].mxu0
  %814 = vmatprep.mubr.f32.mxu0 0.0
  %815 = vmatmul.mubr.f32.gmra.mrb[0].mxu0 %v481
  %v816 = vpop.f32.mrb[0].mxu0
  %v817 = vadd.f32 0.0, %v816
  %v818 = vpop.f32.mrb[0].mxu0
  %819 = vmatprep.mubr.f32.mxu0 0.0
  %820 = vmatmul.mubr.f32.gmra.mrb[0].mxu0 %v484
  %v821 = vpop.f32.mrb[0].mxu0
  %v822 = vadd.f32 0.0, %v821
  %v823 = vpop.f32.mrb[0].mxu0
  %824 = vmatprep.mubr.f32.mxu0 0.0
  %825 = vmatmul.mubr.f32.gmra.mrb[0].mxu0 %v487
  %v826 = vpop.f32.mrb[0].mxu0
  %v827 = vadd.f32 0.0, %v826
  %v828 = vpop.f32.mrb[0].mxu0
  %829 = vmatprep.mubr.f32.mxu0 0.0
  %830 = vmatmul.mubr.f32.gmra.mrb[0].mxu0 %v490
  %v831 = vpop.f32.mrb[0].mxu0
  %v832 = vadd.f32 0.0, %v831
  %v833 = vpop.f32.mrb[0].mxu0
  %834 = vmatprep.mubr.f32.mxu0 0.0
  %835 = vmatmul.mubr.f32.gmra.mrb[0].mxu0 %v493
  %v836 = vpop.f32.mrb[0].mxu0
  %v837 = vadd.f32 0.0, %v836
  %v838 = vpop.f32.mrb[0].mxu0
  %839 = vmatprep.mubr.f32.mxu0 0.0
  %840 = vmatmul.mubr.f32.gmra.mrb[0].mxu0 %v496
  %v841 = vpop.f32.mrb[0].mxu0
  %v842 = vadd.f32 0.0, %v841
  %v843 = vpop.f32.mrb[0].mxu0
  %844 = vmatprep.mubr.f32.mxu0 0.0
  %845 = vmatmul.mubr.f32.gmra.mrb[0].mxu0 %v499
  %v846 = vpop.f32.mrb[0].mxu0
  %v847 = vadd.f32 0.0, %v846
  %v848 = vpop.f32.mrb[0].mxu0
  %849 = vmatprep.mubr.f32.mxu0 0.0
  %850 = vmatmul.mubr.f32.gmra.mrb[0].mxu0 %v502
  %v851 = vpop.f32.mrb[0].mxu0
  %v852 = vadd.f32 0.0, %v851
  %v853 = vpop.f32.mrb[0].mxu0
  %854 = vmatprep.mubr.f32.mxu0 0.0
  %855 = vmatmul.mubr.f32.gmra.mrb[0].mxu0 %v505
  %v856 = vpop.f32.mrb[0].mxu0
  %v857 = vadd.f32 0.0, %v856
  %v858 = vpop.f32.mrb[0].mxu0
  %859 = vmatprep.mubr.f32.mxu0 0.0
  %860 = vmatmul.mubr.f32.gmra.mrb[0].mxu0 %v508
  %v861 = vpop.f32.mrb[0].mxu0
  %v862 = vadd.f32 0.0, %v861
  %v863 = vpop.f32.mrb[0].mxu0
  %864 = vmatprep.mubr.f32.mxu0 0.0
  %865 = vmatmul.mubr.f32.gmra.mrb[0].mxu0 %v511
  %v866 = vpop.f32.mrb[0].mxu0
  %v867 = vadd.f32 0.0, %v866
  %v868 = vpop.f32.mrb[0].mxu0
  %869 = vmatprep.mubr.f32.mxu0 0.0
  %870 = vmatmul.mubr.f32.gmra.mrb[0].mxu0 %v514
  %v871 = vpop.f32.mrb[0].mxu0
  %v872 = vadd.f32 0.0, %v871
  %v873 = vpop.f32.mrb[0].mxu0
  %874 = vmatprep.mubr.f32.mxu0 0.0
  %875 = vmatmul.mubr.f32.gmra.mrb[0].mxu0 %v517
  %v876 = vpop.f32.mrb[0].mxu0
  %v877 = vadd.f32 0.0, %v876
  %v878 = vpop.f32.mrb[0].mxu0
  %879 = vmatprep.mubr.f32.mxu0 0.0
  %880 = vmatmul.mubr.f32.gmra.mrb[0].mxu0 %v520
  %v881 = vpop.f32.mrb[0].mxu0
  %v882 = vadd.f32 0.0, %v881
  %v883 = vpop.f32.mrb[0].mxu0
  %884 = vmatprep.mubr.f32.mxu0 0.0
  %885 = vmatmul.mubr.f32.gmra.mrb[0].mxu0 %v523
  %v886 = vpop.f32.mrb[0].mxu0
  %v887 = vadd.f32 0.0, %v886
  %v888 = vpop.f32.mrb[0].mxu0
  %889 = vmatprep.mubr.f32.mxu0 0.0
  %890 = vmatmul.mubr.f32.gmra.mrb[0].mxu0 %v526
  %v891 = vpop.f32.mrb[0].mxu0
  %v892 = vadd.f32 0.0, %v891
  %v893 = vpop.f32.mrb[0].mxu0
  %894 = vmatprep.mubr.f32.mxu0 0.0
  %895 = vmatmul.mubr.f32.gmra.mrb[0].mxu0 %v529
  %v896 = vpop.f32.mrb[0].mxu0
  %v897 = vadd.f32 0.0, %v896
  %v898 = vpop.f32.mrb[0].mxu0
  %899 = vmatprep.mubr.f32.mxu0 0.0
  %900 = vmatmul.mubr.f32.gmra.mrb[0].mxu0 %v532
  %v901 = vpop.f32.mrb[0].mxu0
  %v902 = vadd.f32 0.0, %v901
  %v903 = vpop.f32.mrb[0].mxu0
  %904 = vmatprep.mubr.f32.mxu0 0.0
  %905 = vmatmul.mubr.f32.gmra.mrb[0].mxu0 %v535
  %v906 = vpop.f32.mrb[0].mxu0
  %v907 = vadd.f32 0.0, %v906
  %v908 = vpop.f32.mrb[0].mxu0
  %909 = vmatprep.mubr.f32.mxu0 0.0
  %910 = vmatmul.mubr.f32.gmra.mrb[0].mxu0 %v538
  %v911 = vpop.f32.mrb[0].mxu0
  %v912 = vadd.f32 0.0, %v911
  %v913 = vpop.f32.mrb[0].mxu0
  %914 = vmatprep.mubr.f32.mxu0 0.0
  %915 = vmatmul.mubr.f32.gmra.mrb[0].mxu0 %v541
  %v916 = vpop.f32.mrb[0].mxu0
  %v917 = vadd.f32 0.0, %v916
  %v918 = vpop.f32.mrb[0].mxu0
  %919 = vmatprep.mubr.f32.mxu0 0.0
  %920 = vmatmul.mubr.f32.gmra.mrb[0].mxu0 %v544
  %v921 = vpop.f32.mrb[0].mxu0
  %v922 = vadd.f32 0.0, %v921
  %v923 = vpop.f32.mrb[0].mxu0
  %924 = vmatprep.mubr.f32.mxu0 0.0
  %925 = vmatmul.mubr.f32.gmra.mrb[0].mxu0 %v547
  %v926 = vpop.f32.mrb[0].mxu0
  %v927 = vadd.f32 0.0, %v926
  %v928 = vpop.f32.mrb[0].mxu0
  %929 = vmatprep.mubr.f32.mxu0 0.0
  %930 = vmatmul.mubr.f32.gmra.mrb[0].mxu0 %v550
  %v931 = vpop.f32.mrb[0].mxu0
  %v932 = vadd.f32 0.0, %v931
  %v933 = vpop.f32.mrb[0].mxu0
  %934 = vmatprep.mubr.f32.mxu0 0.0
  %935 = vmatmul.mubr.f32.gmra.mrb[0].mxu0 %v553
  %v936 = vpop.f32.mrb[0].mxu0
  %v937 = vadd.f32 0.0, %v936
  %v938 = vpop.f32.mrb[0].mxu0
  %939 = vdwg.mxu0
  %v940 = vadd.f32 %v290, %v622
  %v941 = vadd.f32 %v291, %v627
  %v942 = vadd.f32 %v292, %v632
  %v943 = vadd.f32 %v293, %v637
  %v944 = vadd.f32 %v294, %v642
  %v945 = vadd.f32 %v295, %v647
  %v946 = vadd.f32 %v296, %v652
  %v947 = vadd.f32 %v297, %v657
  %v948 = vadd.f32 %v298, %v662
  %v949 = vadd.f32 %v299, %v667
  %v950 = vadd.f32 %v300, %v672
  %v951 = vadd.f32 %v301, %v677
  %v952 = vadd.f32 %v302, %v682
  %v953 = vadd.f32 %v303, %v687
  %v954 = vadd.f32 %v304, %v692
  %v955 = vadd.f32 %v305, %v697
  %v956 = vadd.f32 %v306, %v702
  %v957 = vadd.f32 %v307, %v707
  %v958 = vadd.f32 %v308, %v712
  %v959 = vadd.f32 %v309, %v717
  %v960 = vadd.f32 %v310, %v722
  %v961 = vadd.f32 %v311, %v727
  %v962 = vadd.f32 %v312, %v732
  %v963 = vadd.f32 %v313, %v737
  %v964 = vadd.f32 %v314, %v742
  %v965 = vadd.f32 %v315, %v747
  %v966 = vadd.f32 %v316, %v752
  %v967 = vadd.f32 %v317, %v757
  %v968 = vadd.f32 %v318, %v762
  %v969 = vadd.f32 %v319, %v767
  %v970 = vadd.f32 %v320, %v772
  %v971 = vadd.f32 %v321, %v777
  %v972 = vadd.f32 %v322, %v782
  %v973 = vadd.f32 %v323, %v787
  %v974 = vadd.f32 %v324, %v792
  %v975 = vadd.f32 %v325, %v797
  %v976 = vadd.f32 %v326, %v802
  %v977 = vadd.f32 %v327, %v807
  %v978 = vadd.f32 %v328, %v812
  %v979 = vadd.f32 %v329, %v817
  %v980 = vadd.f32 %v330, %v822
  %v981 = vadd.f32 %v331, %v827
  %v982 = vadd.f32 %v332, %v832
  %v983 = vadd.f32 %v333, %v837
  %v984 = vadd.f32 %v334, %v842
  %v985 = vadd.f32 %v335, %v847
  %v986 = vadd.f32 %v336, %v852
  %v987 = vadd.f32 %v337, %v857
  %v988 = vadd.f32 %v338, %v862
  %v989 = vadd.f32 %v339, %v867
  %v990 = vadd.f32 %v340, %v872
  %v991 = vadd.f32 %v341, %v877
  %v992 = vadd.f32 %v342, %v882
  %v993 = vadd.f32 %v343, %v887
  %v994 = vadd.f32 %v344, %v892
  %v995 = vadd.f32 %v345, %v897
  %v996 = vadd.f32 %v346, %v902
  %v997 = vadd.f32 %v347, %v907
  %v998 = vadd.f32 %v348, %v912
  %v999 = vadd.f32 %v349, %v917
  %v1000 = vadd.f32 %v350, %v922
  %v1001 = vadd.f32 %v351, %v927
  %v1002 = vadd.f32 %v352, %v932
  %v1003 = vadd.f32 %v353, %v937
  %1004 = vst.msk [vmem:[#allocation2] sm:$0xff] %vm362, %v940
  %1005 = vst.msk [vmem:[#allocation2 + $0x8] sm:$0xff] %vm362, %v941
  %1006 = vst.msk [vmem:[#allocation2 + $0x10] sm:$0xff] %vm362, %v942
  %1007 = vst.msk [vmem:[#allocation2 + $0x18] sm:$0xff] %vm362, %v943
  %1008 = vst.msk [vmem:[#allocation2 + $0x20] sm:$0xff] %vm362, %v944
  %1009 = vst.msk [vmem:[#allocation2 + $0x28] sm:$0xff] %vm362, %v945
  %1010 = vst.msk [vmem:[#allocation2 + $0x30] sm:$0xff] %vm362, %v946
  %1011 = vst.msk [vmem:[#allocation2 + $0x38] sm:$0xff] %vm362, %v947
  %1012 = vst.msk [vmem:[#allocation2 + $0x40] sm:$0xff] %vm362, %v948
  %1013 = vst.msk [vmem:[#allocation2 + $0x48] sm:$0xff] %vm362, %v949
  %1014 = vst.msk [vmem:[#allocation2 + $0x50] sm:$0xff] %vm362, %v950
  %1015 = vst.msk [vmem:[#allocation2 + $0x58] sm:$0xff] %vm362, %v951
  %1016 = vst.msk [vmem:[#allocation2 + $0x60] sm:$0xff] %vm362, %v952
  %1017 = vst.msk [vmem:[#allocation2 + $0x68] sm:$0xff] %vm362, %v953
  %1018 = vst.msk [vmem:[#allocation2 + $0x70] sm:$0xff] %vm362, %v954
  %1019 = vst.msk [vmem:[#allocation2 + $0x78] sm:$0xff] %vm362, %v955
  %1020 = vst.msk [vmem:[#allocation2 + $0x80] sm:$0xff] %vm362, %v956
  %1021 = vst.msk [vmem:[#allocation2 + $0x88] sm:$0xff] %vm362, %v957
  %1022 = vst.msk [vmem:[#allocation2 + $0x90] sm:$0xff] %vm362, %v958
  %1023 = vst.msk [vmem:[#allocation2 + $0x98] sm:$0xff] %vm362, %v959
  %1024 = vst.msk [vmem:[#allocation2 + $0xa0] sm:$0xff] %vm362, %v960
  %1025 = vst.msk [vmem:[#allocation2 + $0xa8] sm:$0xff] %vm362, %v961
  %1026 = vst.msk [vmem:[#allocation2 + $0xb0] sm:$0xff] %vm362, %v962
  %1027 = vst.msk [vmem:[#allocation2 + $0xb8] sm:$0xff] %vm362, %v963
  %1028 = vst.msk [vmem:[#allocation2 + $0xc0] sm:$0xff] %vm362, %v964
  %1029 = vst.msk [vmem:[#allocation2 + $0xc8] sm:$0xff] %vm362, %v965
  %1030 = vst.msk [vmem:[#allocation2 + $0xd0] sm:$0xff] %vm362, %v966
  %1031 = vst.msk [vmem:[#allocation2 + $0xd8] sm:$0xff] %vm362, %v967
  %1032 = vst.msk [vmem:[#allocation2 + $0xe0] sm:$0xff] %vm362, %v968
  %1033 = vst.msk [vmem:[#allocation2 + $0xe8] sm:$0xff] %vm362, %v969
  %1034 = vst.msk [vmem:[#allocation2 + $0xf0] sm:$0xff] %vm362, %v970
  %1035 = vst.msk [vmem:[#allocation2 + $0xf8] sm:$0xff] %vm362, %v971
  %1036 = vst.msk [vmem:[#allocation2 + $0x100] sm:$0xff] %vm362, %v972
  %1037 = vst.msk [vmem:[#allocation2 + $0x108] sm:$0xff] %vm362, %v973
  %1038 = vst.msk [vmem:[#allocation2 + $0x110] sm:$0xff] %vm362, %v974
  %1039 = vst.msk [vmem:[#allocation2 + $0x118] sm:$0xff] %vm362, %v975
  %1040 = vst.msk [vmem:[#allocation2 + $0x120] sm:$0xff] %vm362, %v976
  %1041 = vst.msk [vmem:[#allocation2 + $0x128] sm:$0xff] %vm362, %v977
  %1042 = vst.msk [vmem:[#allocation2 + $0x130] sm:$0xff] %vm362, %v978
  %1043 = vst.msk [vmem:[#allocation2 + $0x138] sm:$0xff] %vm362, %v979
  %1044 = vst.msk [vmem:[#allocation2 + $0x140] sm:$0xff] %vm362, %v980
  %1045 = vst.msk [vmem:[#allocation2 + $0x148] sm:$0xff] %vm362, %v981
  %1046 = vst.msk [vmem:[#allocation2 + $0x150] sm:$0xff] %vm362, %v982
  %1047 = vst.msk [vmem:[#allocation2 + $0x158] sm:$0xff] %vm362, %v983
  %1048 = vst.msk [vmem:[#allocation2 + $0x160] sm:$0xff] %vm362, %v984
  %1049 = vst.msk [vmem:[#allocation2 + $0x168] sm:$0xff] %vm362, %v985
  %1050 = vst.msk [vmem:[#allocation2 + $0x170] sm:$0xff] %vm362, %v986
  %1051 = vst.msk [vmem:[#allocation2 + $0x178] sm:$0xff] %vm362, %v987
  %1052 = vst.msk [vmem:[#allocation2 + $0x180] sm:$0xff] %vm362, %v988
  %1053 = vst.msk [vmem:[#allocation2 + $0x188] sm:$0xff] %vm362, %v989
  %1054 = vst.msk [vmem:[#allocation2 + $0x190] sm:$0xff] %vm362, %v990
  %1055 = vst.msk [vmem:[#allocation2 + $0x198] sm:$0xff] %vm362, %v991
  %1056 = vst.msk [vmem:[#allocation2 + $0x1a0] sm:$0xff] %vm362, %v992
  %1057 = vst.msk [vmem:[#allocation2 + $0x1a8] sm:$0xff] %vm362, %v993
  %1058 = vst.msk [vmem:[#allocation2 + $0x1b0] sm:$0xff] %vm362, %v994
  %1059 = vst.msk [vmem:[#allocation2 + $0x1b8] sm:$0xff] %vm362, %v995
  %1060 = vst.msk [vmem:[#allocation2 + $0x1c0] sm:$0xff] %vm362, %v996
  %1061 = vst.msk [vmem:[#allocation2 + $0x1c8] sm:$0xff] %vm362, %v997
  %1062 = vst.msk [vmem:[#allocation2 + $0x1d0] sm:$0xff] %vm362, %v998
  %1063 = vst.msk [vmem:[#allocation2 + $0x1d8] sm:$0xff] %vm362, %v999
  %1064 = vst.msk [vmem:[#allocation2 + $0x1e0] sm:$0xff] %vm362, %v1000
  %1065 = vst.msk [vmem:[#allocation2 + $0x1e8] sm:$0xff] %vm362, %v1001
  %1066 = vst.msk [vmem:[#allocation2 + $0x1f0] sm:$0xff] %vm362, %v1002
  %1067 = vst.msk [vmem:[#allocation2 + $0x1f8] sm:$0xff] %vm362, %v1003
  %v1068 = vld [vmem:[#allocation3] sm:$0xff]
  %v1069 = vld [vmem:[#allocation3 + $0x8] sm:$0xff]
  %v1070 = vld [vmem:[#allocation3 + $0x10] sm:$0xff]
  %v1071 = vld [vmem:[#allocation3 + $0x18] sm:$0xff]
  %v1072 = vld [vmem:[#allocation3 + $0x20] sm:$0xff]
  %v1073 = vld [vmem:[#allocation3 + $0x28] sm:$0xff]
  %v1074 = vld [vmem:[#allocation3 + $0x30] sm:$0xff]
  %v1075 = vld [vmem:[#allocation3 + $0x38] sm:$0xff]
  %v1076 = vld [vmem:[#allocation3 + $0x40] sm:$0xff]
  %v1077 = vld [vmem:[#allocation3 + $0x48] sm:$0xff]
  %v1078 = vld [vmem:[#allocation3 + $0x50] sm:$0xff]
  %v1079 = vld [vmem:[#allocation3 + $0x58] sm:$0xff]
  %v1080 = vld [vmem:[#allocation3 + $0x60] sm:$0xff]
  %v1081 = vld [vmem:[#allocation3 + $0x68] sm:$0xff]
  %v1082 = vld [vmem:[#allocation3 + $0x70] sm:$0xff]
  %v1083 = vld [vmem:[#allocation3 + $0x78] sm:$0xff]
  %v1084 = vld [vmem:[#allocation3 + $0x80] sm:$0xff]
  %v1085 = vld [vmem:[#allocation3 + $0x88] sm:$0xff]
  %v1086 = vld [vmem:[#allocation3 + $0x90] sm:$0xff]
  %v1087 = vld [vmem:[#allocation3 + $0x98] sm:$0xff]
  %v1088 = vld [vmem:[#allocation3 + $0xa0] sm:$0xff]
  %v1089 = vld [vmem:[#allocation3 + $0xa8] sm:$0xff]
  %v1090 = vld [vmem:[#allocation3 + $0xb0] sm:$0xff]
  %v1091 = vld [vmem:[#allocation3 + $0xb8] sm:$0xff]
  %v1092 = vld [vmem:[#allocation3 + $0xc0] sm:$0xff]
  %v1093 = vld [vmem:[#allocation3 + $0xc8] sm:$0xff]
  %v1094 = vld [vmem:[#allocation3 + $0xd0] sm:$0xff]
  %v1095 = vld [vmem:[#allocation3 + $0xd8] sm:$0xff]
  %v1096 = vld [vmem:[#allocation3 + $0xe0] sm:$0xff]
  %v1097 = vld [vmem:[#allocation3 + $0xe8] sm:$0xff]
  %v1098 = vld [vmem:[#allocation3 + $0xf0] sm:$0xff]
  %v1099 = vld [vmem:[#allocation3 + $0xf8] sm:$0xff]
  %v1100 = vld [vmem:[#allocation3 + $0x100] sm:$0xff]
  %v1101 = vld [vmem:[#allocation3 + $0x108] sm:$0xff]
  %v1102 = vld [vmem:[#allocation3 + $0x110] sm:$0xff]
  %v1103 = vld [vmem:[#allocation3 + $0x118] sm:$0xff]
  %v1104 = vld [vmem:[#allocation3 + $0x120] sm:$0xff]
  %v1105 = vld [vmem:[#allocation3 + $0x128] sm:$0xff]
  %v1106 = vld [vmem:[#allocation3 + $0x130] sm:$0xff]
  %v1107 = vld [vmem:[#allocation3 + $0x138] sm:$0xff]
  %v1108 = vld [vmem:[#allocation3 + $0x140] sm:$0xff]
  %v1109 = vld [vmem:[#allocation3 + $0x148] sm:$0xff]
  %v1110 = vld [vmem:[#allocation3 + $0x150] sm:$0xff]
  %v1111 = vld [vmem:[#allocation3 + $0x158] sm:$0xff]
  %v1112 = vld [vmem:[#allocation3 + $0x160] sm:$0xff]
  %v1113 = vld [vmem:[#allocation3 + $0x168] sm:$0xff]
  %v1114 = vld [vmem:[#allocation3 + $0x170] sm:$0xff]
  %v1115 = vld [vmem:[#allocation3 + $0x178] sm:$0xff]
  %v1116 = vld [vmem:[#allocation3 + $0x180] sm:$0xff]
  %v1117 = vld [vmem:[#allocation3 + $0x188] sm:$0xff]
  %v1118 = vld [vmem:[#allocation3 + $0x190] sm:$0xff]
  %v1119 = vld [vmem:[#allocation3 + $0x198] sm:$0xff]
  %v1120 = vld [vmem:[#allocation3 + $0x1a0] sm:$0xff]
  %v1121 = vld [vmem:[#allocation3 + $0x1a8] sm:$0xff]
  %v1122 = vld [vmem:[#allocation3 + $0x1b0] sm:$0xff]
  %v1123 = vld [vmem:[#allocation3 + $0x1b8] sm:$0xff]
  %v1124 = vld [vmem:[#allocation3 + $0x1c0] sm:$0xff]
  %v1125 = vld [vmem:[#allocation3 + $0x1c8] sm:$0xff]
  %v1126 = vld [vmem:[#allocation3 + $0x1d0] sm:$0xff]
  %v1127 = vld [vmem:[#allocation3 + $0x1d8] sm:$0xff]
  %v1128 = vld [vmem:[#allocation3 + $0x1e0] sm:$0xff]
  %v1129 = vld [vmem:[#allocation3 + $0x1e8] sm:$0xff]
  %v1130 = vld [vmem:[#allocation3 + $0x1f0] sm:$0xff]
  %v1131 = vld [vmem:[#allocation3 + $0x1f8] sm:$0xff]
  %v1132 = vld [vmem:[%s2] sm:$0xff]
  %v1133 = vld [vmem:[%s2 + $0x8] sm:$0xff]
  %v1134 = vld [vmem:[%s2 + $0x10] sm:$0xff]
  %v1135 = vld [vmem:[%s2 + $0x18] sm:$0xff]
  %v1136 = vld [vmem:[%s2 + $0x20] sm:$0xff]
  %v1137 = vld [vmem:[%s2 + $0x28] sm:$0xff]
  %v1138 = vld [vmem:[%s2 + $0x30] sm:$0xff]
  %v1139 = vld [vmem:[%s2 + $0x38] sm:$0xff]
  %1140 = vmatprep.subr.mxu0 0.0
  %1141 = vmatpush1.msra.mxu0 %v1132
  %1142 = vmatprep.subr.mxu0 0.0
  %1143 = vmatpush1.msra.mxu0 %v1133
  %1144 = vmatprep.subr.mxu0 0.0
  %1145 = vmatpush1.msra.mxu0 %v1134
  %1146 = vmatprep.subr.mxu0 0.0
  %1147 = vmatpush1.msra.mxu0 %v1135
  %1148 = vmatprep.subr.mxu0 0.0
  %1149 = vmatpush1.msra.mxu0 %v1136
  %1150 = vmatprep.subr.mxu0 0.0
  %1151 = vmatpush1.msra.mxu0 %v1137
  %1152 = vmatprep.subr.mxu0 0.0
  %1153 = vmatpush1.msra.mxu0 %v1138
  %1154 = vmatprep.subr.mxu0 0.0
  %1155 = vmatpush1.msra.mxu0 %v1139
  %1156 = vmatprep.subr.mxu0 0.0
  %1157 = vmatpush1.msra.mxu0 0.0
  %1158 = vmatprep.subr.mxu0 0.0
  %1159 = vmatpush1.msra.mxu0 0.0
  %1160 = vmatprep.subr.mxu0 0.0
  %1161 = vmatpush1.msra.mxu0 0.0
  %1162 = vmatprep.subr.mxu0 0.0
  %1163 = vmatpush1.msra.mxu0 0.0
  %1164 = vmatprep.subr.mxu0 0.0
  %1165 = vmatpush1.msra.mxu0 0.0
  %1166 = vmatprep.subr.mxu0 0.0
  %1167 = vmatpush1.msra.mxu0 0.0
  %1168 = vmatprep.subr.mxu0 0.0
  %1169 = vmatpush1.msra.mxu0 0.0
  %1170 = vmatprep.subr.mxu0 0.0
  %1171 = vmatpush1.msra.mxu0 0.0
  %1172 = vmatprep.subr.mxu0 0.0
  %1173 = vmatpush1.msra.mxu0 0.0
  %1174 = vmatprep.subr.mxu0 0.0
  %1175 = vmatpush1.msra.mxu0 0.0
  %1176 = vmatprep.subr.mxu0 0.0
  %1177 = vmatpush1.msra.mxu0 0.0
  %1178 = vmatprep.subr.mxu0 0.0
  %1179 = vmatpush1.msra.mxu0 0.0
  %1180 = vmatprep.subr.mxu0 0.0
  %1181 = vmatpush1.msra.mxu0 0.0
  %1182 = vmatprep.subr.mxu0 0.0
  %1183 = vmatpush1.msra.mxu0 0.0
  %1184 = vmatprep.subr.mxu0 0.0
  %1185 = vmatpush1.msra.mxu0 0.0
  %1186 = vmatprep.subr.mxu0 0.0
  %1187 = vmatpush1.msra.mxu0 0.0
  %1188 = vmatprep.subr.mxu0 0.0
  %1189 = vmatpush1.msra.mxu0 0.0
  %1190 = vmatprep.subr.mxu0 0.0
  %1191 = vmatpush1.msra.mxu0 0.0
  %1192 = vmatprep.subr.mxu0 0.0
  %1193 = vmatpush1.msra.mxu0 0.0
  %1194 = vmatprep.subr.mxu0 0.0
  %1195 = vmatpush1.msra.mxu0 0.0
  %1196 = vmatprep.subr.mxu0 0.0
  %1197 = vmatpush1.msra.mxu0 0.0
  %1198 = vmatprep.subr.mxu0 0.0
  %1199 = vmatpush1.msra.mxu0 0.0
  %1200 = vmatprep.subr.mxu0 0.0
  %1201 = vmatpush1.msra.mxu0 0.0
  %1202 = vmatprep.subr.mxu0 0.0
  %1203 = vmatpush1.msra.mxu0 0.0
  %1204 = vmatprep.mubr.f32.mxu0 0.0
  %1205 = vmatmul.mubr.f32.gmra.mrb[0].mxu0 %v364
  %v1206 = vpop.f32.mrb[0].mxu0
  %v1207 = vadd.f32 0.0, %v1206
  %v1208 = vpop.f32.mrb[0].mxu0
  %1209 = vmatprep.mubr.f32.mxu0 0.0
  %1210 = vmatmul.mubr.f32.gmra.mrb[0].mxu0 %v367
  %v1211 = vpop.f32.mrb[0].mxu0
  %v1212 = vadd.f32 0.0, %v1211
  %v1213 = vpop.f32.mrb[0].mxu0
  %1214 = vmatprep.mubr.f32.mxu0 0.0
  %1215 = vmatmul.mubr.f32.gmra.mrb[0].mxu0 %v370
  %v1216 = vpop.f32.mrb[0].mxu0
  %v1217 = vadd.f32 0.0, %v1216
  %v1218 = vpop.f32.mrb[0].mxu0
  %1219 = vmatprep.mubr.f32.mxu0 0.0
  %1220 = vmatmul.mubr.f32.gmra.mrb[0].mxu0 %v373
  %v1221 = vpop.f32.mrb[0].mxu0
  %v1222 = vadd.f32 0.0, %v1221
  %v1223 = vpop.f32.mrb[0].mxu0
  %1224 = vmatprep.mubr.f32.mxu0 0.0
  %1225 = vmatmul.mubr.f32.gmra.mrb[0].mxu0 %v376
  %v1226 = vpop.f32.mrb[0].mxu0
  %v1227 = vadd.f32 0.0, %v1226
  %v1228 = vpop.f32.mrb[0].mxu0
  %1229 = vmatprep.mubr.f32.mxu0 0.0
  %1230 = vmatmul.mubr.f32.gmra.mrb[0].mxu0 %v379
  %v1231 = vpop.f32.mrb[0].mxu0
  %v1232 = vadd.f32 0.0, %v1231
  %v1233 = vpop.f32.mrb[0].mxu0
  %1234 = vmatprep.mubr.f32.mxu0 0.0
  %1235 = vmatmul.mubr.f32.gmra.mrb[0].mxu0 %v382
  %v1236 = vpop.f32.mrb[0].mxu0
  %v1237 = vadd.f32 0.0, %v1236
  %v1238 = vpop.f32.mrb[0].mxu0
  %1239 = vmatprep.mubr.f32.mxu0 0.0
  %1240 = vmatmul.mubr.f32.gmra.mrb[0].mxu0 %v385
  %v1241 = vpop.f32.mrb[0].mxu0
  %v1242 = vadd.f32 0.0, %v1241
  %v1243 = vpop.f32.mrb[0].mxu0
  %1244 = vmatprep.mubr.f32.mxu0 0.0
  %1245 = vmatmul.mubr.f32.gmra.mrb[0].mxu0 %v388
  %v1246 = vpop.f32.mrb[0].mxu0
  %v1247 = vadd.f32 0.0, %v1246
  %v1248 = vpop.f32.mrb[0].mxu0
  %1249 = vmatprep.mubr.f32.mxu0 0.0
  %1250 = vmatmul.mubr.f32.gmra.mrb[0].mxu0 %v391
  %v1251 = vpop.f32.mrb[0].mxu0
  %v1252 = vadd.f32 0.0, %v1251
  %v1253 = vpop.f32.mrb[0].mxu0
  %1254 = vmatprep.mubr.f32.mxu0 0.0
  %1255 = vmatmul.mubr.f32.gmra.mrb[0].mxu0 %v394
  %v1256 = vpop.f32.mrb[0].mxu0
  %v1257 = vadd.f32 0.0, %v1256
  %v1258 = vpop.f32.mrb[0].mxu0
  %1259 = vmatprep.mubr.f32.mxu0 0.0
  %1260 = vmatmul.mubr.f32.gmra.mrb[0].mxu0 %v397
  %v1261 = vpop.f32.mrb[0].mxu0
  %v1262 = vadd.f32 0.0, %v1261
  %v1263 = vpop.f32.mrb[0].mxu0
  %1264 = vmatprep.mubr.f32.mxu0 0.0
  %1265 = vmatmul.mubr.f32.gmra.mrb[0].mxu0 %v400
  %v1266 = vpop.f32.mrb[0].mxu0
  %v1267 = vadd.f32 0.0, %v1266
  %v1268 = vpop.f32.mrb[0].mxu0
  %1269 = vmatprep.mubr.f32.mxu0 0.0
  %1270 = vmatmul.mubr.f32.gmra.mrb[0].mxu0 %v403
  %v1271 = vpop.f32.mrb[0].mxu0
  %v1272 = vadd.f32 0.0, %v1271
  %v1273 = vpop.f32.mrb[0].mxu0
  %1274 = vmatprep.mubr.f32.mxu0 0.0
  %1275 = vmatmul.mubr.f32.gmra.mrb[0].mxu0 %v406
  %v1276 = vpop.f32.mrb[0].mxu0
  %v1277 = vadd.f32 0.0, %v1276
  %v1278 = vpop.f32.mrb[0].mxu0
  %1279 = vmatprep.mubr.f32.mxu0 0.0
  %1280 = vmatmul.mubr.f32.gmra.mrb[0].mxu0 %v409
  %v1281 = vpop.f32.mrb[0].mxu0
  %v1282 = vadd.f32 0.0, %v1281
  %v1283 = vpop.f32.mrb[0].mxu0
  %1284 = vmatprep.mubr.f32.mxu0 0.0
  %1285 = vmatmul.mubr.f32.gmra.mrb[0].mxu0 %v412
  %v1286 = vpop.f32.mrb[0].mxu0
  %v1287 = vadd.f32 0.0, %v1286
  %v1288 = vpop.f32.mrb[0].mxu0
  %1289 = vmatprep.mubr.f32.mxu0 0.0
  %1290 = vmatmul.mubr.f32.gmra.mrb[0].mxu0 %v415
  %v1291 = vpop.f32.mrb[0].mxu0
  %v1292 = vadd.f32 0.0, %v1291
  %v1293 = vpop.f32.mrb[0].mxu0
  %1294 = vmatprep.mubr.f32.mxu0 0.0
  %1295 = vmatmul.mubr.f32.gmra.mrb[0].mxu0 %v418
  %v1296 = vpop.f32.mrb[0].mxu0
  %v1297 = vadd.f32 0.0, %v1296
  %v1298 = vpop.f32.mrb[0].mxu0
  %1299 = vmatprep.mubr.f32.mxu0 0.0
  %1300 = vmatmul.mubr.f32.gmra.mrb[0].mxu0 %v421
  %v1301 = vpop.f32.mrb[0].mxu0
  %v1302 = vadd.f32 0.0, %v1301
  %v1303 = vpop.f32.mrb[0].mxu0
  %1304 = vmatprep.mubr.f32.mxu0 0.0
  %1305 = vmatmul.mubr.f32.gmra.mrb[0].mxu0 %v424
  %v1306 = vpop.f32.mrb[0].mxu0
  %v1307 = vadd.f32 0.0, %v1306
  %v1308 = vpop.f32.mrb[0].mxu0
  %1309 = vmatprep.mubr.f32.mxu0 0.0
  %1310 = vmatmul.mubr.f32.gmra.mrb[0].mxu0 %v427
  %v1311 = vpop.f32.mrb[0].mxu0
  %v1312 = vadd.f32 0.0, %v1311
  %v1313 = vpop.f32.mrb[0].mxu0
  %1314 = vmatprep.mubr.f32.mxu0 0.0
  %1315 = vmatmul.mubr.f32.gmra.mrb[0].mxu0 %v430
  %v1316 = vpop.f32.mrb[0].mxu0
  %v1317 = vadd.f32 0.0, %v1316
  %v1318 = vpop.f32.mrb[0].mxu0
  %1319 = vmatprep.mubr.f32.mxu0 0.0
  %1320 = vmatmul.mubr.f32.gmra.mrb[0].mxu0 %v433
  %v1321 = vpop.f32.mrb[0].mxu0
  %v1322 = vadd.f32 0.0, %v1321
  %v1323 = vpop.f32.mrb[0].mxu0
  %1324 = vmatprep.mubr.f32.mxu0 0.0
  %1325 = vmatmul.mubr.f32.gmra.mrb[0].mxu0 %v436
  %v1326 = vpop.f32.mrb[0].mxu0
  %v1327 = vadd.f32 0.0, %v1326
  %v1328 = vpop.f32.mrb[0].mxu0
  %1329 = vmatprep.mubr.f32.mxu0 0.0
  %1330 = vmatmul.mubr.f32.gmra.mrb[0].mxu0 %v439
  %v1331 = vpop.f32.mrb[0].mxu0
  %v1332 = vadd.f32 0.0, %v1331
  %v1333 = vpop.f32.mrb[0].mxu0
  %1334 = vmatprep.mubr.f32.mxu0 0.0
  %1335 = vmatmul.mubr.f32.gmra.mrb[0].mxu0 %v442
  %v1336 = vpop.f32.mrb[0].mxu0
  %v1337 = vadd.f32 0.0, %v1336
  %v1338 = vpop.f32.mrb[0].mxu0
  %1339 = vmatprep.mubr.f32.mxu0 0.0
  %1340 = vmatmul.mubr.f32.gmra.mrb[0].mxu0 %v445
  %v1341 = vpop.f32.mrb[0].mxu0
  %v1342 = vadd.f32 0.0, %v1341
  %v1343 = vpop.f32.mrb[0].mxu0
  %1344 = vmatprep.mubr.f32.mxu0 0.0
  %1345 = vmatmul.mubr.f32.gmra.mrb[0].mxu0 %v448
  %v1346 = vpop.f32.mrb[0].mxu0
  %v1347 = vadd.f32 0.0, %v1346
  %v1348 = vpop.f32.mrb[0].mxu0
  %1349 = vmatprep.mubr.f32.mxu0 0.0
  %1350 = vmatmul.mubr.f32.gmra.mrb[0].mxu0 %v451
  %v1351 = vpop.f32.mrb[0].mxu0
  %v1352 = vadd.f32 0.0, %v1351
  %v1353 = vpop.f32.mrb[0].mxu0
  %1354 = vmatprep.mubr.f32.mxu0 0.0
  %1355 = vmatmul.mubr.f32.gmra.mrb[0].mxu0 %v454
  %v1356 = vpop.f32.mrb[0].mxu0
  %v1357 = vadd.f32 0.0, %v1356
  %v1358 = vpop.f32.mrb[0].mxu0
  %1359 = vmatprep.mubr.f32.mxu0 0.0
  %1360 = vmatmul.mubr.f32.gmra.mrb[0].mxu0 %v457
  %v1361 = vpop.f32.mrb[0].mxu0
  %v1362 = vadd.f32 0.0, %v1361
  %v1363 = vpop.f32.mrb[0].mxu0
  %1364 = vmatprep.mubr.f32.mxu0 0.0
  %1365 = vmatmul.mubr.f32.gmra.mrb[0].mxu0 %v460
  %v1366 = vpop.f32.mrb[0].mxu0
  %v1367 = vadd.f32 0.0, %v1366
  %v1368 = vpop.f32.mrb[0].mxu0
  %1369 = vmatprep.mubr.f32.mxu0 0.0
  %1370 = vmatmul.mubr.f32.gmra.mrb[0].mxu0 %v463
  %v1371 = vpop.f32.mrb[0].mxu0
  %v1372 = vadd.f32 0.0, %v1371
  %v1373 = vpop.f32.mrb[0].mxu0
  %1374 = vmatprep.mubr.f32.mxu0 0.0
  %1375 = vmatmul.mubr.f32.gmra.mrb[0].mxu0 %v466
  %v1376 = vpop.f32.mrb[0].mxu0
  %v1377 = vadd.f32 0.0, %v1376
  %v1378 = vpop.f32.mrb[0].mxu0
  %1379 = vmatprep.mubr.f32.mxu0 0.0
  %1380 = vmatmul.mubr.f32.gmra.mrb[0].mxu0 %v469
  %v1381 = vpop.f32.mrb[0].mxu0
  %v1382 = vadd.f32 0.0, %v1381
  %v1383 = vpop.f32.mrb[0].mxu0
  %1384 = vmatprep.mubr.f32.mxu0 0.0
  %1385 = vmatmul.mubr.f32.gmra.mrb[0].mxu0 %v472
  %v1386 = vpop.f32.mrb[0].mxu0
  %v1387 = vadd.f32 0.0, %v1386
  %v1388 = vpop.f32.mrb[0].mxu0
  %1389 = vmatprep.mubr.f32.mxu0 0.0
  %1390 = vmatmul.mubr.f32.gmra.mrb[0].mxu0 %v475
  %v1391 = vpop.f32.mrb[0].mxu0
  %v1392 = vadd.f32 0.0, %v1391
  %v1393 = vpop.f32.mrb[0].mxu0
  %1394 = vmatprep.mubr.f32.mxu0 0.0
  %1395 = vmatmul.mubr.f32.gmra.mrb[0].mxu0 %v478
  %v1396 = vpop.f32.mrb[0].mxu0
  %v1397 = vadd.f32 0.0, %v1396
  %v1398 = vpop.f32.mrb[0].mxu0
  %1399 = vmatprep.mubr.f32.mxu0 0.0
  %1400 = vmatmul.mubr.f32.gmra.mrb[0].mxu0 %v481
  %v1401 = vpop.f32.mrb[0].mxu0
  %v1402 = vadd.f32 0.0, %v1401
  %v1403 = vpop.f32.mrb[0].mxu0
  %1404 = vmatprep.mubr.f32.mxu0 0.0
  %1405 = vmatmul.mubr.f32.gmra.mrb[0].mxu0 %v484
  %v1406 = vpop.f32.mrb[0].mxu0
  %v1407 = vadd.f32 0.0, %v1406
  %v1408 = vpop.f32.mrb[0].mxu0
  %1409 = vmatprep.mubr.f32.mxu0 0.0
  %1410 = vmatmul.mubr.f32.gmra.mrb[0].mxu0 %v487
  %v1411 = vpop.f32.mrb[0].mxu0
  %v1412 = vadd.f32 0.0, %v1411
  %v1413 = vpop.f32.mrb[0].mxu0
  %1414 = vmatprep.mubr.f32.mxu0 0.0
  %1415 = vmatmul.mubr.f32.gmra.mrb[0].mxu0 %v490
  %v1416 = vpop.f32.mrb[0].mxu0
  %v1417 = vadd.f32 0.0, %v1416
  %v1418 = vpop.f32.mrb[0].mxu0
  %1419 = vmatprep.mubr.f32.mxu0 0.0
  %1420 = vmatmul.mubr.f32.gmra.mrb[0].mxu0 %v493
  %v1421 = vpop.f32.mrb[0].mxu0
  %v1422 = vadd.f32 0.0, %v1421
  %v1423 = vpop.f32.mrb[0].mxu0
  %1424 = vmatprep.mubr.f32.mxu0 0.0
  %1425 = vmatmul.mubr.f32.gmra.mrb[0].mxu0 %v496
  %v1426 = vpop.f32.mrb[0].mxu0
  %v1427 = vadd.f32 0.0, %v1426
  %v1428 = vpop.f32.mrb[0].mxu0
  %1429 = vmatprep.mubr.f32.mxu0 0.0
  %1430 = vmatmul.mubr.f32.gmra.mrb[0].mxu0 %v499
  %v1431 = vpop.f32.mrb[0].mxu0
  %v1432 = vadd.f32 0.0, %v1431
  %v1433 = vpop.f32.mrb[0].mxu0
  %1434 = vmatprep.mubr.f32.mxu0 0.0
  %1435 = vmatmul.mubr.f32.gmra.mrb[0].mxu0 %v502
  %v1436 = vpop.f32.mrb[0].mxu0
  %v1437 = vadd.f32 0.0, %v1436
  %v1438 = vpop.f32.mrb[0].mxu0
  %1439 = vmatprep.mubr.f32.mxu0 0.0
  %1440 = vmatmul.mubr.f32.gmra.mrb[0].mxu0 %v505
  %v1441 = vpop.f32.mrb[0].mxu0
  %v1442 = vadd.f32 0.0, %v1441
  %v1443 = vpop.f32.mrb[0].mxu0
  %1444 = vmatprep.mubr.f32.mxu0 0.0
  %1445 = vmatmul.mubr.f32.gmra.mrb[0].mxu0 %v508
  %v1446 = vpop.f32.mrb[0].mxu0
  %v1447 = vadd.f32 0.0, %v1446
  %v1448 = vpop.f32.mrb[0].mxu0
  %1449 = vmatprep.mubr.f32.mxu0 0.0
  %1450 = vmatmul.mubr.f32.gmra.mrb[0].mxu0 %v511
  %v1451 = vpop.f32.mrb[0].mxu0
  %v1452 = vadd.f32 0.0, %v1451
  %v1453 = vpop.f32.mrb[0].mxu0
  %1454 = vmatprep.mubr.f32.mxu0 0.0
  %1455 = vmatmul.mubr.f32.gmra.mrb[0].mxu0 %v514
  %v1456 = vpop.f32.mrb[0].mxu0
  %v1457 = vadd.f32 0.0, %v1456
  %v1458 = vpop.f32.mrb[0].mxu0
  %1459 = vmatprep.mubr.f32.mxu0 0.0
  %1460 = vmatmul.mubr.f32.gmra.mrb[0].mxu0 %v517
  %v1461 = vpop.f32.mrb[0].mxu0
  %v1462 = vadd.f32 0.0, %v1461
  %v1463 = vpop.f32.mrb[0].mxu0
  %1464 = vmatprep.mubr.f32.mxu0 0.0
  %1465 = vmatmul.mubr.f32.gmra.mrb[0].mxu0 %v520
  %v1466 = vpop.f32.mrb[0].mxu0
  %v1467 = vadd.f32 0.0, %v1466
  %v1468 = vpop.f32.mrb[0].mxu0
  %1469 = vmatprep.mubr.f32.mxu0 0.0
  %1470 = vmatmul.mubr.f32.gmra.mrb[0].mxu0 %v523
  %v1471 = vpop.f32.mrb[0].mxu0
  %v1472 = vadd.f32 0.0, %v1471
  %v1473 = vpop.f32.mrb[0].mxu0
  %1474 = vmatprep.mubr.f32.mxu0 0.0
  %1475 = vmatmul.mubr.f32.gmra.mrb[0].mxu0 %v526
  %v1476 = vpop.f32.mrb[0].mxu0
  %v1477 = vadd.f32 0.0, %v1476
  %v1478 = vpop.f32.mrb[0].mxu0
  %1479 = vmatprep.mubr.f32.mxu0 0.0
  %1480 = vmatmul.mubr.f32.gmra.mrb[0].mxu0 %v529
  %v1481 = vpop.f32.mrb[0].mxu0
  %v1482 = vadd.f32 0.0, %v1481
  %v1483 = vpop.f32.mrb[0].mxu0
  %1484 = vmatprep.mubr.f32.mxu0 0.0
  %1485 = vmatmul.mubr.f32.gmra.mrb[0].mxu0 %v532
  %v1486 = vpop.f32.mrb[0].mxu0
  %v1487 = vadd.f32 0.0, %v1486
  %v1488 = vpop.f32.mrb[0].mxu0
  %1489 = vmatprep.mubr.f32.mxu0 0.0
  %1490 = vmatmul.mubr.f32.gmra.mrb[0].mxu0 %v535
  %v1491 = vpop.f32.mrb[0].mxu0
  %v1492 = vadd.f32 0.0, %v1491
  %v1493 = vpop.f32.mrb[0].mxu0
  %1494 = vmatprep.mubr.f32.mxu0 0.0
  %1495 = vmatmul.mubr.f32.gmra.mrb[0].mxu0 %v538
  %v1496 = vpop.f32.mrb[0].mxu0
  %v1497 = vadd.f32 0.0, %v1496
  %v1498 = vpop.f32.mrb[0].mxu0
  %1499 = vmatprep.mubr.f32.mxu0 0.0
  %1500 = vmatmul.mubr.f32.gmra.mrb[0].mxu0 %v541
  %v1501 = vpop.f32.mrb[0].mxu0
  %v1502 = vadd.f32 0.0, %v1501
  %v1503 = vpop.f32.mrb[0].mxu0
  %1504 = vmatprep.mubr.f32.mxu0 0.0
  %1505 = vmatmul.mubr.f32.gmra.mrb[0].mxu0 %v544
  %v1506 = vpop.f32.mrb[0].mxu0
  %v1507 = vadd.f32 0.0, %v1506
  %v1508 = vpop.f32.mrb[0].mxu0
  %1509 = vmatprep.mubr.f32.mxu0 0.0
  %1510 = vmatmul.mubr.f32.gmra.mrb[0].mxu0 %v547
  %v1511 = vpop.f32.mrb[0].mxu0
  %v1512 = vadd.f32 0.0, %v1511
  %v1513 = vpop.f32.mrb[0].mxu0
  %1514 = vmatprep.mubr.f32.mxu0 0.0
  %1515 = vmatmul.mubr.f32.gmra.mrb[0].mxu0 %v550
  %v1516 = vpop.f32.mrb[0].mxu0
  %v1517 = vadd.f32 0.0, %v1516
  %v1518 = vpop.f32.mrb[0].mxu0
  %1519 = vmatprep.mubr.f32.mxu0 0.0
  %1520 = vmatmul.mubr.f32.gmra.mrb[0].mxu0 %v553
  %v1521 = vpop.f32.mrb[0].mxu0
  %v1522 = vadd.f32 0.0, %v1521
  %v1523 = vpop.f32.mrb[0].mxu0
  %1524 = vdwg.mxu0
  %v1525 = vadd.f32 %v1068, %v1207
  %v1526 = vadd.f32 %v1069, %v1212
  %v1527 = vadd.f32 %v1070, %v1217
  %v1528 = vadd.f32 %v1071, %v1222
  %v1529 = vadd.f32 %v1072, %v1227
  %v1530 = vadd.f32 %v1073, %v1232
  %v1531 = vadd.f32 %v1074, %v1237
  %v1532 = vadd.f32 %v1075, %v1242
  %v1533 = vadd.f32 %v1076, %v1247
  %v1534 = vadd.f32 %v1077, %v1252
  %v1535 = vadd.f32 %v1078, %v1257
  %v1536 = vadd.f32 %v1079, %v1262
  %v1537 = vadd.f32 %v1080, %v1267
  %v1538 = vadd.f32 %v1081, %v1272
  %v1539 = vadd.f32 %v1082, %v1277
  %v1540 = vadd.f32 %v1083, %v1282
  %v1541 = vadd.f32 %v1084, %v1287
  %v1542 = vadd.f32 %v1085, %v1292
  %v1543 = vadd.f32 %v1086, %v1297
  %v1544 = vadd.f32 %v1087, %v1302
  %v1545 = vadd.f32 %v1088, %v1307
  %v1546 = vadd.f32 %v1089, %v1312
  %v1547 = vadd.f32 %v1090, %v1317
  %v1548 = vadd.f32 %v1091, %v1322
  %v1549 = vadd.f32 %v1092, %v1327
  %v1550 = vadd.f32 %v1093, %v1332
  %v1551 = vadd.f32 %v1094, %v1337
  %v1552 = vadd.f32 %v1095, %v1342
  %v1553 = vadd.f32 %v1096, %v1347
  %v1554 = vadd.f32 %v1097, %v1352
  %v1555 = vadd.f32 %v1098, %v1357
  %v1556 = vadd.f32 %v1099, %v1362
  %v1557 = vadd.f32 %v1100, %v1367
  %v1558 = vadd.f32 %v1101, %v1372
  %v1559 = vadd.f32 %v1102, %v1377
  %v1560 = vadd.f32 %v1103, %v1382
  %v1561 = vadd.f32 %v1104, %v1387
  %v1562 = vadd.f32 %v1105, %v1392
  %v1563 = vadd.f32 %v1106, %v1397
  %v1564 = vadd.f32 %v1107, %v1402
  %v1565 = vadd.f32 %v1108, %v1407
  %v1566 = vadd.f32 %v1109, %v1412
  %v1567 = vadd.f32 %v1110, %v1417
  %v1568 = vadd.f32 %v1111, %v1422
  %v1569 = vadd.f32 %v1112, %v1427
  %v1570 = vadd.f32 %v1113, %v1432
  %v1571 = vadd.f32 %v1114, %v1437
  %v1572 = vadd.f32 %v1115, %v1442
  %v1573 = vadd.f32 %v1116, %v1447
  %v1574 = vadd.f32 %v1117, %v1452
  %v1575 = vadd.f32 %v1118, %v1457
  %v1576 = vadd.f32 %v1119, %v1462
  %v1577 = vadd.f32 %v1120, %v1467
  %v1578 = vadd.f32 %v1121, %v1472
  %v1579 = vadd.f32 %v1122, %v1477
  %v1580 = vadd.f32 %v1123, %v1482
  %v1581 = vadd.f32 %v1124, %v1487
  %v1582 = vadd.f32 %v1125, %v1492
  %v1583 = vadd.f32 %v1126, %v1497
  %v1584 = vadd.f32 %v1127, %v1502
  %v1585 = vadd.f32 %v1128, %v1507
  %v1586 = vadd.f32 %v1129, %v1512
  %v1587 = vadd.f32 %v1130, %v1517
  %v1588 = vadd.f32 %v1131, %v1522
  %1589 = vst.msk [vmem:[#allocation3] sm:$0xff] %vm362, %v1525
  %1590 = vst.msk [vmem:[#allocation3 + $0x8] sm:$0xff] %vm362, %v1526
  %1591 = vst.msk [vmem:[#allocation3 + $0x10] sm:$0xff] %vm362, %v1527
  %1592 = vst.msk [vmem:[#allocation3 + $0x18] sm:$0xff] %vm362, %v1528
  %1593 = vst.msk [vmem:[#allocation3 + $0x20] sm:$0xff] %vm362, %v1529
  %1594 = vst.msk [vmem:[#allocation3 + $0x28] sm:$0xff] %vm362, %v1530
  %1595 = vst.msk [vmem:[#allocation3 + $0x30] sm:$0xff] %vm362, %v1531
  %1596 = vst.msk [vmem:[#allocation3 + $0x38] sm:$0xff] %vm362, %v1532
  %1597 = vst.msk [vmem:[#allocation3 + $0x40] sm:$0xff] %vm362, %v1533
  %1598 = vst.msk [vmem:[#allocation3 + $0x48] sm:$0xff] %vm362, %v1534
  %1599 = vst.msk [vmem:[#allocation3 + $0x50] sm:$0xff] %vm362, %v1535
  %1600 = vst.msk [vmem:[#allocation3 + $0x58] sm:$0xff] %vm362, %v1536
  %1601 = vst.msk [vmem:[#allocation3 + $0x60] sm:$0xff] %vm362, %v1537
  %1602 = vst.msk [vmem:[#allocation3 + $0x68] sm:$0xff] %vm362, %v1538
  %1603 = vst.msk [vmem:[#allocation3 + $0x70] sm:$0xff] %vm362, %v1539
  %1604 = vst.msk [vmem:[#allocation3 + $0x78] sm:$0xff] %vm362, %v1540
  %1605 = vst.msk [vmem:[#allocation3 + $0x80] sm:$0xff] %vm362, %v1541
  %1606 = vst.msk [vmem:[#allocation3 + $0x88] sm:$0xff] %vm362, %v1542
  %1607 = vst.msk [vmem:[#allocation3 + $0x90] sm:$0xff] %vm362, %v1543
  %1608 = vst.msk [vmem:[#allocation3 + $0x98] sm:$0xff] %vm362, %v1544
  %1609 = vst.msk [vmem:[#allocation3 + $0xa0] sm:$0xff] %vm362, %v1545
  %1610 = vst.msk [vmem:[#allocation3 + $0xa8] sm:$0xff] %vm362, %v1546
  %1611 = vst.msk [vmem:[#allocation3 + $0xb0] sm:$0xff] %vm362, %v1547
  %1612 = vst.msk [vmem:[#allocation3 + $0xb8] sm:$0xff] %vm362, %v1548
  %1613 = vst.msk [vmem:[#allocation3 + $0xc0] sm:$0xff] %vm362, %v1549
  %1614 = vst.msk [vmem:[#allocation3 + $0xc8] sm:$0xff] %vm362, %v1550
  %1615 = vst.msk [vmem:[#allocation3 + $0xd0] sm:$0xff] %vm362, %v1551
  %1616 = vst.msk [vmem:[#allocation3 + $0xd8] sm:$0xff] %vm362, %v1552
  %1617 = vst.msk [vmem:[#allocation3 + $0xe0] sm:$0xff] %vm362, %v1553
  %1618 = vst.msk [vmem:[#allocation3 + $0xe8] sm:$0xff] %vm362, %v1554
  %1619 = vst.msk [vmem:[#allocation3 + $0xf0] sm:$0xff] %vm362, %v1555
  %1620 = vst.msk [vmem:[#allocation3 + $0xf8] sm:$0xff] %vm362, %v1556
  %1621 = vst.msk [vmem:[#allocation3 + $0x100] sm:$0xff] %vm362, %v1557
  %1622 = vst.msk [vmem:[#allocation3 + $0x108] sm:$0xff] %vm362, %v1558
  %1623 = vst.msk [vmem:[#allocation3 + $0x110] sm:$0xff] %vm362, %v1559
  %1624 = vst.msk [vmem:[#allocation3 + $0x118] sm:$0xff] %vm362, %v1560
  %1625 = vst.msk [vmem:[#allocation3 + $0x120] sm:$0xff] %vm362, %v1561
  %1626 = vst.msk [vmem:[#allocation3 + $0x128] sm:$0xff] %vm362, %v1562
  %1627 = vst.msk [vmem:[#allocation3 + $0x130] sm:$0xff] %vm362, %v1563
  %1628 = vst.msk [vmem:[#allocation3 + $0x138] sm:$0xff] %vm362, %v1564
  %1629 = vst.msk [vmem:[#allocation3 + $0x140] sm:$0xff] %vm362, %v1565
  %1630 = vst.msk [vmem:[#allocation3 + $0x148] sm:$0xff] %vm362, %v1566
  %1631 = vst.msk [vmem:[#allocation3 + $0x150] sm:$0xff] %vm362, %v1567
  %1632 = vst.msk [vmem:[#allocation3 + $0x158] sm:$0xff] %vm362, %v1568
  %1633 = vst.msk [vmem:[#allocation3 + $0x160] sm:$0xff] %vm362, %v1569
  %1634 = vst.msk [vmem:[#allocation3 + $0x168] sm:$0xff] %vm362, %v1570
  %1635 = vst.msk [vmem:[#allocation3 + $0x170] sm:$0xff] %vm362, %v1571
  %1636 = vst.msk [vmem:[#allocation3 + $0x178] sm:$0xff] %vm362, %v1572
  %1637 = vst.msk [vmem:[#allocation3 + $0x180] sm:$0xff] %vm362, %v1573
  %1638 = vst.msk [vmem:[#allocation3 + $0x188] sm:$0xff] %vm362, %v1574
  %1639 = vst.msk [vmem:[#allocation3 + $0x190] sm:$0xff] %vm362, %v1575
  %1640 = vst.msk [vmem:[#allocation3 + $0x198] sm:$0xff] %vm362, %v1576
  %1641 = vst.msk [vmem:[#allocation3 + $0x1a0] sm:$0xff] %vm362, %v1577
  %1642 = vst.msk [vmem:[#allocation3 + $0x1a8] sm:$0xff] %vm362, %v1578
  %1643 = vst.msk [vmem:[#allocation3 + $0x1b0] sm:$0xff] %vm362, %v1579
  %1644 = vst.msk [vmem:[#allocation3 + $0x1b8] sm:$0xff] %vm362, %v1580
  %1645 = vst.msk [vmem:[#allocation3 + $0x1c0] sm:$0xff] %vm362, %v1581
  %1646 = vst.msk [vmem:[#allocation3 + $0x1c8] sm:$0xff] %vm362, %v1582
  %1647 = vst.msk [vmem:[#allocation3 + $0x1d0] sm:$0xff] %vm362, %v1583
  %1648 = vst.msk [vmem:[#allocation3 + $0x1d8] sm:$0xff] %vm362, %v1584
  %1649 = vst.msk [vmem:[#allocation3 + $0x1e0] sm:$0xff] %vm362, %v1585
  %1650 = vst.msk [vmem:[#allocation3 + $0x1e8] sm:$0xff] %vm362, %v1586
  %1651 = vst.msk [vmem:[#allocation3 + $0x1f0] sm:$0xff] %vm362, %v1587
  %1652 = vst.msk [vmem:[#allocation3 + $0x1f8] sm:$0xff] %vm362, %v1588
  %v1653 = vld [vmem:[#allocation4] sm:$0xff]
  %v1654 = vld [vmem:[#allocation4 + $0x8] sm:$0xff]
  %v1655 = vld [vmem:[#allocation4 + $0x10] sm:$0xff]
  %v1656 = vld [vmem:[#allocation4 + $0x18] sm:$0xff]
  %v1657 = vld [vmem:[#allocation4 + $0x20] sm:$0xff]
  %v1658 = vld [vmem:[#allocation4 + $0x28] sm:$0xff]
  %v1659 = vld [vmem:[#allocation4 + $0x30] sm:$0xff]
  %v1660 = vld [vmem:[#allocation4 + $0x38] sm:$0xff]
  %v1661 = vld [vmem:[#allocation4 + $0x40] sm:$0xff]
  %v1662 = vld [vmem:[#allocation4 + $0x48] sm:$0xff]
  %v1663 = vld [vmem:[#allocation4 + $0x50] sm:$0xff]
  %v1664 = vld [vmem:[#allocation4 + $0x58] sm:$0xff]
  %v1665 = vld [vmem:[#allocation4 + $0x60] sm:$0xff]
  %v1666 = vld [vmem:[#allocation4 + $0x68] sm:$0xff]
  %v1667 = vld [vmem:[#allocation4 + $0x70] sm:$0xff]
  %v1668 = vld [vmem:[#allocation4 + $0x78] sm:$0xff]
  %v1669 = vld [vmem:[#allocation4 + $0x80] sm:$0xff]
  %v1670 = vld [vmem:[#allocation4 + $0x88] sm:$0xff]
  %v1671 = vld [vmem:[#allocation4 + $0x90] sm:$0xff]
  %v1672 = vld [vmem:[#allocation4 + $0x98] sm:$0xff]
  %v1673 = vld [vmem:[#allocation4 + $0xa0] sm:$0xff]
  %v1674 = vld [vmem:[#allocation4 + $0xa8] sm:$0xff]
  %v1675 = vld [vmem:[#allocation4 + $0xb0] sm:$0xff]
  %v1676 = vld [vmem:[#allocation4 + $0xb8] sm:$0xff]
  %v1677 = vld [vmem:[#allocation4 + $0xc0] sm:$0xff]
  %v1678 = vld [vmem:[#allocation4 + $0xc8] sm:$0xff]
  %v1679 = vld [vmem:[#allocation4 + $0xd0] sm:$0xff]
  %v1680 = vld [vmem:[#allocation4 + $0xd8] sm:$0xff]
  %v1681 = vld [vmem:[#allocation4 + $0xe0] sm:$0xff]
  %v1682 = vld [vmem:[#allocation4 + $0xe8] sm:$0xff]
  %v1683 = vld [vmem:[#allocation4 + $0xf0] sm:$0xff]
  %v1684 = vld [vmem:[#allocation4 + $0xf8] sm:$0xff]
  %v1685 = vld [vmem:[#allocation4 + $0x100] sm:$0xff]
  %v1686 = vld [vmem:[#allocation4 + $0x108] sm:$0xff]
  %v1687 = vld [vmem:[#allocation4 + $0x110] sm:$0xff]
  %v1688 = vld [vmem:[#allocation4 + $0x118] sm:$0xff]
  %v1689 = vld [vmem:[#allocation4 + $0x120] sm:$0xff]
  %v1690 = vld [vmem:[#allocation4 + $0x128] sm:$0xff]
  %v1691 = vld [vmem:[#allocation4 + $0x130] sm:$0xff]
  %v1692 = vld [vmem:[#allocation4 + $0x138] sm:$0xff]
  %v1693 = vld [vmem:[#allocation4 + $0x140] sm:$0xff]
  %v1694 = vld [vmem:[#allocation4 + $0x148] sm:$0xff]
  %v1695 = vld [vmem:[#allocation4 + $0x150] sm:$0xff]
  %v1696 = vld [vmem:[#allocation4 + $0x158] sm:$0xff]
  %v1697 = vld [vmem:[#allocation4 + $0x160] sm:$0xff]
  %v1698 = vld [vmem:[#allocation4 + $0x168] sm:$0xff]
  %v1699 = vld [vmem:[#allocation4 + $0x170] sm:$0xff]
  %v1700 = vld [vmem:[#allocation4 + $0x178] sm:$0xff]
  %v1701 = vld [vmem:[#allocation4 + $0x180] sm:$0xff]
  %v1702 = vld [vmem:[#allocation4 + $0x188] sm:$0xff]
  %v1703 = vld [vmem:[#allocation4 + $0x190] sm:$0xff]
  %v1704 = vld [vmem:[#allocation4 + $0x198] sm:$0xff]
  %v1705 = vld [vmem:[#allocation4 + $0x1a0] sm:$0xff]
  %v1706 = vld [vmem:[#allocation4 + $0x1a8] sm:$0xff]
  %v1707 = vld [vmem:[#allocation4 + $0x1b0] sm:$0xff]
  %v1708 = vld [vmem:[#allocation4 + $0x1b8] sm:$0xff]
  %v1709 = vld [vmem:[#allocation4 + $0x1c0] sm:$0xff]
  %v1710 = vld [vmem:[#allocation4 + $0x1c8] sm:$0xff]
  %v1711 = vld [vmem:[#allocation4 + $0x1d0] sm:$0xff]
  %v1712 = vld [vmem:[#allocation4 + $0x1d8] sm:$0xff]
  %v1713 = vld [vmem:[#allocation4 + $0x1e0] sm:$0xff]
  %v1714 = vld [vmem:[#allocation4 + $0x1e8] sm:$0xff]
  %v1715 = vld [vmem:[#allocation4 + $0x1f0] sm:$0xff]
  %v1716 = vld [vmem:[#allocation4 + $0x1f8] sm:$0xff]
  %v1717 = vld [vmem:[%s3] sm:$0xff]
  %v1718 = vld [vmem:[%s3 + $0x8] sm:$0xff]
  %v1719 = vld [vmem:[%s3 + $0x10] sm:$0xff]
  %v1720 = vld [vmem:[%s3 + $0x18] sm:$0xff]
  %v1721 = vld [vmem:[%s3 + $0x20] sm:$0xff]
  %v1722 = vld [vmem:[%s3 + $0x28] sm:$0xff]
  %v1723 = vld [vmem:[%s3 + $0x30] sm:$0xff]
  %v1724 = vld [vmem:[%s3 + $0x38] sm:$0xff]
  %1725 = vmatprep.subr.mxu0 0.0
  %1726 = vmatpush1.msra.mxu0 %v1717
  %1727 = vmatprep.subr.mxu0 0.0
  %1728 = vmatpush1.msra.mxu0 %v1718
  %1729 = vmatprep.subr.mxu0 0.0
  %1730 = vmatpush1.msra.mxu0 %v1719
  %1731 = vmatprep.subr.mxu0 0.0
  %1732 = vmatpush1.msra.mxu0 %v1720
  %1733 = vmatprep.subr.mxu0 0.0
  %1734 = vmatpush1.msra.mxu0 %v1721
  %1735 = vmatprep.subr.mxu0 0.0
  %1736 = vmatpush1.msra.mxu0 %v1722
  %1737 = vmatprep.subr.mxu0 0.0
  %1738 = vmatpush1.msra.mxu0 %v1723
  %1739 = vmatprep.subr.mxu0 0.0
  %1740 = vmatpush1.msra.mxu0 %v1724
  %1741 = vmatprep.subr.mxu0 0.0
  %1742 = vmatpush1.msra.mxu0 0.0
  %1743 = vmatprep.subr.mxu0 0.0
  %1744 = vmatpush1.msra.mxu0 0.0
  %1745 = vmatprep.subr.mxu0 0.0
  %1746 = vmatpush1.msra.mxu0 0.0
  %1747 = vmatprep.subr.mxu0 0.0
  %1748 = vmatpush1.msra.mxu0 0.0
  %1749 = vmatprep.subr.mxu0 0.0
  %1750 = vmatpush1.msra.mxu0 0.0
  %1751 = vmatprep.subr.mxu0 0.0
  %1752 = vmatpush1.msra.mxu0 0.0
  %1753 = vmatprep.subr.mxu0 0.0
  %1754 = vmatpush1.msra.mxu0 0.0
  %1755 = vmatprep.subr.mxu0 0.0
  %1756 = vmatpush1.msra.mxu0 0.0
  %1757 = vmatprep.subr.mxu0 0.0
  %1758 = vmatpush1.msra.mxu0 0.0
  %1759 = vmatprep.subr.mxu0 0.0
  %1760 = vmatpush1.msra.mxu0 0.0
  %1761 = vmatprep.subr.mxu0 0.0
  %1762 = vmatpush1.msra.mxu0 0.0
  %1763 = vmatprep.subr.mxu0 0.0
  %1764 = vmatpush1.msra.mxu0 0.0
  %1765 = vmatprep.subr.mxu0 0.0
  %1766 = vmatpush1.msra.mxu0 0.0
  %1767 = vmatprep.subr.mxu0 0.0
  %1768 = vmatpush1.msra.mxu0 0.0
  %1769 = vmatprep.subr.mxu0 0.0
  %1770 = vmatpush1.msra.mxu0 0.0
  %1771 = vmatprep.subr.mxu0 0.0
  %1772 = vmatpush1.msra.mxu0 0.0
  %1773 = vmatprep.subr.mxu0 0.0
  %1774 = vmatpush1.msra.mxu0 0.0
  %1775 = vmatprep.subr.mxu0 0.0
  %1776 = vmatpush1.msra.mxu0 0.0
  %1777 = vmatprep.subr.mxu0 0.0
  %1778 = vmatpush1.msra.mxu0 0.0
  %1779 = vmatprep.subr.mxu0 0.0
  %1780 = vmatpush1.msra.mxu0 0.0
  %1781 = vmatprep.subr.mxu0 0.0
  %1782 = vmatpush1.msra.mxu0 0.0
  %1783 = vmatprep.subr.mxu0 0.0
  %1784 = vmatpush1.msra.mxu0 0.0
  %1785 = vmatprep.subr.mxu0 0.0
  %1786 = vmatpush1.msra.mxu0 0.0
  %1787 = vmatprep.subr.mxu0 0.0
  %1788 = vmatpush1.msra.mxu0 0.0
  %1789 = vmatprep.mubr.f32.mxu0 0.0
  %1790 = vmatmul.mubr.f32.gmra.mrb[0].mxu0 %v364
  %v1791 = vpop.f32.mrb[0].mxu0
  %v1792 = vadd.f32 0.0, %v1791
  %v1793 = vpop.f32.mrb[0].mxu0
  %1794 = vmatprep.mubr.f32.mxu0 0.0
  %1795 = vmatmul.mubr.f32.gmra.mrb[0].mxu0 %v367
  %v1796 = vpop.f32.mrb[0].mxu0
  %v1797 = vadd.f32 0.0, %v1796
  %v1798 = vpop.f32.mrb[0].mxu0
  %1799 = vmatprep.mubr.f32.mxu0 0.0
  %1800 = vmatmul.mubr.f32.gmra.mrb[0].mxu0 %v370
  %v1801 = vpop.f32.mrb[0].mxu0
  %v1802 = vadd.f32 0.0, %v1801
  %v1803 = vpop.f32.mrb[0].mxu0
  %1804 = vmatprep.mubr.f32.mxu0 0.0
  %1805 = vmatmul.mubr.f32.gmra.mrb[0].mxu0 %v373
  %v1806 = vpop.f32.mrb[0].mxu0
  %v1807 = vadd.f32 0.0, %v1806
  %v1808 = vpop.f32.mrb[0].mxu0
  %1809 = vmatprep.mubr.f32.mxu0 0.0
  %1810 = vmatmul.mubr.f32.gmra.mrb[0].mxu0 %v376
  %v1811 = vpop.f32.mrb[0].mxu0
  %v1812 = vadd.f32 0.0, %v1811
  %v1813 = vpop.f32.mrb[0].mxu0
  %1814 = vmatprep.mubr.f32.mxu0 0.0
  %1815 = vmatmul.mubr.f32.gmra.mrb[0].mxu0 %v379
  %v1816 = vpop.f32.mrb[0].mxu0
  %v1817 = vadd.f32 0.0, %v1816
  %v1818 = vpop.f32.mrb[0].mxu0
  %1819 = vmatprep.mubr.f32.mxu0 0.0
  %1820 = vmatmul.mubr.f32.gmra.mrb[0].mxu0 %v382
  %v1821 = vpop.f32.mrb[0].mxu0
  %v1822 = vadd.f32 0.0, %v1821
  %v1823 = vpop.f32.mrb[0].mxu0
  %1824 = vmatprep.mubr.f32.mxu0 0.0
  %1825 = vmatmul.mubr.f32.gmra.mrb[0].mxu0 %v385
  %v1826 = vpop.f32.mrb[0].mxu0
  %v1827 = vadd.f32 0.0, %v1826
  %v1828 = vpop.f32.mrb[0].mxu0
  %1829 = vmatprep.mubr.f32.mxu0 0.0
  %1830 = vmatmul.mubr.f32.gmra.mrb[0].mxu0 %v388
  %v1831 = vpop.f32.mrb[0].mxu0
  %v1832 = vadd.f32 0.0, %v1831
  %v1833 = vpop.f32.mrb[0].mxu0
  %1834 = vmatprep.mubr.f32.mxu0 0.0
  %1835 = vmatmul.mubr.f32.gmra.mrb[0].mxu0 %v391
  %v1836 = vpop.f32.mrb[0].mxu0
  %v1837 = vadd.f32 0.0, %v1836
  %v1838 = vpop.f32.mrb[0].mxu0
  %1839 = vmatprep.mubr.f32.mxu0 0.0
  %1840 = vmatmul.mubr.f32.gmra.mrb[0].mxu0 %v394
  %v1841 = vpop.f32.mrb[0].mxu0
  %v1842 = vadd.f32 0.0, %v1841
  %v1843 = vpop.f32.mrb[0].mxu0
  %1844 = vmatprep.mubr.f32.mxu0 0.0
  %1845 = vmatmul.mubr.f32.gmra.mrb[0].mxu0 %v397
  %v1846 = vpop.f32.mrb[0].mxu0
  %v1847 = vadd.f32 0.0, %v1846
  %v1848 = vpop.f32.mrb[0].mxu0
  %1849 = vmatprep.mubr.f32.mxu0 0.0
  %1850 = vmatmul.mubr.f32.gmra.mrb[0].mxu0 %v400
  %v1851 = vpop.f32.mrb[0].mxu0
  %v1852 = vadd.f32 0.0, %v1851
  %v1853 = vpop.f32.mrb[0].mxu0
  %1854 = vmatprep.mubr.f32.mxu0 0.0
  %1855 = vmatmul.mubr.f32.gmra.mrb[0].mxu0 %v403
  %v1856 = vpop.f32.mrb[0].mxu0
  %v1857 = vadd.f32 0.0, %v1856
  %v1858 = vpop.f32.mrb[0].mxu0
  %1859 = vmatprep.mubr.f32.mxu0 0.0
  %1860 = vmatmul.mubr.f32.gmra.mrb[0].mxu0 %v406
  %v1861 = vpop.f32.mrb[0].mxu0
  %v1862 = vadd.f32 0.0, %v1861
  %v1863 = vpop.f32.mrb[0].mxu0
  %1864 = vmatprep.mubr.f32.mxu0 0.0
  %1865 = vmatmul.mubr.f32.gmra.mrb[0].mxu0 %v409
  %v1866 = vpop.f32.mrb[0].mxu0
  %v1867 = vadd.f32 0.0, %v1866
  %v1868 = vpop.f32.mrb[0].mxu0
  %1869 = vmatprep.mubr.f32.mxu0 0.0
  %1870 = vmatmul.mubr.f32.gmra.mrb[0].mxu0 %v412
  %v1871 = vpop.f32.mrb[0].mxu0
  %v1872 = vadd.f32 0.0, %v1871
  %v1873 = vpop.f32.mrb[0].mxu0
  %1874 = vmatprep.mubr.f32.mxu0 0.0
  %1875 = vmatmul.mubr.f32.gmra.mrb[0].mxu0 %v415
  %v1876 = vpop.f32.mrb[0].mxu0
  %v1877 = vadd.f32 0.0, %v1876
  %v1878 = vpop.f32.mrb[0].mxu0
  %1879 = vmatprep.mubr.f32.mxu0 0.0
  %1880 = vmatmul.mubr.f32.gmra.mrb[0].mxu0 %v418
  %v1881 = vpop.f32.mrb[0].mxu0
  %v1882 = vadd.f32 0.0, %v1881
  %v1883 = vpop.f32.mrb[0].mxu0
  %1884 = vmatprep.mubr.f32.mxu0 0.0
  %1885 = vmatmul.mubr.f32.gmra.mrb[0].mxu0 %v421
  %v1886 = vpop.f32.mrb[0].mxu0
  %v1887 = vadd.f32 0.0, %v1886
  %v1888 = vpop.f32.mrb[0].mxu0
  %1889 = vmatprep.mubr.f32.mxu0 0.0
  %1890 = vmatmul.mubr.f32.gmra.mrb[0].mxu0 %v424
  %v1891 = vpop.f32.mrb[0].mxu0
  %v1892 = vadd.f32 0.0, %v1891
  %v1893 = vpop.f32.mrb[0].mxu0
  %1894 = vmatprep.mubr.f32.mxu0 0.0
  %1895 = vmatmul.mubr.f32.gmra.mrb[0].mxu0 %v427
  %v1896 = vpop.f32.mrb[0].mxu0
  %v1897 = vadd.f32 0.0, %v1896
  %v1898 = vpop.f32.mrb[0].mxu0
  %1899 = vmatprep.mubr.f32.mxu0 0.0
  %1900 = vmatmul.mubr.f32.gmra.mrb[0].mxu0 %v430
  %v1901 = vpop.f32.mrb[0].mxu0
  %v1902 = vadd.f32 0.0, %v1901
  %v1903 = vpop.f32.mrb[0].mxu0
  %1904 = vmatprep.mubr.f32.mxu0 0.0
  %1905 = vmatmul.mubr.f32.gmra.mrb[0].mxu0 %v433
  %v1906 = vpop.f32.mrb[0].mxu0
  %v1907 = vadd.f32 0.0, %v1906
  %v1908 = vpop.f32.mrb[0].mxu0
  %1909 = vmatprep.mubr.f32.mxu0 0.0
  %1910 = vmatmul.mubr.f32.gmra.mrb[0].mxu0 %v436
  %v1911 = vpop.f32.mrb[0].mxu0
  %v1912 = vadd.f32 0.0, %v1911
  %v1913 = vpop.f32.mrb[0].mxu0
  %1914 = vmatprep.mubr.f32.mxu0 0.0
  %1915 = vmatmul.mubr.f32.gmra.mrb[0].mxu0 %v439
  %v1916 = vpop.f32.mrb[0].mxu0
  %v1917 = vadd.f32 0.0, %v1916
  %v1918 = vpop.f32.mrb[0].mxu0
  %1919 = vmatprep.mubr.f32.mxu0 0.0
  %1920 = vmatmul.mubr.f32.gmra.mrb[0].mxu0 %v442
  %v1921 = vpop.f32.mrb[0].mxu0
  %v1922 = vadd.f32 0.0, %v1921
  %v1923 = vpop.f32.mrb[0].mxu0
  %1924 = vmatprep.mubr.f32.mxu0 0.0
  %1925 = vmatmul.mubr.f32.gmra.mrb[0].mxu0 %v445
  %v1926 = vpop.f32.mrb[0].mxu0
  %v1927 = vadd.f32 0.0, %v1926
  %v1928 = vpop.f32.mrb[0].mxu0
  %1929 = vmatprep.mubr.f32.mxu0 0.0
  %1930 = vmatmul.mubr.f32.gmra.mrb[0].mxu0 %v448
  %v1931 = vpop.f32.mrb[0].mxu0
  %v1932 = vadd.f32 0.0, %v1931
  %v1933 = vpop.f32.mrb[0].mxu0
  %1934 = vmatprep.mubr.f32.mxu0 0.0
  %1935 = vmatmul.mubr.f32.gmra.mrb[0].mxu0 %v451
  %v1936 = vpop.f32.mrb[0].mxu0
  %v1937 = vadd.f32 0.0, %v1936
  %v1938 = vpop.f32.mrb[0].mxu0
  %1939 = vmatprep.mubr.f32.mxu0 0.0
  %1940 = vmatmul.mubr.f32.gmra.mrb[0].mxu0 %v454
  %v1941 = vpop.f32.mrb[0].mxu0
  %v1942 = vadd.f32 0.0, %v1941
  %v1943 = vpop.f32.mrb[0].mxu0
  %1944 = vmatprep.mubr.f32.mxu0 0.0
  %1945 = vmatmul.mubr.f32.gmra.mrb[0].mxu0 %v457
  %v1946 = vpop.f32.mrb[0].mxu0
  %v1947 = vadd.f32 0.0, %v1946
  %v1948 = vpop.f32.mrb[0].mxu0
  %1949 = vmatprep.mubr.f32.mxu0 0.0
  %1950 = vmatmul.mubr.f32.gmra.mrb[0].mxu0 %v460
  %v1951 = vpop.f32.mrb[0].mxu0
  %v1952 = vadd.f32 0.0, %v1951
  %v1953 = vpop.f32.mrb[0].mxu0
  %1954 = vmatprep.mubr.f32.mxu0 0.0
  %1955 = vmatmul.mubr.f32.gmra.mrb[0].mxu0 %v463
  %v1956 = vpop.f32.mrb[0].mxu0
  %v1957 = vadd.f32 0.0, %v1956
  %v1958 = vpop.f32.mrb[0].mxu0
  %1959 = vmatprep.mubr.f32.mxu0 0.0
  %1960 = vmatmul.mubr.f32.gmra.mrb[0].mxu0 %v466
  %v1961 = vpop.f32.mrb[0].mxu0
  %v1962 = vadd.f32 0.0, %v1961
  %v1963 = vpop.f32.mrb[0].mxu0
  %1964 = vmatprep.mubr.f32.mxu0 0.0
  %1965 = vmatmul.mubr.f32.gmra.mrb[0].mxu0 %v469
  %v1966 = vpop.f32.mrb[0].mxu0
  %v1967 = vadd.f32 0.0, %v1966
  %v1968 = vpop.f32.mrb[0].mxu0
  %1969 = vmatprep.mubr.f32.mxu0 0.0
  %1970 = vmatmul.mubr.f32.gmra.mrb[0].mxu0 %v472
  %v1971 = vpop.f32.mrb[0].mxu0
  %v1972 = vadd.f32 0.0, %v1971
  %v1973 = vpop.f32.mrb[0].mxu0
  %1974 = vmatprep.mubr.f32.mxu0 0.0
  %1975 = vmatmul.mubr.f32.gmra.mrb[0].mxu0 %v475
  %v1976 = vpop.f32.mrb[0].mxu0
  %v1977 = vadd.f32 0.0, %v1976
  %v1978 = vpop.f32.mrb[0].mxu0
  %1979 = vmatprep.mubr.f32.mxu0 0.0
  %1980 = vmatmul.mubr.f32.gmra.mrb[0].mxu0 %v478
  %v1981 = vpop.f32.mrb[0].mxu0
  %v1982 = vadd.f32 0.0, %v1981
  %v1983 = vpop.f32.mrb[0].mxu0
  %1984 = vmatprep.mubr.f32.mxu0 0.0
  %1985 = vmatmul.mubr.f32.gmra.mrb[0].mxu0 %v481
  %v1986 = vpop.f32.mrb[0].mxu0
  %v1987 = vadd.f32 0.0, %v1986
  %v1988 = vpop.f32.mrb[0].mxu0
  %1989 = vmatprep.mubr.f32.mxu0 0.0
  %1990 = vmatmul.mubr.f32.gmra.mrb[0].mxu0 %v484
  %v1991 = vpop.f32.mrb[0].mxu0
  %v1992 = vadd.f32 0.0, %v1991
  %v1993 = vpop.f32.mrb[0].mxu0
  %1994 = vmatprep.mubr.f32.mxu0 0.0
  %1995 = vmatmul.mubr.f32.gmra.mrb[0].mxu0 %v487
  %v1996 = vpop.f32.mrb[0].mxu0
  %v1997 = vadd.f32 0.0, %v1996
  %v1998 = vpop.f32.mrb[0].mxu0
  %1999 = vmatprep.mubr.f32.mxu0 0.0
  %2000 = vmatmul.mubr.f32.gmra.mrb[0].mxu0 %v490
  %v2001 = vpop.f32.mrb[0].mxu0
  %v2002 = vadd.f32 0.0, %v2001
  %v2003 = vpop.f32.mrb[0].mxu0
  %2004 = vmatprep.mubr.f32.mxu0 0.0
  %2005 = vmatmul.mubr.f32.gmra.mrb[0].mxu0 %v493
  %v2006 = vpop.f32.mrb[0].mxu0
  %v2007 = vadd.f32 0.0, %v2006
  %v2008 = vpop.f32.mrb[0].mxu0
  %2009 = vmatprep.mubr.f32.mxu0 0.0
  %2010 = vmatmul.mubr.f32.gmra.mrb[0].mxu0 %v496
  %v2011 = vpop.f32.mrb[0].mxu0
  %v2012 = vadd.f32 0.0, %v2011
  %v2013 = vpop.f32.mrb[0].mxu0
  %2014 = vmatprep.mubr.f32.mxu0 0.0
  %2015 = vmatmul.mubr.f32.gmra.mrb[0].mxu0 %v499
  %v2016 = vpop.f32.mrb[0].mxu0
  %v2017 = vadd.f32 0.0, %v2016
  %v2018 = vpop.f32.mrb[0].mxu0
  %2019 = vmatprep.mubr.f32.mxu0 0.0
  %2020 = vmatmul.mubr.f32.gmra.mrb[0].mxu0 %v502
  %v2021 = vpop.f32.mrb[0].mxu0
  %v2022 = vadd.f32 0.0, %v2021
  %v2023 = vpop.f32.mrb[0].mxu0
  %2024 = vmatprep.mubr.f32.mxu0 0.0
  %2025 = vmatmul.mubr.f32.gmra.mrb[0].mxu0 %v505
  %v2026 = vpop.f32.mrb[0].mxu0
  %v2027 = vadd.f32 0.0, %v2026
  %v2028 = vpop.f32.mrb[0].mxu0
  %2029 = vmatprep.mubr.f32.mxu0 0.0
  %2030 = vmatmul.mubr.f32.gmra.mrb[0].mxu0 %v508
  %v2031 = vpop.f32.mrb[0].mxu0
  %v2032 = vadd.f32 0.0, %v2031
  %v2033 = vpop.f32.mrb[0].mxu0
  %2034 = vmatprep.mubr.f32.mxu0 0.0
  %2035 = vmatmul.mubr.f32.gmra.mrb[0].mxu0 %v511
  %v2036 = vpop.f32.mrb[0].mxu0
  %v2037 = vadd.f32 0.0, %v2036
  %v2038 = vpop.f32.mrb[0].mxu0
  %2039 = vmatprep.mubr.f32.mxu0 0.0
  %2040 = vmatmul.mubr.f32.gmra.mrb[0].mxu0 %v514
  %v2041 = vpop.f32.mrb[0].mxu0
  %v2042 = vadd.f32 0.0, %v2041
  %v2043 = vpop.f32.mrb[0].mxu0
  %2044 = vmatprep.mubr.f32.mxu0 0.0
  %2045 = vmatmul.mubr.f32.gmra.mrb[0].mxu0 %v517
  %v2046 = vpop.f32.mrb[0].mxu0
  %v2047 = vadd.f32 0.0, %v2046
  %v2048 = vpop.f32.mrb[0].mxu0
  %2049 = vmatprep.mubr.f32.mxu0 0.0
  %2050 = vmatmul.mubr.f32.gmra.mrb[0].mxu0 %v520
  %v2051 = vpop.f32.mrb[0].mxu0
  %v2052 = vadd.f32 0.0, %v2051
  %v2053 = vpop.f32.mrb[0].mxu0
  %2054 = vmatprep.mubr.f32.mxu0 0.0
  %2055 = vmatmul.mubr.f32.gmra.mrb[0].mxu0 %v523
  %v2056 = vpop.f32.mrb[0].mxu0
  %v2057 = vadd.f32 0.0, %v2056
  %v2058 = vpop.f32.mrb[0].mxu0
  %2059 = vmatprep.mubr.f32.mxu0 0.0
  %2060 = vmatmul.mubr.f32.gmra.mrb[0].mxu0 %v526
  %v2061 = vpop.f32.mrb[0].mxu0
  %v2062 = vadd.f32 0.0, %v2061
  %v2063 = vpop.f32.mrb[0].mxu0
  %2064 = vmatprep.mubr.f32.mxu0 0.0
  %2065 = vmatmul.mubr.f32.gmra.mrb[0].mxu0 %v529
  %v2066 = vpop.f32.mrb[0].mxu0
  %v2067 = vadd.f32 0.0, %v2066
  %v2068 = vpop.f32.mrb[0].mxu0
  %2069 = vmatprep.mubr.f32.mxu0 0.0
  %2070 = vmatmul.mubr.f32.gmra.mrb[0].mxu0 %v532
  %v2071 = vpop.f32.mrb[0].mxu0
  %v2072 = vadd.f32 0.0, %v2071
  %v2073 = vpop.f32.mrb[0].mxu0
  %2074 = vmatprep.mubr.f32.mxu0 0.0
  %2075 = vmatmul.mubr.f32.gmra.mrb[0].mxu0 %v535
  %v2076 = vpop.f32.mrb[0].mxu0
  %v2077 = vadd.f32 0.0, %v2076
  %v2078 = vpop.f32.mrb[0].mxu0
  %2079 = vmatprep.mubr.f32.mxu0 0.0
  %2080 = vmatmul.mubr.f32.gmra.mrb[0].mxu0 %v538
  %v2081 = vpop.f32.mrb[0].mxu0
  %v2082 = vadd.f32 0.0, %v2081
  %v2083 = vpop.f32.mrb[0].mxu0
  %2084 = vmatprep.mubr.f32.mxu0 0.0
  %2085 = vmatmul.mubr.f32.gmra.mrb[0].mxu0 %v541
  %v2086 = vpop.f32.mrb[0].mxu0
  %v2087 = vadd.f32 0.0, %v2086
  %v2088 = vpop.f32.mrb[0].mxu0
  %2089 = vmatprep.mubr.f32.mxu0 0.0
  %2090 = vmatmul.mubr.f32.gmra.mrb[0].mxu0 %v544
  %v2091 = vpop.f32.mrb[0].mxu0
  %v2092 = vadd.f32 0.0, %v2091
  %v2093 = vpop.f32.mrb[0].mxu0
  %2094 = vmatprep.mubr.f32.mxu0 0.0
  %2095 = vmatmul.mubr.f32.gmra.mrb[0].mxu0 %v547
  %v2096 = vpop.f32.mrb[0].mxu0
  %v2097 = vadd.f32 0.0, %v2096
  %v2098 = vpop.f32.mrb[0].mxu0
  %2099 = vmatprep.mubr.f32.mxu0 0.0
  %2100 = vmatmul.mubr.f32.gmra.mrb[0].mxu0 %v550
  %v2101 = vpop.f32.mrb[0].mxu0
  %v2102 = vadd.f32 0.0, %v2101
  %v2103 = vpop.f32.mrb[0].mxu0
  %2104 = vmatprep.mubr.f32.mxu0 0.0
  %2105 = vmatmul.mubr.f32.gmra.mrb[0].mxu0 %v553
  %v2106 = vpop.f32.mrb[0].mxu0
  %v2107 = vadd.f32 0.0, %v2106
  %v2108 = vpop.f32.mrb[0].mxu0
  %2109 = vdwg.mxu0
  %v2110 = vadd.f32 %v1653, %v1792
  %v2111 = vadd.f32 %v1654, %v1797
  %v2112 = vadd.f32 %v1655, %v1802
  %v2113 = vadd.f32 %v1656, %v1807
  %v2114 = vadd.f32 %v1657, %v1812
  %v2115 = vadd.f32 %v1658, %v1817
  %v2116 = vadd.f32 %v1659, %v1822
  %v2117 = vadd.f32 %v1660, %v1827
  %v2118 = vadd.f32 %v1661, %v1832
  %v2119 = vadd.f32 %v1662, %v1837
  %v2120 = vadd.f32 %v1663, %v1842
  %v2121 = vadd.f32 %v1664, %v1847
  %v2122 = vadd.f32 %v1665, %v1852
  %v2123 = vadd.f32 %v1666, %v1857
  %v2124 = vadd.f32 %v1667, %v1862
  %v2125 = vadd.f32 %v1668, %v1867
  %v2126 = vadd.f32 %v1669, %v1872
  %v2127 = vadd.f32 %v1670, %v1877
  %v2128 = vadd.f32 %v1671, %v1882
  %v2129 = vadd.f32 %v1672, %v1887
  %v2130 = vadd.f32 %v1673, %v1892
  %v2131 = vadd.f32 %v1674, %v1897
  %v2132 = vadd.f32 %v1675, %v1902
  %v2133 = vadd.f32 %v1676, %v1907
  %v2134 = vadd.f32 %v1677, %v1912
  %v2135 = vadd.f32 %v1678, %v1917
  %v2136 = vadd.f32 %v1679, %v1922
  %v2137 = vadd.f32 %v1680, %v1927
  %v2138 = vadd.f32 %v1681, %v1932
  %v2139 = vadd.f32 %v1682, %v1937
  %v2140 = vadd.f32 %v1683, %v1942
  %v2141 = vadd.f32 %v1684, %v1947
  %v2142 = vadd.f32 %v1685, %v1952
  %v2143 = vadd.f32 %v1686, %v1957
  %v2144 = vadd.f32 %v1687, %v1962
  %v2145 = vadd.f32 %v1688, %v1967
  %v2146 = vadd.f32 %v1689, %v1972
  %v2147 = vadd.f32 %v1690, %v1977
  %v2148 = vadd.f32 %v1691, %v1982
  %v2149 = vadd.f32 %v1692, %v1987
  %v2150 = vadd.f32 %v1693, %v1992
  %v2151 = vadd.f32 %v1694, %v1997
  %v2152 = vadd.f32 %v1695, %v2002
  %v2153 = vadd.f32 %v1696, %v2007
  %v2154 = vadd.f32 %v1697, %v2012
  %v2155 = vadd.f32 %v1698, %v2017
  %v2156 = vadd.f32 %v1699, %v2022
  %v2157 = vadd.f32 %v1700, %v2027
  %v2158 = vadd.f32 %v1701, %v2032
  %v2159 = vadd.f32 %v1702, %v2037
  %v2160 = vadd.f32 %v1703, %v2042
  %v2161 = vadd.f32 %v1704, %v2047
  %v2162 = vadd.f32 %v1705, %v2052
  %v2163 = vadd.f32 %v1706, %v2057
  %v2164 = vadd.f32 %v1707, %v2062
  %v2165 = vadd.f32 %v1708, %v2067
  %v2166 = vadd.f32 %v1709, %v2072
  %v2167 = vadd.f32 %v1710, %v2077
  %v2168 = vadd.f32 %v1711, %v2082
  %v2169 = vadd.f32 %v1712, %v2087
  %v2170 = vadd.f32 %v1713, %v2092
  %v2171 = vadd.f32 %v1714, %v2097
  %v2172 = vadd.f32 %v1715, %v2102
  %v2173 = vadd.f32 %v1716, %v2107
  %2174 = vst.msk [vmem:[#allocation4] sm:$0xff] %vm362, %v2110
  %2175 = vst.msk [vmem:[#allocation4 + $0x8] sm:$0xff] %vm362, %v2111
  %2176 = vst.msk [vmem:[#allocation4 + $0x10] sm:$0xff] %vm362, %v2112
  %2177 = vst.msk [vmem:[#allocation4 + $0x18] sm:$0xff] %vm362, %v2113
  %2178 = vst.msk [vmem:[#allocation4 + $0x20] sm:$0xff] %vm362, %v2114
  %2179 = vst.msk [vmem:[#allocation4 + $0x28] sm:$0xff] %vm362, %v2115
  %2180 = vst.msk [vmem:[#allocation4 + $0x30] sm:$0xff] %vm362, %v2116
  %2181 = vst.msk [vmem:[#allocation4 + $0x38] sm:$0xff] %vm362, %v2117
  %2182 = vst.msk [vmem:[#allocation4 + $0x40] sm:$0xff] %vm362, %v2118
  %2183 = vst.msk [vmem:[#allocation4 + $0x48] sm:$0xff] %vm362, %v2119
  %2184 = vst.msk [vmem:[#allocation4 + $0x50] sm:$0xff] %vm362, %v2120
  %2185 = vst.msk [vmem:[#allocation4 + $0x58] sm:$0xff] %vm362, %v2121
  %2186 = vst.msk [vmem:[#allocation4 + $0x60] sm:$0xff] %vm362, %v2122
  %2187 = vst.msk [vmem:[#allocation4 + $0x68] sm:$0xff] %vm362, %v2123
  %2188 = vst.msk [vmem:[#allocation4 + $0x70] sm:$0xff] %vm362, %v2124
  %2189 = vst.msk [vmem:[#allocation4 + $0x78] sm:$0xff] %vm362, %v2125
  %2190 = vst.msk [vmem:[#allocation4 + $0x80] sm:$0xff] %vm362, %v2126
  %2191 = vst.msk [vmem:[#allocation4 + $0x88] sm:$0xff] %vm362, %v2127
  %2192 = vst.msk [vmem:[#allocation4 + $0x90] sm:$0xff] %vm362, %v2128
  %2193 = vst.msk [vmem:[#allocation4 + $0x98] sm:$0xff] %vm362, %v2129
  %2194 = vst.msk [vmem:[#allocation4 + $0xa0] sm:$0xff] %vm362, %v2130
  %2195 = vst.msk [vmem:[#allocation4 + $0xa8] sm:$0xff] %vm362, %v2131
  %2196 = vst.msk [vmem:[#allocation4 + $0xb0] sm:$0xff] %vm362, %v2132
  %2197 = vst.msk [vmem:[#allocation4 + $0xb8] sm:$0xff] %vm362, %v2133
  %2198 = vst.msk [vmem:[#allocation4 + $0xc0] sm:$0xff] %vm362, %v2134
  %2199 = vst.msk [vmem:[#allocation4 + $0xc8] sm:$0xff] %vm362, %v2135
  %2200 = vst.msk [vmem:[#allocation4 + $0xd0] sm:$0xff] %vm362, %v2136
  %2201 = vst.msk [vmem:[#allocation4 + $0xd8] sm:$0xff] %vm362, %v2137
  %2202 = vst.msk [vmem:[#allocation4 + $0xe0] sm:$0xff] %vm362, %v2138
  %2203 = vst.msk [vmem:[#allocation4 + $0xe8] sm:$0xff] %vm362, %v2139
  %2204 = vst.msk [vmem:[#allocation4 + $0xf0] sm:$0xff] %vm362, %v2140
  %2205 = vst.msk [vmem:[#allocation4 + $0xf8] sm:$0xff] %vm362, %v2141
  %2206 = vst.msk [vmem:[#allocation4 + $0x100] sm:$0xff] %vm362, %v2142
  %2207 = vst.msk [vmem:[#allocation4 + $0x108] sm:$0xff] %vm362, %v2143
  %2208 = vst.msk [vmem:[#allocation4 + $0x110] sm:$0xff] %vm362, %v2144
  %2209 = vst.msk [vmem:[#allocation4 + $0x118] sm:$0xff] %vm362, %v2145
  %2210 = vst.msk [vmem:[#allocation4 + $0x120] sm:$0xff] %vm362, %v2146
  %2211 = vst.msk [vmem:[#allocation4 + $0x128] sm:$0xff] %vm362, %v2147
  %2212 = vst.msk [vmem:[#allocation4 + $0x130] sm:$0xff] %vm362, %v2148
  %2213 = vst.msk [vmem:[#allocation4 + $0x138] sm:$0xff] %vm362, %v2149
  %2214 = vst.msk [vmem:[#allocation4 + $0x140] sm:$0xff] %vm362, %v2150
  %2215 = vst.msk [vmem:[#allocation4 + $0x148] sm:$0xff] %vm362, %v2151
  %2216 = vst.msk [vmem:[#allocation4 + $0x150] sm:$0xff] %vm362, %v2152
  %2217 = vst.msk [vmem:[#allocation4 + $0x158] sm:$0xff] %vm362, %v2153
  %2218 = vst.msk [vmem:[#allocation4 + $0x160] sm:$0xff] %vm362, %v2154
  %2219 = vst.msk [vmem:[#allocation4 + $0x168] sm:$0xff] %vm362, %v2155
  %2220 = vst.msk [vmem:[#allocation4 + $0x170] sm:$0xff] %vm362, %v2156
  %2221 = vst.msk [vmem:[#allocation4 + $0x178] sm:$0xff] %vm362, %v2157
  %2222 = vst.msk [vmem:[#allocation4 + $0x180] sm:$0xff] %vm362, %v2158
  %2223 = vst.msk [vmem:[#allocation4 + $0x188] sm:$0xff] %vm362, %v2159
  %2224 = vst.msk [vmem:[#allocation4 + $0x190] sm:$0xff] %vm362, %v2160
  %2225 = vst.msk [vmem:[#allocation4 + $0x198] sm:$0xff] %vm362, %v2161
  %2226 = vst.msk [vmem:[#allocation4 + $0x1a0] sm:$0xff] %vm362, %v2162
  %2227 = vst.msk [vmem:[#allocation4 + $0x1a8] sm:$0xff] %vm362, %v2163
  %2228 = vst.msk [vmem:[#allocation4 + $0x1b0] sm:$0xff] %vm362, %v2164
  %2229 = vst.msk [vmem:[#allocation4 + $0x1b8] sm:$0xff] %vm362, %v2165
  %2230 = vst.msk [vmem:[#allocation4 + $0x1c0] sm:$0xff] %vm362, %v2166
  %2231 = vst.msk [vmem:[#allocation4 + $0x1c8] sm:$0xff] %vm362, %v2167
  %2232 = vst.msk [vmem:[#allocation4 + $0x1d0] sm:$0xff] %vm362, %v2168
  %2233 = vst.msk [vmem:[#allocation4 + $0x1d8] sm:$0xff] %vm362, %v2169
  %2234 = vst.msk [vmem:[#allocation4 + $0x1e0] sm:$0xff] %vm362, %v2170
  %2235 = vst.msk [vmem:[#allocation4 + $0x1e8] sm:$0xff] %vm362, %v2171
  %2236 = vst.msk [vmem:[#allocation4 + $0x1f0] sm:$0xff] %vm362, %v2172
  %2237 = vst.msk [vmem:[#allocation4 + $0x1f8] sm:$0xff] %vm362, %v2173
  // Predicated region
  $region34: #{tpu_custom_call.1} parent=0 // pred_check
    %p2238 = pneg %p29
  $region35: #{tpu_custom_call.1} parent=0 // pred_check_branch
    %2240 = sbr.rel (%p2238) target = $region37
  $region36: #{tpu_custom_call.1} parent=0 // pred_region
    %v2241 = vld [vmem:[#allocation2] sm:$0xff]
    %v2242 = vld [vmem:[#allocation2 + $0x8] sm:$0xff]
    %v2243 = vld [vmem:[#allocation2 + $0x10] sm:$0xff]
    %v2244 = vld [vmem:[#allocation2 + $0x18] sm:$0xff]
    %v2245 = vld [vmem:[#allocation2 + $0x20] sm:$0xff]
    %v2246 = vld [vmem:[#allocation2 + $0x28] sm:$0xff]
    %v2247 = vld [vmem:[#allocation2 + $0x30] sm:$0xff]
    %v2248 = vld [vmem:[#allocation2 + $0x38] sm:$0xff]
    %v2249 = vld [vmem:[#allocation2 + $0x40] sm:$0xff]
    %v2250 = vld [vmem:[#allocation2 + $0x48] sm:$0xff]
    %v2251 = vld [vmem:[#allocation2 + $0x50] sm:$0xff]
    %v2252 = vld [vmem:[#allocation2 + $0x58] sm:$0xff]
    %v2253 = vld [vmem:[#allocation2 + $0x60] sm:$0xff]
    %v2254 = vld [vmem:[#allocation2 + $0x68] sm:$0xff]
    %v2255 = vld [vmem:[#allocation2 + $0x70] sm:$0xff]
    %v2256 = vld [vmem:[#allocation2 + $0x78] sm:$0xff]
    %v2257 = vld [vmem:[#allocation2 + $0x80] sm:$0xff]
    %v2258 = vld [vmem:[#allocation2 + $0x88] sm:$0xff]
    %v2259 = vld [vmem:[#allocation2 + $0x90] sm:$0xff]
    %v2260 = vld [vmem:[#allocation2 + $0x98] sm:$0xff]
    %v2261 = vld [vmem:[#allocation2 + $0xa0] sm:$0xff]
    %v2262 = vld [vmem:[#allocation2 + $0xa8] sm:$0xff]
    %v2263 = vld [vmem:[#allocation2 + $0xb0] sm:$0xff]
    %v2264 = vld [vmem:[#allocation2 + $0xb8] sm:$0xff]
    %v2265 = vld [vmem:[#allocation2 + $0xc0] sm:$0xff]
    %v2266 = vld [vmem:[#allocation2 + $0xc8] sm:$0xff]
    %v2267 = vld [vmem:[#allocation2 + $0xd0] sm:$0xff]
    %v2268 = vld [vmem:[#allocation2 + $0xd8] sm:$0xff]
    %v2269 = vld [vmem:[#allocation2 + $0xe0] sm:$0xff]
    %v2270 = vld [vmem:[#allocation2 + $0xe8] sm:$0xff]
    %v2271 = vld [vmem:[#allocation2 + $0xf0] sm:$0xff]
    %v2272 = vld [vmem:[#allocation2 + $0xf8] sm:$0xff]
    %v2273 = vld [vmem:[#allocation2 + $0x100] sm:$0xff]
    %v2274 = vld [vmem:[#allocation2 + $0x108] sm:$0xff]
    %v2275 = vld [vmem:[#allocation2 + $0x110] sm:$0xff]
    %v2276 = vld [vmem:[#allocation2 + $0x118] sm:$0xff]
    %v2277 = vld [vmem:[#allocation2 + $0x120] sm:$0xff]
    %v2278 = vld [vmem:[#allocation2 + $0x128] sm:$0xff]
    %v2279 = vld [vmem:[#allocation2 + $0x130] sm:$0xff]
    %v2280 = vld [vmem:[#allocation2 + $0x138] sm:$0xff]
    %v2281 = vld [vmem:[#allocation2 + $0x140] sm:$0xff]
    %v2282 = vld [vmem:[#allocation2 + $0x148] sm:$0xff]
    %v2283 = vld [vmem:[#allocation2 + $0x150] sm:$0xff]
    %v2284 = vld [vmem:[#allocation2 + $0x158] sm:$0xff]
    %v2285 = vld [vmem:[#allocation2 + $0x160] sm:$0xff]
    %v2286 = vld [vmem:[#allocation2 + $0x168] sm:$0xff]
    %v2287 = vld [vmem:[#allocation2 + $0x170] sm:$0xff]
    %v2288 = vld [vmem:[#allocation2 + $0x178] sm:$0xff]
    %v2289 = vld [vmem:[#allocation2 + $0x180] sm:$0xff]
    %v2290 = vld [vmem:[#allocation2 + $0x188] sm:$0xff]
    %v2291 = vld [vmem:[#allocation2 + $0x190] sm:$0xff]
    %v2292 = vld [vmem:[#allocation2 + $0x198] sm:$0xff]
    %v2293 = vld [vmem:[#allocation2 + $0x1a0] sm:$0xff]
    %v2294 = vld [vmem:[#allocation2 + $0x1a8] sm:$0xff]
    %v2295 = vld [vmem:[#allocation2 + $0x1b0] sm:$0xff]
    %v2296 = vld [vmem:[#allocation2 + $0x1b8] sm:$0xff]
    %v2297 = vld [vmem:[#allocation2 + $0x1c0] sm:$0xff]
    %v2298 = vld [vmem:[#allocation2 + $0x1c8] sm:$0xff]
    %v2299 = vld [vmem:[#allocation2 + $0x1d0] sm:$0xff]
    %v2300 = vld [vmem:[#allocation2 + $0x1d8] sm:$0xff]
    %v2301 = vld [vmem:[#allocation2 + $0x1e0] sm:$0xff]
    %v2302 = vld [vmem:[#allocation2 + $0x1e8] sm:$0xff]
    %v2303 = vld [vmem:[#allocation2 + $0x1f0] sm:$0xff]
    %v2304 = vld [vmem:[#allocation2 + $0x1f8] sm:$0xff]
    %v2305 = vld [vmem:[%s4] sm:$0x1]
    %v2307 = vlaneseq
    %v2308 = vshrl.u32 %v2307, 7
    %v2309 = vsub.s32 0, %v2308
    %v2310 = vrot.slane %v2305, %v2309
    %v2312 = vadd.f32 %v2241, %v2310
    %v2313 = vadd.f32 %v2242, %v2310
    %v2314 = vadd.f32 %v2243, %v2310
    %v2315 = vadd.f32 %v2244, %v2310
    %v2316 = vadd.f32 %v2245, %v2310
    %v2317 = vadd.f32 %v2246, %v2310
    %v2318 = vadd.f32 %v2247, %v2310
    %v2319 = vadd.f32 %v2248, %v2310
    %v2320 = vadd.f32 %v2249, %v2310
    %v2321 = vadd.f32 %v2250, %v2310
    %v2322 = vadd.f32 %v2251, %v2310
    %v2323 = vadd.f32 %v2252, %v2310
    %v2324 = vadd.f32 %v2253, %v2310
    %v2325 = vadd.f32 %v2254, %v2310
    %v2326 = vadd.f32 %v2255, %v2310
    %v2327 = vadd.f32 %v2256, %v2310
    %v2328 = vadd.f32 %v2257, %v2310
    %v2329 = vadd.f32 %v2258, %v2310
    %v2330 = vadd.f32 %v2259, %v2310
    %v2331 = vadd.f32 %v2260, %v2310
    %v2332 = vadd.f32 %v2261, %v2310
    %v2333 = vadd.f32 %v2262, %v2310
    %v2334 = vadd.f32 %v2263, %v2310
    %v2335 = vadd.f32 %v2264, %v2310
    %v2336 = vadd.f32 %v2265, %v2310
    %v2337 = vadd.f32 %v2266, %v2310
    %v2338 = vadd.f32 %v2267, %v2310
    %v2339 = vadd.f32 %v2268, %v2310
    %v2340 = vadd.f32 %v2269, %v2310
    %v2341 = vadd.f32 %v2270, %v2310
    %v2342 = vadd.f32 %v2271, %v2310
    %v2343 = vadd.f32 %v2272, %v2310
    %v2344 = vadd.f32 %v2273, %v2310
    %v2345 = vadd.f32 %v2274, %v2310
    %v2346 = vadd.f32 %v2275, %v2310
    %v2347 = vadd.f32 %v2276, %v2310
    %v2348 = vadd.f32 %v2277, %v2310
    %v2349 = vadd.f32 %v2278, %v2310
    %v2350 = vadd.f32 %v2279, %v2310
    %v2351 = vadd.f32 %v2280, %v2310
    %v2352 = vadd.f32 %v2281, %v2310
    %v2353 = vadd.f32 %v2282, %v2310
    %v2354 = vadd.f32 %v2283, %v2310
    %v2355 = vadd.f32 %v2284, %v2310
    %v2356 = vadd.f32 %v2285, %v2310
    %v2357 = vadd.f32 %v2286, %v2310
    %v2358 = vadd.f32 %v2287, %v2310
    %v2359 = vadd.f32 %v2288, %v2310
    %v2360 = vadd.f32 %v2289, %v2310
    %v2361 = vadd.f32 %v2290, %v2310
    %v2362 = vadd.f32 %v2291, %v2310
    %v2363 = vadd.f32 %v2292, %v2310
    %v2364 = vadd.f32 %v2293, %v2310
    %v2365 = vadd.f32 %v2294, %v2310
    %v2366 = vadd.f32 %v2295, %v2310
    %v2367 = vadd.f32 %v2296, %v2310
    %v2368 = vadd.f32 %v2297, %v2310
    %v2369 = vadd.f32 %v2298, %v2310
    %v2370 = vadd.f32 %v2299, %v2310
    %v2371 = vadd.f32 %v2300, %v2310
    %v2372 = vadd.f32 %v2301, %v2310
    %v2373 = vadd.f32 %v2302, %v2310
    %v2374 = vadd.f32 %v2303, %v2310
    %v2375 = vadd.f32 %v2304, %v2310
    %2376 = vst.msk [vmem:[%s7] sm:$0xff] %vm362, %v2312
    %2377 = vst.msk [vmem:[%s7 + $0x8] sm:$0xff] %vm362, %v2313
    %2378 = vst.msk [vmem:[%s7 + $0x10] sm:$0xff] %vm362, %v2314
    %2379 = vst.msk [vmem:[%s7 + $0x18] sm:$0xff] %vm362, %v2315
    %2380 = vst.msk [vmem:[%s7 + $0x20] sm:$0xff] %vm362, %v2316
    %2381 = vst.msk [vmem:[%s7 + $0x28] sm:$0xff] %vm362, %v2317
    %2382 = vst.msk [vmem:[%s7 + $0x30] sm:$0xff] %vm362, %v2318
    %2383 = vst.msk [vmem:[%s7 + $0x38] sm:$0xff] %vm362, %v2319
    %2384 = vst.msk [vmem:[%s7 + $0x40] sm:$0xff] %vm362, %v2320
    %2385 = vst.msk [vmem:[%s7 + $0x48] sm:$0xff] %vm362, %v2321
    %2386 = vst.msk [vmem:[%s7 + $0x50] sm:$0xff] %vm362, %v2322
    %2387 = vst.msk [vmem:[%s7 + $0x58] sm:$0xff] %vm362, %v2323
    %2388 = vst.msk [vmem:[%s7 + $0x60] sm:$0xff] %vm362, %v2324
    %2389 = vst.msk [vmem:[%s7 + $0x68] sm:$0xff] %vm362, %v2325
    %2390 = vst.msk [vmem:[%s7 + $0x70] sm:$0xff] %vm362, %v2326
    %2391 = vst.msk [vmem:[%s7 + $0x78] sm:$0xff] %vm362, %v2327
    %2392 = vst.msk [vmem:[%s7 + $0x80] sm:$0xff] %vm362, %v2328
    %2393 = vst.msk [vmem:[%s7 + $0x88] sm:$0xff] %vm362, %v2329
    %2394 = vst.msk [vmem:[%s7 + $0x90] sm:$0xff] %vm362, %v2330
    %2395 = vst.msk [vmem:[%s7 + $0x98] sm:$0xff] %vm362, %v2331
    %2396 = vst.msk [vmem:[%s7 + $0xa0] sm:$0xff] %vm362, %v2332
    %2397 = vst.msk [vmem:[%s7 + $0xa8] sm:$0xff] %vm362, %v2333
    %2398 = vst.msk [vmem:[%s7 + $0xb0] sm:$0xff] %vm362, %v2334
    %2399 = vst.msk [vmem:[%s7 + $0xb8] sm:$0xff] %vm362, %v2335
    %2400 = vst.msk [vmem:[%s7 + $0xc0] sm:$0xff] %vm362, %v2336
    %2401 = vst.msk [vmem:[%s7 + $0xc8] sm:$0xff] %vm362, %v2337
    %2402 = vst.msk [vmem:[%s7 + $0xd0] sm:$0xff] %vm362, %v2338
    %2403 = vst.msk [vmem:[%s7 + $0xd8] sm:$0xff] %vm362, %v2339
    %2404 = vst.msk [vmem:[%s7 + $0xe0] sm:$0xff] %vm362, %v2340
    %2405 = vst.msk [vmem:[%s7 + $0xe8] sm:$0xff] %vm362, %v2341
    %2406 = vst.msk [vmem:[%s7 + $0xf0] sm:$0xff] %vm362, %v2342
    %2407 = vst.msk [vmem:[%s7 + $0xf8] sm:$0xff] %vm362, %v2343
    %2408 = vst.msk [vmem:[%s7 + $0x100] sm:$0xff] %vm362, %v2344
    %2409 = vst.msk [vmem:[%s7 + $0x108] sm:$0xff] %vm362, %v2345
    %2410 = vst.msk [vmem:[%s7 + $0x110] sm:$0xff] %vm362, %v2346
    %2411 = vst.msk [vmem:[%s7 + $0x118] sm:$0xff] %vm362, %v2347
    %2412 = vst.msk [vmem:[%s7 + $0x120] sm:$0xff] %vm362, %v2348
    %2413 = vst.msk [vmem:[%s7 + $0x128] sm:$0xff] %vm362, %v2349
    %2414 = vst.msk [vmem:[%s7 + $0x130] sm:$0xff] %vm362, %v2350
    %2415 = vst.msk [vmem:[%s7 + $0x138] sm:$0xff] %vm362, %v2351
    %2416 = vst.msk [vmem:[%s7 + $0x140] sm:$0xff] %vm362, %v2352
    %2417 = vst.msk [vmem:[%s7 + $0x148] sm:$0xff] %vm362, %v2353
    %2418 = vst.msk [vmem:[%s7 + $0x150] sm:$0xff] %vm362, %v2354
    %2419 = vst.msk [vmem:[%s7 + $0x158] sm:$0xff] %vm362, %v2355
    %2420 = vst.msk [vmem:[%s7 + $0x160] sm:$0xff] %vm362, %v2356
    %2421 = vst.msk [vmem:[%s7 + $0x168] sm:$0xff] %vm362, %v2357
    %2422 = vst.msk [vmem:[%s7 + $0x170] sm:$0xff] %vm362, %v2358
    %2423 = vst.msk [vmem:[%s7 + $0x178] sm:$0xff] %vm362, %v2359
    %2424 = vst.msk [vmem:[%s7 + $0x180] sm:$0xff] %vm362, %v2360
    %2425 = vst.msk [vmem:[%s7 + $0x188] sm:$0xff] %vm362, %v2361
    %2426 = vst.msk [vmem:[%s7 + $0x190] sm:$0xff] %vm362, %v2362
    %2427 = vst.msk [vmem:[%s7 + $0x198] sm:$0xff] %vm362, %v2363
    %2428 = vst.msk [vmem:[%s7 + $0x1a0] sm:$0xff] %vm362, %v2364
    %2429 = vst.msk [vmem:[%s7 + $0x1a8] sm:$0xff] %vm362, %v2365
    %2430 = vst.msk [vmem:[%s7 + $0x1b0] sm:$0xff] %vm362, %v2366
    %2431 = vst.msk [vmem:[%s7 + $0x1b8] sm:$0xff] %vm362, %v2367
    %2432 = vst.msk [vmem:[%s7 + $0x1c0] sm:$0xff] %vm362, %v2368
    %2433 = vst.msk [vmem:[%s7 + $0x1c8] sm:$0xff] %vm362, %v2369
    %2434 = vst.msk [vmem:[%s7 + $0x1d0] sm:$0xff] %vm362, %v2370
    %2435 = vst.msk [vmem:[%s7 + $0x1d8] sm:$0xff] %vm362, %v2371
    %2436 = vst.msk [vmem:[%s7 + $0x1e0] sm:$0xff] %vm362, %v2372
    %2437 = vst.msk [vmem:[%s7 + $0x1e8] sm:$0xff] %vm362, %v2373
    %2438 = vst.msk [vmem:[%s7 + $0x1f0] sm:$0xff] %vm362, %v2374
    %2439 = vst.msk [vmem:[%s7 + $0x1f8] sm:$0xff] %vm362, %v2375
    %v2440 = vld [vmem:[#allocation3] sm:$0xff]
    %v2441 = vld [vmem:[#allocation3 + $0x8] sm:$0xff]
    %v2442 = vld [vmem:[#allocation3 + $0x10] sm:$0xff]
    %v2443 = vld [vmem:[#allocation3 + $0x18] sm:$0xff]
    %v2444 = vld [vmem:[#allocation3 + $0x20] sm:$0xff]
    %v2445 = vld [vmem:[#allocation3 + $0x28] sm:$0xff]
    %v2446 = vld [vmem:[#allocation3 + $0x30] sm:$0xff]
    %v2447 = vld [vmem:[#allocation3 + $0x38] sm:$0xff]
    %v2448 = vld [vmem:[#allocation3 + $0x40] sm:$0xff]
    %v2449 = vld [vmem:[#allocation3 + $0x48] sm:$0xff]
    %v2450 = vld [vmem:[#allocation3 + $0x50] sm:$0xff]
    %v2451 = vld [vmem:[#allocation3 + $0x58] sm:$0xff]
    %v2452 = vld [vmem:[#allocation3 + $0x60] sm:$0xff]
    %v2453 = vld [vmem:[#allocation3 + $0x68] sm:$0xff]
    %v2454 = vld [vmem:[#allocation3 + $0x70] sm:$0xff]
    %v2455 = vld [vmem:[#allocation3 + $0x78] sm:$0xff]
    %v2456 = vld [vmem:[#allocation3 + $0x80] sm:$0xff]
    %v2457 = vld [vmem:[#allocation3 + $0x88] sm:$0xff]
    %v2458 = vld [vmem:[#allocation3 + $0x90] sm:$0xff]
    %v2459 = vld [vmem:[#allocation3 + $0x98] sm:$0xff]
    %v2460 = vld [vmem:[#allocation3 + $0xa0] sm:$0xff]
    %v2461 = vld [vmem:[#allocation3 + $0xa8] sm:$0xff]
    %v2462 = vld [vmem:[#allocation3 + $0xb0] sm:$0xff]
    %v2463 = vld [vmem:[#allocation3 + $0xb8] sm:$0xff]
    %v2464 = vld [vmem:[#allocation3 + $0xc0] sm:$0xff]
    %v2465 = vld [vmem:[#allocation3 + $0xc8] sm:$0xff]
    %v2466 = vld [vmem:[#allocation3 + $0xd0] sm:$0xff]
    %v2467 = vld [vmem:[#allocation3 + $0xd8] sm:$0xff]
    %v2468 = vld [vmem:[#allocation3 + $0xe0] sm:$0xff]
    %v2469 = vld [vmem:[#allocation3 + $0xe8] sm:$0xff]
    %v2470 = vld [vmem:[#allocation3 + $0xf0] sm:$0xff]
    %v2471 = vld [vmem:[#allocation3 + $0xf8] sm:$0xff]
    %v2472 = vld [vmem:[#allocation3 + $0x100] sm:$0xff]
    %v2473 = vld [vmem:[#allocation3 + $0x108] sm:$0xff]
    %v2474 = vld [vmem:[#allocation3 + $0x110] sm:$0xff]
    %v2475 = vld [vmem:[#allocation3 + $0x118] sm:$0xff]
    %v2476 = vld [vmem:[#allocation3 + $0x120] sm:$0xff]
    %v2477 = vld [vmem:[#allocation3 + $0x128] sm:$0xff]
    %v2478 = vld [vmem:[#allocation3 + $0x130] sm:$0xff]
    %v2479 = vld [vmem:[#allocation3 + $0x138] sm:$0xff]
    %v2480 = vld [vmem:[#allocation3 + $0x140] sm:$0xff]
    %v2481 = vld [vmem:[#allocation3 + $0x148] sm:$0xff]
    %v2482 = vld [vmem:[#allocation3 + $0x150] sm:$0xff]
    %v2483 = vld [vmem:[#allocation3 + $0x158] sm:$0xff]
    %v2484 = vld [vmem:[#allocation3 + $0x160] sm:$0xff]
    %v2485 = vld [vmem:[#allocation3 + $0x168] sm:$0xff]
    %v2486 = vld [vmem:[#allocation3 + $0x170] sm:$0xff]
    %v2487 = vld [vmem:[#allocation3 + $0x178] sm:$0xff]
    %v2488 = vld [vmem:[#allocation3 + $0x180] sm:$0xff]
    %v2489 = vld [vmem:[#allocation3 + $0x188] sm:$0xff]
    %v2490 = vld [vmem:[#allocation3 + $0x190] sm:$0xff]
    %v2491 = vld [vmem:[#allocation3 + $0x198] sm:$0xff]
    %v2492 = vld [vmem:[#allocation3 + $0x1a0] sm:$0xff]
    %v2493 = vld [vmem:[#allocation3 + $0x1a8] sm:$0xff]
    %v2494 = vld [vmem:[#allocation3 + $0x1b0] sm:$0xff]
    %v2495 = vld [vmem:[#allocation3 + $0x1b8] sm:$0xff]
    %v2496 = vld [vmem:[#allocation3 + $0x1c0] sm:$0xff]
    %v2497 = vld [vmem:[#allocation3 + $0x1c8] sm:$0xff]
    %v2498 = vld [vmem:[#allocation3 + $0x1d0] sm:$0xff]
    %v2499 = vld [vmem:[#allocation3 + $0x1d8] sm:$0xff]
    %v2500 = vld [vmem:[#allocation3 + $0x1e0] sm:$0xff]
    %v2501 = vld [vmem:[#allocation3 + $0x1e8] sm:$0xff]
    %v2502 = vld [vmem:[#allocation3 + $0x1f0] sm:$0xff]
    %v2503 = vld [vmem:[#allocation3 + $0x1f8] sm:$0xff]
    %v2504 = vld [vmem:[%s5] sm:$0x1]
    %v2506 = vlaneseq
    %v2507 = vshrl.u32 %v2506, 7
    %v2508 = vsub.s32 0, %v2507
    %v2509 = vrot.slane %v2504, %v2508
    %v2511 = vadd.f32 %v2440, %v2509
    %v2512 = vadd.f32 %v2441, %v2509
    %v2513 = vadd.f32 %v2442, %v2509
    %v2514 = vadd.f32 %v2443, %v2509
    %v2515 = vadd.f32 %v2444, %v2509
    %v2516 = vadd.f32 %v2445, %v2509
    %v2517 = vadd.f32 %v2446, %v2509
    %v2518 = vadd.f32 %v2447, %v2509
    %v2519 = vadd.f32 %v2448, %v2509
    %v2520 = vadd.f32 %v2449, %v2509
    %v2521 = vadd.f32 %v2450, %v2509
    %v2522 = vadd.f32 %v2451, %v2509
    %v2523 = vadd.f32 %v2452, %v2509
    %v2524 = vadd.f32 %v2453, %v2509
    %v2525 = vadd.f32 %v2454, %v2509
    %v2526 = vadd.f32 %v2455, %v2509
    %v2527 = vadd.f32 %v2456, %v2509
    %v2528 = vadd.f32 %v2457, %v2509
    %v2529 = vadd.f32 %v2458, %v2509
    %v2530 = vadd.f32 %v2459, %v2509
    %v2531 = vadd.f32 %v2460, %v2509
    %v2532 = vadd.f32 %v2461, %v2509
    %v2533 = vadd.f32 %v2462, %v2509
    %v2534 = vadd.f32 %v2463, %v2509
    %v2535 = vadd.f32 %v2464, %v2509
    %v2536 = vadd.f32 %v2465, %v2509
    %v2537 = vadd.f32 %v2466, %v2509
    %v2538 = vadd.f32 %v2467, %v2509
    %v2539 = vadd.f32 %v2468, %v2509
    %v2540 = vadd.f32 %v2469, %v2509
    %v2541 = vadd.f32 %v2470, %v2509
    %v2542 = vadd.f32 %v2471, %v2509
    %v2543 = vadd.f32 %v2472, %v2509
    %v2544 = vadd.f32 %v2473, %v2509
    %v2545 = vadd.f32 %v2474, %v2509
    %v2546 = vadd.f32 %v2475, %v2509
    %v2547 = vadd.f32 %v2476, %v2509
    %v2548 = vadd.f32 %v2477, %v2509
    %v2549 = vadd.f32 %v2478, %v2509
    %v2550 = vadd.f32 %v2479, %v2509
    %v2551 = vadd.f32 %v2480, %v2509
    %v2552 = vadd.f32 %v2481, %v2509
    %v2553 = vadd.f32 %v2482, %v2509
    %v2554 = vadd.f32 %v2483, %v2509
    %v2555 = vadd.f32 %v2484, %v2509
    %v2556 = vadd.f32 %v2485, %v2509
    %v2557 = vadd.f32 %v2486, %v2509
    %v2558 = vadd.f32 %v2487, %v2509
    %v2559 = vadd.f32 %v2488, %v2509
    %v2560 = vadd.f32 %v2489, %v2509
    %v2561 = vadd.f32 %v2490, %v2509
    %v2562 = vadd.f32 %v2491, %v2509
    %v2563 = vadd.f32 %v2492, %v2509
    %v2564 = vadd.f32 %v2493, %v2509
    %v2565 = vadd.f32 %v2494, %v2509
    %v2566 = vadd.f32 %v2495, %v2509
    %v2567 = vadd.f32 %v2496, %v2509
    %v2568 = vadd.f32 %v2497, %v2509
    %v2569 = vadd.f32 %v2498, %v2509
    %v2570 = vadd.f32 %v2499, %v2509
    %v2571 = vadd.f32 %v2500, %v2509
    %v2572 = vadd.f32 %v2501, %v2509
    %v2573 = vadd.f32 %v2502, %v2509
    %v2574 = vadd.f32 %v2503, %v2509
    %2575 = vst.msk [vmem:[%s8] sm:$0xff] %vm362, %v2511
    %2576 = vst.msk [vmem:[%s8 + $0x8] sm:$0xff] %vm362, %v2512
    %2577 = vst.msk [vmem:[%s8 + $0x10] sm:$0xff] %vm362, %v2513
    %2578 = vst.msk [vmem:[%s8 + $0x18] sm:$0xff] %vm362, %v2514
    %2579 = vst.msk [vmem:[%s8 + $0x20] sm:$0xff] %vm362, %v2515
    %2580 = vst.msk [vmem:[%s8 + $0x28] sm:$0xff] %vm362, %v2516
    %2581 = vst.msk [vmem:[%s8 + $0x30] sm:$0xff] %vm362, %v2517
    %2582 = vst.msk [vmem:[%s8 + $0x38] sm:$0xff] %vm362, %v2518
    %2583 = vst.msk [vmem:[%s8 + $0x40] sm:$0xff] %vm362, %v2519
    %2584 = vst.msk [vmem:[%s8 + $0x48] sm:$0xff] %vm362, %v2520
    %2585 = vst.msk [vmem:[%s8 + $0x50] sm:$0xff] %vm362, %v2521
    %2586 = vst.msk [vmem:[%s8 + $0x58] sm:$0xff] %vm362, %v2522
    %2587 = vst.msk [vmem:[%s8 + $0x60] sm:$0xff] %vm362, %v2523
    %2588 = vst.msk [vmem:[%s8 + $0x68] sm:$0xff] %vm362, %v2524
    %2589 = vst.msk [vmem:[%s8 + $0x70] sm:$0xff] %vm362, %v2525
    %2590 = vst.msk [vmem:[%s8 + $0x78] sm:$0xff] %vm362, %v2526
    %2591 = vst.msk [vmem:[%s8 + $0x80] sm:$0xff] %vm362, %v2527
    %2592 = vst.msk [vmem:[%s8 + $0x88] sm:$0xff] %vm362, %v2528
    %2593 = vst.msk [vmem:[%s8 + $0x90] sm:$0xff] %vm362, %v2529
    %2594 = vst.msk [vmem:[%s8 + $0x98] sm:$0xff] %vm362, %v2530
    %2595 = vst.msk [vmem:[%s8 + $0xa0] sm:$0xff] %vm362, %v2531
    %2596 = vst.msk [vmem:[%s8 + $0xa8] sm:$0xff] %vm362, %v2532
    %2597 = vst.msk [vmem:[%s8 + $0xb0] sm:$0xff] %vm362, %v2533
    %2598 = vst.msk [vmem:[%s8 + $0xb8] sm:$0xff] %vm362, %v2534
    %2599 = vst.msk [vmem:[%s8 + $0xc0] sm:$0xff] %vm362, %v2535
    %2600 = vst.msk [vmem:[%s8 + $0xc8] sm:$0xff] %vm362, %v2536
    %2601 = vst.msk [vmem:[%s8 + $0xd0] sm:$0xff] %vm362, %v2537
    %2602 = vst.msk [vmem:[%s8 + $0xd8] sm:$0xff] %vm362, %v2538
    %2603 = vst.msk [vmem:[%s8 + $0xe0] sm:$0xff] %vm362, %v2539
    %2604 = vst.msk [vmem:[%s8 + $0xe8] sm:$0xff] %vm362, %v2540
    %2605 = vst.msk [vmem:[%s8 + $0xf0] sm:$0xff] %vm362, %v2541
    %2606 = vst.msk [vmem:[%s8 + $0xf8] sm:$0xff] %vm362, %v2542
    %2607 = vst.msk [vmem:[%s8 + $0x100] sm:$0xff] %vm362, %v2543
    %2608 = vst.msk [vmem:[%s8 + $0x108] sm:$0xff] %vm362, %v2544
    %2609 = vst.msk [vmem:[%s8 + $0x110] sm:$0xff] %vm362, %v2545
    %2610 = vst.msk [vmem:[%s8 + $0x118] sm:$0xff] %vm362, %v2546
    %2611 = vst.msk [vmem:[%s8 + $0x120] sm:$0xff] %vm362, %v2547
    %2612 = vst.msk [vmem:[%s8 + $0x128] sm:$0xff] %vm362, %v2548
    %2613 = vst.msk [vmem:[%s8 + $0x130] sm:$0xff] %vm362, %v2549
    %2614 = vst.msk [vmem:[%s8 + $0x138] sm:$0xff] %vm362, %v2550
    %2615 = vst.msk [vmem:[%s8 + $0x140] sm:$0xff] %vm362, %v2551
    %2616 = vst.msk [vmem:[%s8 + $0x148] sm:$0xff] %vm362, %v2552
    %2617 = vst.msk [vmem:[%s8 + $0x150] sm:$0xff] %vm362, %v2553
    %2618 = vst.msk [vmem:[%s8 + $0x158] sm:$0xff] %vm362, %v2554
    %2619 = vst.msk [vmem:[%s8 + $0x160] sm:$0xff] %vm362, %v2555
    %2620 = vst.msk [vmem:[%s8 + $0x168] sm:$0xff] %vm362, %v2556
    %2621 = vst.msk [vmem:[%s8 + $0x170] sm:$0xff] %vm362, %v2557
    %2622 = vst.msk [vmem:[%s8 + $0x178] sm:$0xff] %vm362, %v2558
    %2623 = vst.msk [vmem:[%s8 + $0x180] sm:$0xff] %vm362, %v2559
    %2624 = vst.msk [vmem:[%s8 + $0x188] sm:$0xff] %vm362, %v2560
    %2625 = vst.msk [vmem:[%s8 + $0x190] sm:$0xff] %vm362, %v2561
    %2626 = vst.msk [vmem:[%s8 + $0x198] sm:$0xff] %vm362, %v2562
    %2627 = vst.msk [vmem:[%s8 + $0x1a0] sm:$0xff] %vm362, %v2563
    %2628 = vst.msk [vmem:[%s8 + $0x1a8] sm:$0xff] %vm362, %v2564
    %2629 = vst.msk [vmem:[%s8 + $0x1b0] sm:$0xff] %vm362, %v2565
    %2630 = vst.msk [vmem:[%s8 + $0x1b8] sm:$0xff] %vm362, %v2566
    %2631 = vst.msk [vmem:[%s8 + $0x1c0] sm:$0xff] %vm362, %v2567
    %2632 = vst.msk [vmem:[%s8 + $0x1c8] sm:$0xff] %vm362, %v2568
    %2633 = vst.msk [vmem:[%s8 + $0x1d0] sm:$0xff] %vm362, %v2569
    %2634 = vst.msk [vmem:[%s8 + $0x1d8] sm:$0xff] %vm362, %v2570
    %2635 = vst.msk [vmem:[%s8 + $0x1e0] sm:$0xff] %vm362, %v2571
    %2636 = vst.msk [vmem:[%s8 + $0x1e8] sm:$0xff] %vm362, %v2572
    %2637 = vst.msk [vmem:[%s8 + $0x1f0] sm:$0xff] %vm362, %v2573
    %2638 = vst.msk [vmem:[%s8 + $0x1f8] sm:$0xff] %vm362, %v2574
    %v2639 = vld [vmem:[#allocation4] sm:$0xff]
    %v2640 = vld [vmem:[#allocation4 + $0x8] sm:$0xff]
    %v2641 = vld [vmem:[#allocation4 + $0x10] sm:$0xff]
    %v2642 = vld [vmem:[#allocation4 + $0x18] sm:$0xff]
    %v2643 = vld [vmem:[#allocation4 + $0x20] sm:$0xff]
    %v2644 = vld [vmem:[#allocation4 + $0x28] sm:$0xff]
    %v2645 = vld [vmem:[#allocation4 + $0x30] sm:$0xff]
    %v2646 = vld [vmem:[#allocation4 + $0x38] sm:$0xff]
    %v2647 = vld [vmem:[#allocation4 + $0x40] sm:$0xff]
    %v2648 = vld [vmem:[#allocation4 + $0x48] sm:$0xff]
    %v2649 = vld [vmem:[#allocation4 + $0x50] sm:$0xff]
    %v2650 = vld [vmem:[#allocation4 + $0x58] sm:$0xff]
    %v2651 = vld [vmem:[#allocation4 + $0x60] sm:$0xff]
    %v2652 = vld [vmem:[#allocation4 + $0x68] sm:$0xff]
    %v2653 = vld [vmem:[#allocation4 + $0x70] sm:$0xff]
    %v2654 = vld [vmem:[#allocation4 + $0x78] sm:$0xff]
    %v2655 = vld [vmem:[#allocation4 + $0x80] sm:$0xff]
    %v2656 = vld [vmem:[#allocation4 + $0x88] sm:$0xff]
    %v2657 = vld [vmem:[#allocation4 + $0x90] sm:$0xff]
    %v2658 = vld [vmem:[#allocation4 + $0x98] sm:$0xff]
    %v2659 = vld [vmem:[#allocation4 + $0xa0] sm:$0xff]
    %v2660 = vld [vmem:[#allocation4 + $0xa8] sm:$0xff]
    %v2661 = vld [vmem:[#allocation4 + $0xb0] sm:$0xff]
    %v2662 = vld [vmem:[#allocation4 + $0xb8] sm:$0xff]
    %v2663 = vld [vmem:[#allocation4 + $0xc0] sm:$0xff]
    %v2664 = vld [vmem:[#allocation4 + $0xc8] sm:$0xff]
    %v2665 = vld [vmem:[#allocation4 + $0xd0] sm:$0xff]
    %v2666 = vld [vmem:[#allocation4 + $0xd8] sm:$0xff]
    %v2667 = vld [vmem:[#allocation4 + $0xe0] sm:$0xff]
    %v2668 = vld [vmem:[#allocation4 + $0xe8] sm:$0xff]
    %v2669 = vld [vmem:[#allocation4 + $0xf0] sm:$0xff]
    %v2670 = vld [vmem:[#allocation4 + $0xf8] sm:$0xff]
    %v2671 = vld [vmem:[#allocation4 + $0x100] sm:$0xff]
    %v2672 = vld [vmem:[#allocation4 + $0x108] sm:$0xff]
    %v2673 = vld [vmem:[#allocation4 + $0x110] sm:$0xff]
    %v2674 = vld [vmem:[#allocation4 + $0x118] sm:$0xff]
    %v2675 = vld [vmem:[#allocation4 + $0x120] sm:$0xff]
    %v2676 = vld [vmem:[#allocation4 + $0x128] sm:$0xff]
    %v2677 = vld [vmem:[#allocation4 + $0x130] sm:$0xff]
    %v2678 = vld [vmem:[#allocation4 + $0x138] sm:$0xff]
    %v2679 = vld [vmem:[#allocation4 + $0x140] sm:$0xff]
    %v2680 = vld [vmem:[#allocation4 + $0x148] sm:$0xff]
    %v2681 = vld [vmem:[#allocation4 + $0x150] sm:$0xff]
    %v2682 = vld [vmem:[#allocation4 + $0x158] sm:$0xff]
    %v2683 = vld [vmem:[#allocation4 + $0x160] sm:$0xff]
    %v2684 = vld [vmem:[#allocation4 + $0x168] sm:$0xff]
    %v2685 = vld [vmem:[#allocation4 + $0x170] sm:$0xff]
    %v2686 = vld [vmem:[#allocation4 + $0x178] sm:$0xff]
    %v2687 = vld [vmem:[#allocation4 + $0x180] sm:$0xff]
    %v2688 = vld [vmem:[#allocation4 + $0x188] sm:$0xff]
    %v2689 = vld [vmem:[#allocation4 + $0x190] sm:$0xff]
    %v2690 = vld [vmem:[#allocation4 + $0x198] sm:$0xff]
    %v2691 = vld [vmem:[#allocation4 + $0x1a0] sm:$0xff]
    %v2692 = vld [vmem:[#allocation4 + $0x1a8] sm:$0xff]
    %v2693 = vld [vmem:[#allocation4 + $0x1b0] sm:$0xff]
    %v2694 = vld [vmem:[#allocation4 + $0x1b8] sm:$0xff]
    %v2695 = vld [vmem:[#allocation4 + $0x1c0] sm:$0xff]
    %v2696 = vld [vmem:[#allocation4 + $0x1c8] sm:$0xff]
    %v2697 = vld [vmem:[#allocation4 + $0x1d0] sm:$0xff]
    %v2698 = vld [vmem:[#allocation4 + $0x1d8] sm:$0xff]
    %v2699 = vld [vmem:[#allocation4 + $0x1e0] sm:$0xff]
    %v2700 = vld [vmem:[#allocation4 + $0x1e8] sm:$0xff]
    %v2701 = vld [vmem:[#allocation4 + $0x1f0] sm:$0xff]
    %v2702 = vld [vmem:[#allocation4 + $0x1f8] sm:$0xff]
    %v2703 = vld [vmem:[%s6] sm:$0x1]
    %v2705 = vlaneseq
    %v2706 = vshrl.u32 %v2705, 7
    %v2707 = vsub.s32 0, %v2706
    %v2708 = vrot.slane %v2703, %v2707
    %v2710 = vadd.f32 %v2639, %v2708
    %v2711 = vadd.f32 %v2640, %v2708
    %v2712 = vadd.f32 %v2641, %v2708
    %v2713 = vadd.f32 %v2642, %v2708
    %v2714 = vadd.f32 %v2643, %v2708
    %v2715 = vadd.f32 %v2644, %v2708
    %v2716 = vadd.f32 %v2645, %v2708
    %v2717 = vadd.f32 %v2646, %v2708
    %v2718 = vadd.f32 %v2647, %v2708
    %v2719 = vadd.f32 %v2648, %v2708
    %v2720 = vadd.f32 %v2649, %v2708
    %v2721 = vadd.f32 %v2650, %v2708
    %v2722 = vadd.f32 %v2651, %v2708
    %v2723 = vadd.f32 %v2652, %v2708
    %v2724 = vadd.f32 %v2653, %v2708
    %v2725 = vadd.f32 %v2654, %v2708
    %v2726 = vadd.f32 %v2655, %v2708
    %v2727 = vadd.f32 %v2656, %v2708
    %v2728 = vadd.f32 %v2657, %v2708
    %v2729 = vadd.f32 %v2658, %v2708
    %v2730 = vadd.f32 %v2659, %v2708
    %v2731 = vadd.f32 %v2660, %v2708
    %v2732 = vadd.f32 %v2661, %v2708
    %v2733 = vadd.f32 %v2662, %v2708
    %v2734 = vadd.f32 %v2663, %v2708
    %v2735 = vadd.f32 %v2664, %v2708
    %v2736 = vadd.f32 %v2665, %v2708
    %v2737 = vadd.f32 %v2666, %v2708
    %v2738 = vadd.f32 %v2667, %v2708
    %v2739 = vadd.f32 %v2668, %v2708
    %v2740 = vadd.f32 %v2669, %v2708
    %v2741 = vadd.f32 %v2670, %v2708
    %v2742 = vadd.f32 %v2671, %v2708
    %v2743 = vadd.f32 %v2672, %v2708
    %v2744 = vadd.f32 %v2673, %v2708
    %v2745 = vadd.f32 %v2674, %v2708
    %v2746 = vadd.f32 %v2675, %v2708
    %v2747 = vadd.f32 %v2676, %v2708
    %v2748 = vadd.f32 %v2677, %v2708
    %v2749 = vadd.f32 %v2678, %v2708
    %v2750 = vadd.f32 %v2679, %v2708
    %v2751 = vadd.f32 %v2680, %v2708
    %v2752 = vadd.f32 %v2681, %v2708
    %v2753 = vadd.f32 %v2682, %v2708
    %v2754 = vadd.f32 %v2683, %v2708
    %v2755 = vadd.f32 %v2684, %v2708
    %v2756 = vadd.f32 %v2685, %v2708
    %v2757 = vadd.f32 %v2686, %v2708
    %v2758 = vadd.f32 %v2687, %v2708
    %v2759 = vadd.f32 %v2688, %v2708
    %v2760 = vadd.f32 %v2689, %v2708
    %v2761 = vadd.f32 %v2690, %v2708
    %v2762 = vadd.f32 %v2691, %v2708
    %v2763 = vadd.f32 %v2692, %v2708
    %v2764 = vadd.f32 %v2693, %v2708
    %v2765 = vadd.f32 %v2694, %v2708
    %v2766 = vadd.f32 %v2695, %v2708
    %v2767 = vadd.f32 %v2696, %v2708
    %v2768 = vadd.f32 %v2697, %v2708
    %v2769 = vadd.f32 %v2698, %v2708
    %v2770 = vadd.f32 %v2699, %v2708
    %v2771 = vadd.f32 %v2700, %v2708
    %v2772 = vadd.f32 %v2701, %v2708
    %v2773 = vadd.f32 %v2702, %v2708
    %2774 = vst.msk [vmem:[%s9] sm:$0xff] %vm362, %v2710
    %2775 = vst.msk [vmem:[%s9 + $0x8] sm:$0xff] %vm362, %v2711
    %2776 = vst.msk [vmem:[%s9 + $0x10] sm:$0xff] %vm362, %v2712
    %2777 = vst.msk [vmem:[%s9 + $0x18] sm:$0xff] %vm362, %v2713
    %2778 = vst.msk [vmem:[%s9 + $0x20] sm:$0xff] %vm362, %v2714
    %2779 = vst.msk [vmem:[%s9 + $0x28] sm:$0xff] %vm362, %v2715
    %2780 = vst.msk [vmem:[%s9 + $0x30] sm:$0xff] %vm362, %v2716
    %2781 = vst.msk [vmem:[%s9 + $0x38] sm:$0xff] %vm362, %v2717
    %2782 = vst.msk [vmem:[%s9 + $0x40] sm:$0xff] %vm362, %v2718
    %2783 = vst.msk [vmem:[%s9 + $0x48] sm:$0xff] %vm362, %v2719
    %2784 = vst.msk [vmem:[%s9 + $0x50] sm:$0xff] %vm362, %v2720
    %2785 = vst.msk [vmem:[%s9 + $0x58] sm:$0xff] %vm362, %v2721
    %2786 = vst.msk [vmem:[%s9 + $0x60] sm:$0xff] %vm362, %v2722
    %2787 = vst.msk [vmem:[%s9 + $0x68] sm:$0xff] %vm362, %v2723
    %2788 = vst.msk [vmem:[%s9 + $0x70] sm:$0xff] %vm362, %v2724
    %2789 = vst.msk [vmem:[%s9 + $0x78] sm:$0xff] %vm362, %v2725
    %2790 = vst.msk [vmem:[%s9 + $0x80] sm:$0xff] %vm362, %v2726
    %2791 = vst.msk [vmem:[%s9 + $0x88] sm:$0xff] %vm362, %v2727
    %2792 = vst.msk [vmem:[%s9 + $0x90] sm:$0xff] %vm362, %v2728
    %2793 = vst.msk [vmem:[%s9 + $0x98] sm:$0xff] %vm362, %v2729
    %2794 = vst.msk [vmem:[%s9 + $0xa0] sm:$0xff] %vm362, %v2730
    %2795 = vst.msk [vmem:[%s9 + $0xa8] sm:$0xff] %vm362, %v2731
    %2796 = vst.msk [vmem:[%s9 + $0xb0] sm:$0xff] %vm362, %v2732
    %2797 = vst.msk [vmem:[%s9 + $0xb8] sm:$0xff] %vm362, %v2733
    %2798 = vst.msk [vmem:[%s9 + $0xc0] sm:$0xff] %vm362, %v2734
    %2799 = vst.msk [vmem:[%s9 + $0xc8] sm:$0xff] %vm362, %v2735
    %2800 = vst.msk [vmem:[%s9 + $0xd0] sm:$0xff] %vm362, %v2736
    %2801 = vst.msk [vmem:[%s9 + $0xd8] sm:$0xff] %vm362, %v2737
    %2802 = vst.msk [vmem:[%s9 + $0xe0] sm:$0xff] %vm362, %v2738
    %2803 = vst.msk [vmem:[%s9 + $0xe8] sm:$0xff] %vm362, %v2739
    %2804 = vst.msk [vmem:[%s9 + $0xf0] sm:$0xff] %vm362, %v2740
    %2805 = vst.msk [vmem:[%s9 + $0xf8] sm:$0xff] %vm362, %v2741
    %2806 = vst.msk [vmem:[%s9 + $0x100] sm:$0xff] %vm362, %v2742
    %2807 = vst.msk [vmem:[%s9 + $0x108] sm:$0xff] %vm362, %v2743
    %2808 = vst.msk [vmem:[%s9 + $0x110] sm:$0xff] %vm362, %v2744
    %2809 = vst.msk [vmem:[%s9 + $0x118] sm:$0xff] %vm362, %v2745
    %2810 = vst.msk [vmem:[%s9 + $0x120] sm:$0xff] %vm362, %v2746
    %2811 = vst.msk [vmem:[%s9 + $0x128] sm:$0xff] %vm362, %v2747
    %2812 = vst.msk [vmem:[%s9 + $0x130] sm:$0xff] %vm362, %v2748
    %2813 = vst.msk [vmem:[%s9 + $0x138] sm:$0xff] %vm362, %v2749
    %2814 = vst.msk [vmem:[%s9 + $0x140] sm:$0xff] %vm362, %v2750
    %2815 = vst.msk [vmem:[%s9 + $0x148] sm:$0xff] %vm362, %v2751
    %2816 = vst.msk [vmem:[%s9 + $0x150] sm:$0xff] %vm362, %v2752
    %2817 = vst.msk [vmem:[%s9 + $0x158] sm:$0xff] %vm362, %v2753
    %2818 = vst.msk [vmem:[%s9 + $0x160] sm:$0xff] %vm362, %v2754
    %2819 = vst.msk [vmem:[%s9 + $0x168] sm:$0xff] %vm362, %v2755
    %2820 = vst.msk [vmem:[%s9 + $0x170] sm:$0xff] %vm362, %v2756
    %2821 = vst.msk [vmem:[%s9 + $0x178] sm:$0xff] %vm362, %v2757
    %2822 = vst.msk [vmem:[%s9 + $0x180] sm:$0xff] %vm362, %v2758
    %2823 = vst.msk [vmem:[%s9 + $0x188] sm:$0xff] %vm362, %v2759
    %2824 = vst.msk [vmem:[%s9 + $0x190] sm:$0xff] %vm362, %v2760
    %2825 = vst.msk [vmem:[%s9 + $0x198] sm:$0xff] %vm362, %v2761
    %2826 = vst.msk [vmem:[%s9 + $0x1a0] sm:$0xff] %vm362, %v2762
    %2827 = vst.msk [vmem:[%s9 + $0x1a8] sm:$0xff] %vm362, %v2763
    %2828 = vst.msk [vmem:[%s9 + $0x1b0] sm:$0xff] %vm362, %v2764
    %2829 = vst.msk [vmem:[%s9 + $0x1b8] sm:$0xff] %vm362, %v2765
    %2830 = vst.msk [vmem:[%s9 + $0x1c0] sm:$0xff] %vm362, %v2766
    %2831 = vst.msk [vmem:[%s9 + $0x1c8] sm:$0xff] %vm362, %v2767
    %2832 = vst.msk [vmem:[%s9 + $0x1d0] sm:$0xff] %vm362, %v2768
    %2833 = vst.msk [vmem:[%s9 + $0x1d8] sm:$0xff] %vm362, %v2769
    %2834 = vst.msk [vmem:[%s9 + $0x1e0] sm:$0xff] %vm362, %v2770
    %2835 = vst.msk [vmem:[%s9 + $0x1e8] sm:$0xff] %vm362, %v2771
    %2836 = vst.msk [vmem:[%s9 + $0x1f0] sm:$0xff] %vm362, %v2772
    %2837 = vst.msk [vmem:[%s9 + $0x1f8] sm:$0xff] %vm362, %v2773
  $region37: #{tpu_custom_call.1} parent=0 // pred_fallthru
    _
  // Predicated region
  $region38: #{tpu_custom_call.1} parent=0 // pred_check
    _
  $region39: #{tpu_custom_call.1} parent=0 // pred_check_branch
    %2839 = sbr.rel (0) target = $region41
  $region40: #{tpu_custom_call.1} parent=0 // pred_region
    _
  $region41: #{tpu_custom_call.1} parent=0 // pred_fallthru
    _
  // Predicated region
  $region42: #{tpu_custom_call.1} parent=0 // pred_check
    _
  $region43: #{tpu_custom_call.1} parent=0 // pred_check_branch
    %2841 = sbr.rel (0) target = $region45
  $region44: #{tpu_custom_call.1} parent=0 // pred_region
    _
  $region45: #{tpu_custom_call.1} parent=0 // pred_fallthru
    _
  // Predicated region
  $region46: #{tpu_custom_call.1} parent=0 // pred_check
    _
  $region47: #{tpu_custom_call.1} parent=0 // pred_check_branch
    %2843 = sbr.rel (0) target = $region49
  $region48: #{tpu_custom_call.1} parent=0 // pred_region
    _
  $region49: #{tpu_custom_call.1} parent=0 // pred_fallthru
    _
  // Predicated region
  $region50: #{tpu_custom_call.1} parent=0 // pred_check
    _
  $region51: #{tpu_custom_call.1} parent=0 // pred_check_branch
    %2845 = sbr.rel (0) target = $region53
  $region52: #{tpu_custom_call.1} parent=0 // pred_region
    _
  $region53: #{tpu_custom_call.1} parent=0 // pred_fallthru
    _
  // Predicated region
  $region54: #{tpu_custom_call.1} parent=0 // pred_check
    _
  $region55: #{tpu_custom_call.1} parent=0 // pred_check_branch
    %2847 = sbr.rel (0) target = $region57
  $region56: #{tpu_custom_call.1} parent=0 // pred_region
    _
  $region57: #{tpu_custom_call.1} parent=0 // pred_fallthru
    _
  // Predicated region
  $region58: #{tpu_custom_call.1} parent=0 // pred_check
    _
  $region59: #{tpu_custom_call.1} parent=0 // pred_check_branch
    %2849 = sbr.rel (0) target = $region61
  $region60: #{tpu_custom_call.1} parent=0 // pred_region
    _
  $region61: #{tpu_custom_call.1} parent=0 // pred_fallthru
    _

</llo_original>
